<compile_context>
chip_gen: v6e
topology: v6e:2x2x1
jax: 0.10.0
libtpu: 0.0.40
codegen_flags: <defaults>
</compile_context>

<pallas_src>
import jax
import jax.numpy as jnp
from jax.experimental import pallas as pl
from jax.experimental.pallas import tpu as pltpu

BN_EPS = 1e-5


def res2d_kernel(xph_ref, w13_ref, s13_ref, b13_ref, w2_ref, s2_ref, b2_ref,
                 o_ref, ypad_ref):
    # Shapes (per grid step / batch element):
    #   xph_ref  : (1, 4*HE, WEP, Cin) bf16  -- 4 even/odd (row,col) phase planes
    #                                           of padded x, stacked along H
    #   w13_ref  : (9*Cin, 2*Cout) bf16      -- [w1 | w3] im2col weights
    #   s13,b13  : (1, 2*Cout) f32           -- folded BN scale/bias for bn1|bn3
    #   w2_ref   : (9*Cout, Cout) bf16       -- conv_2 im2col weights
    #   s2,b2    : (1, Cout) f32             -- folded bn_2 scale/bias
    #   o_ref    : (1, Ho, Wo, Cout)
    #   ypad_ref : (Ho+2, WOP, Cout) bf16    -- VMEM scratch for stride-1 conv_2
    _, HO, WO, COUT = o_ref.shape
    CIN = xph_ref.shape[-1]
    HE = xph_ref.shape[1] // 4

    # ---- shared stride-2 im2col patch (read once; used by conv_1 AND conv_3)
    taps = []
    for dh in range(3):
        for dw in range(3):
            ph = (dh & 1) * 2 + (dw & 1)          # which phase plane
            r0 = ph * HE + dh // 2                # row offset inside that plane
            c0 = dw // 2
            t = xph_ref[0, r0:r0 + HO, c0:c0 + WO, :]
            taps.append(t.reshape(HO * WO, CIN))
    patch = jnp.concatenate(taps, axis=-1)        # (Ho*Wo, 9*Cin) bf16

    # One MXU matmul for conv_1 and conv_3 together (weights concatenated on N).
    y13 = jnp.dot(patch, w13_ref[...], preferred_element_type=jnp.float32)
    y13 = y13 * s13_ref[...] + b13_ref[...]       # folded BN + conv bias

    y1 = jnp.maximum(y13[:, :COUT], 0.0)          # main branch: bn_1 -> relu
    shortcut = y13[:, COUT:]                      # shortcut:    bn_3 (no relu)

    # ---- intermediate activation to VMEM scratch (bf16); zero ONLY the halo.
    zrow = jnp.zeros((1,) + ypad_ref.shape[1:], ypad_ref.dtype)
    ypad_ref[0:1, :, :] = zrow                    # top halo row
    ypad_ref[HO + 1:HO + 2, :, :] = zrow          # bottom halo row
    zcol = jnp.zeros((HO, 1, COUT), ypad_ref.dtype)
    ypad_ref[1:HO + 1, 0:1, :] = zcol             # left halo column
    ypad_ref[1:HO + 1, WO + 1:WO + 2, :] = zcol   # right halo column
    ypad_ref[1:HO + 1, 1:WO + 1, :] = (
        y1.reshape(HO, WO, COUT).astype(ypad_ref.dtype))

    # ---- conv_2 (stride 1, pad 1) as one im2col matmul
    taps2 = []
    for dh in range(3):
        for dw in range(3):
            t = ypad_ref[dh:dh + HO, dw:dw + WO, :]
            taps2.append(t.reshape(HO * WO, COUT))
    patch2 = jnp.concatenate(taps2, axis=-1)      # (Ho*Wo, 9*Cout) bf16
    main = jnp.dot(patch2, w2_ref[...], preferred_element_type=jnp.float32)
    main = main * s2_ref[...] + b2_ref[...]       # folded bn_2 + conv bias

    # ---- residual add + relu
    out = jnp.maximum(main + shortcut, 0.0)
    o_ref[0] = out.reshape(HO, WO, COUT).astype(o_ref.dtype)


def _round_up(n, m):
    return ((n + m - 1) // m) * m


def _fold_bn(conv_bias, gamma, beta, mean, var, eps):
    """BN(conv(x)+b) == conv(x)*scale + bias  (eval-mode BN folded with bias)."""
    scale = gamma / jnp.sqrt(var + eps)
    bias = (conv_bias - mean) * scale + beta
    return scale.astype(jnp.float32), bias.astype(jnp.float32)


def res_2d(x, p1, p2, p3, eps=BN_EPS):
    """Fused Res_2d block (shape=3, stride=2, with conv_3 shortcut).

    x        : (B, H, W, Cin) float32, NHWC.
    p1/p2/p3 : (weight_HWIO, conv_bias, gamma, beta, running_mean, running_var)
               for conv_1/bn_1, conv_2/bn_2, conv_3/bn_3.
    """
    B, H, W, CIN = x.shape
    COUT = p1[0].shape[-1]
    HO = (H - 1) // 2 + 1
    WO = (W - 1) // 2 + 1
    HE = HO + 1
    WE = WO + 1
    WEP = _round_up(WE, 8)          # sublane-aligned phase-plane width
    WOP = _round_up(WO + 2, 8)      # sublane-aligned scratch width

    # --- single fused layout transform: conv padding + even/odd phase split.
    # xph[b, (rp*2+cp)*HE + k, l, c] == x_padded[b, 2k+rp, 2l+cp, c]
    xp = jnp.pad(x, ((0, 0), (1, 2 * HE - H - 1), (1, 2 * WEP - W - 1), (0, 0)))
    xph = xp.reshape(B, HE, 2, WEP, 2, CIN).transpose(0, 2, 4, 1, 3, 5)
    xph = xph.reshape(B, 4 * HE, WEP, CIN).astype(jnp.bfloat16)

    # --- fold BN (eval mode) + conv bias into per-channel scale/bias.
    s1, b1 = _fold_bn(p1[1], p1[2], p1[3], p1[4], p1[5], eps)
    s2f, b2f = _fold_bn(p2[1], p2[2], p2[3], p2[4], p2[5], eps)
    s3, b3 = _fold_bn(p3[1], p3[2], p3[3], p3[4], p3[5], eps)

    # --- im2col weights; conv_1 and conv_3 share the stride-2 patch.
    w13 = jnp.concatenate([p1[0].reshape(9 * CIN, COUT),
                           p3[0].reshape(9 * CIN, COUT)], axis=1).astype(jnp.bfloat16)
    w2 = p2[0].reshape(9 * COUT, COUT).astype(jnp.bfloat16)
    s13 = jnp.concatenate([s1, s3]).reshape(1, 2 * COUT)
    b13 = jnp.concatenate([b1, b3]).reshape(1, 2 * COUT)
    s2v = s2f.reshape(1, COUT)
    b2v = b2f.reshape(1, COUT)

    # --- VMEM budget from the actual per-step footprint (not a hard-coded cap).
    bytes_xph = 4 * HE * WEP * CIN * 2
    bytes_out = HO * WO * COUT * 4
    bytes_w = (w13.size + w2.size) * 2 + (s13.size + b13.size + s2v.size + b2v.size) * 4
    bytes_scr = (HO + 2) * WOP * COUT * 2
    bytes_tmp = HO * WO * (9 * CIN + 9 * COUT) * 2 + HO * WO * 3 * COUT * 4
    per_step = 2 * (bytes_xph + bytes_out) + 2 * bytes_w + bytes_scr + 2 * bytes_tmp
    try:
        vmem_cap = int(pltpu.get_tpu_info().vmem_capacity_bytes)
    except Exception:
        vmem_cap = 64 * 1024 * 1024
    vmem_limit = int(min(int(0.85 * vmem_cap), max(32 * 1024 * 1024, 2 * per_step)))

    # --- advisory cost estimate for XLA scheduling around the fused call.
    flops = 2 * B * HO * WO * 9 * (CIN * 2 * COUT + COUT * COUT)
    bytes_accessed = (xph.size * 2 + w13.size * 2 + w2.size * 2
                      + (s13.size + b13.size + s2v.size + b2v.size) * 4
                      + B * HO * WO * COUT * 4)
    cost = pl.CostEstimate(flops=flops, transcendentals=0,
                           bytes_accessed=bytes_accessed)

    def _run(single_buffer_consts):
        def const_spec(shape):
            # Constant index_map across the grid -> request single-buffering.
            if single_buffer_consts:
                return pl.BlockSpec(shape, lambda b: (0, 0),
                                    pipeline_mode=pl.Buffered(1))
            return pl.BlockSpec(shape, lambda b: (0, 0))

        in_specs = [
            pl.BlockSpec((1, 4 * HE, WEP, CIN), lambda b: (b, 0, 0, 0)),  # x phases
            const_spec((9 * CIN, 2 * COUT)),                              # w13
            const_spec((1, 2 * COUT)),                                    # s13
            const_spec((1, 2 * COUT)),                                    # b13
            const_spec((9 * COUT, COUT)),                                 # w2
            const_spec((1, COUT)),                                        # s2
            const_spec((1, COUT)),                                        # b2
        ]
        return pl.pallas_call(
            res2d_kernel,
            out_shape=jax.ShapeDtypeStruct((B, HO, WO, COUT), x.dtype),
            grid=(B,),
            in_specs=in_specs,
            out_specs=pl.BlockSpec((1, HO, WO, COUT), lambda b: (b, 0, 0, 0)),
            scratch_shapes=[pltpu.VMEM((HO + 2, WOP, COUT), jnp.bfloat16)],
            compiler_params=pltpu.CompilerParams(
                dimension_semantics=("parallel",),
                vmem_limit_bytes=vmem_limit,
            ),
            cost_estimate=cost,
        )(xph, w13, s13, b13, w2, s2v, b2v)

    try:
        return _run(True)
    except Exception:
        # Fallback for JAX builds that reject pipeline_mode=pl.Buffered(1).
        return _run(False)


# --------------------------- reference + test --------------------------------

def _ref_conv(x, w, stride):
    return jax.lax.conv_general_dilated(
        x, w, window_strides=(stride, stride), padding=((1, 1), (1, 1)),
        dimension_numbers=("NHWC", "HWIO", "NHWC"),
        precision=jax.lax.Precision.HIGHEST)


def _ref_bn(y, gamma, beta, mean, var, eps=BN_EPS):
    return (y - mean) / jnp.sqrt(var + eps) * gamma + beta


def reference(x, p1, p2, p3):
    w1, cb1, g1, bt1, m1, v1 = p1
    w2, cb2, g2, bt2, m2, v2 = p2
    w3, cb3, g3, bt3, m3, v3 = p3
    h = _ref_bn(_ref_conv(x, w1, 2) + cb1, g1, bt1, m1, v1)
    h = jnp.maximum(h, 0.0)
    h = _ref_bn(_ref_conv(h, w2, 1) + cb2, g2, bt2, m2, v2)
    sc = _ref_bn(_ref_conv(x, w3, 2) + cb3, g3, bt3, m3, v3)
    return jnp.maximum(h + sc, 0.0)


def _make_conv_bn_params(key, cin, cout):
    k = jax.random.split(key, 6)
    w = 0.1 * jax.random.normal(k[0], (3, 3, cin, cout), jnp.float32)   # HWIO
    cb = 0.1 * jax.random.normal(k[1], (cout,), jnp.float32)
    gamma = 1.0 + 0.1 * jax.random.normal(k[2], (cout,), jnp.float32)
    beta = 0.1 * jax.random.normal(k[3], (cout,), jnp.float32)
    mean = 0.1 * jax.random.normal(k[4], (cout,), jnp.float32)
    var = jax.random.uniform(k[5], (cout,), jnp.float32, minval=0.5, maxval=1.5)
    return (w, cb, gamma, beta, mean, var)


if __name__ == "__main__":
    # Small shapes consistent with the module: batch=2, input channels=8,
    # output channels=16, spatial 16x16, stride 2  ->  output (2, 8, 8, 16).
    B, H, W, CIN, COUT = 2, 16, 16, 8, 16

    key = jax.random.PRNGKey(0)
    kx, k1, k2, k3 = jax.random.split(key, 4)

    x = jax.random.normal(kx, (B, H, W, CIN), dtype=jnp.float32)
    p1 = _make_conv_bn_params(k1, CIN, COUT)    # conv_1 / bn_1 (stride 2)
    p2 = _make_conv_bn_params(k2, COUT, COUT)   # conv_2 / bn_2 (stride 1)
    p3 = _make_conv_bn_params(k3, CIN, COUT)    # conv_3 / bn_3 (shortcut, stride 2)

    out = jax.block_until_ready(res_2d(x, p1, p2, p3))

    ref = reference(x, p1, p2, p3)
    assert out.shape == (B, 8, 8, COUT), out.shape
    max_diff = float(jnp.max(jnp.abs(out - ref)))
    # Tolerance loosened vs the pure-f32 version: MXU operands are bf16
    # (f32 accumulation), so results differ from the f32 HIGHEST reference
    # by O(1e-2) while real indexing/BN-fold bugs would be O(1).
    assert jnp.allclose(out, ref, atol=5e-2, rtol=5e-2), (
        "mismatch vs reference, max abs diff = %g" % max_diff)

    print("KERNEL_OK")
</pallas_src>

<mosaic_0001>
module attributes {stable_mosaic.version = 11 : i64} {
  func.func @res2d_kernel(%arg0: i32, %arg1: memref<1x36x16x8xbf16, #tpu.memory_space<vmem>>, %arg2: memref<72x32xbf16, #tpu.memory_space<vmem>>, %arg3: memref<1x32xf32, #tpu.memory_space<vmem>>, %arg4: memref<1x32xf32, #tpu.memory_space<vmem>>, %arg5: memref<144x16xbf16, #tpu.memory_space<vmem>>, %arg6: memref<1x16xf32, #tpu.memory_space<vmem>>, %arg7: memref<1x16xf32, #tpu.memory_space<vmem>>, %arg8: memref<1x8x8x16xf32, #tpu.memory_space<vmem>>, %arg9: memref<10x16x16xbf16, #tpu.memory_space<vmem>>) attributes {dimension_semantics = [#tpu.dimension_semantics<parallel>], iteration_bounds = array<i64: 2>, scalar_prefetch = 0 : i64, scratch_operands = 1 : i64, tpu.core_type = #tpu.core_type<tc>, window_params = [{transform_indices = @transform_0, window_bounds = array<i64: 1, 36, 16, 8>}, {pipeline_mode = #tpu.pipeline_mode<synchronous>, transform_indices = @transform_1, window_bounds = array<i64: 72, 32>}, {pipeline_mode = #tpu.pipeline_mode<synchronous>, transform_indices = @transform_2, window_bounds = array<i64: 1, 32>}, {pipeline_mode = #tpu.pipeline_mode<synchronous>, transform_indices = @transform_3, window_bounds = array<i64: 1, 32>}, {pipeline_mode = #tpu.pipeline_mode<synchronous>, transform_indices = @transform_4, window_bounds = array<i64: 144, 16>}, {pipeline_mode = #tpu.pipeline_mode<synchronous>, transform_indices = @transform_5, window_bounds = array<i64: 1, 16>}, {pipeline_mode = #tpu.pipeline_mode<synchronous>, transform_indices = @transform_6, window_bounds = array<i64: 1, 16>}, {transform_indices = @transform_7, window_bounds = array<i64: 1, 8, 8, 16>}]} {
    %c0 = arith.constant 0 : index
    %c0_0 = arith.constant 0 : index
    %c0_1 = arith.constant 0 : index
    %c0_2 = arith.constant 0 : index
    %0 = vector.load %arg1[%c0, %c0_0, %c0_1, %c0_2] : memref<1x36x16x8xbf16, #tpu.memory_space<vmem>>, vector<1x8x8x8xbf16>
    %1 = vector.shape_cast %0 : vector<1x8x8x8xbf16> to vector<8x8x8xbf16>
    %2 = vector.shape_cast %1 : vector<8x8x8xbf16> to vector<64x8xbf16>
    %c0_3 = arith.constant 0 : index
    %c9 = arith.constant 9 : index
    %c0_4 = arith.constant 0 : index
    %c0_5 = arith.constant 0 : index
    %3 = vector.load %arg1[%c0_3, %c9, %c0_4, %c0_5] : memref<1x36x16x8xbf16, #tpu.memory_space<vmem>>, vector<1x8x8x8xbf16>
    %4 = vector.shape_cast %3 : vector<1x8x8x8xbf16> to vector<8x8x8xbf16>
    %5 = vector.shape_cast %4 : vector<8x8x8xbf16> to vector<64x8xbf16>
    %c0_6 = arith.constant 0 : index
    %c0_7 = arith.constant 0 : index
    %c1 = arith.constant 1 : index
    %c0_8 = arith.constant 0 : index
    %6 = vector.load %arg1[%c0_6, %c0_7, %c1, %c0_8] : memref<1x36x16x8xbf16, #tpu.memory_space<vmem>>, vector<1x8x8x8xbf16>
    %7 = vector.shape_cast %6 : vector<1x8x8x8xbf16> to vector<8x8x8xbf16>
    %8 = vector.shape_cast %7 : vector<8x8x8xbf16> to vector<64x8xbf16>
    %c0_9 = arith.constant 0 : index
    %c18 = arith.constant 18 : index
    %c0_10 = arith.constant 0 : index
    %c0_11 = arith.constant 0 : index
    %9 = vector.load %arg1[%c0_9, %c18, %c0_10, %c0_11] : memref<1x36x16x8xbf16, #tpu.memory_space<vmem>>, vector<1x8x8x8xbf16>
    %10 = vector.shape_cast %9 : vector<1x8x8x8xbf16> to vector<8x8x8xbf16>
    %11 = vector.shape_cast %10 : vector<8x8x8xbf16> to vector<64x8xbf16>
    %c0_12 = arith.constant 0 : index
    %c27 = arith.constant 27 : index
    %c0_13 = arith.constant 0 : index
    %c0_14 = arith.constant 0 : index
    %12 = vector.load %arg1[%c0_12, %c27, %c0_13, %c0_14] : memref<1x36x16x8xbf16, #tpu.memory_space<vmem>>, vector<1x8x8x8xbf16>
    %13 = vector.shape_cast %12 : vector<1x8x8x8xbf16> to vector<8x8x8xbf16>
    %14 = vector.shape_cast %13 : vector<8x8x8xbf16> to vector<64x8xbf16>
    %c0_15 = arith.constant 0 : index
    %c18_16 = arith.constant 18 : index
    %c1_17 = arith.constant 1 : index
    %c0_18 = arith.constant 0 : index
    %15 = vector.load %arg1[%c0_15, %c18_16, %c1_17, %c0_18] : memref<1x36x16x8xbf16, #tpu.memory_space<vmem>>, vector<1x8x8x8xbf16>
    %16 = vector.shape_cast %15 : vector<1x8x8x8xbf16> to vector<8x8x8xbf16>
    %17 = vector.shape_cast %16 : vector<8x8x8xbf16> to vector<64x8xbf16>
    %c0_19 = arith.constant 0 : index
    %c1_20 = arith.constant 1 : index
    %c0_21 = arith.constant 0 : index
    %c0_22 = arith.constant 0 : index
    %18 = vector.load %arg1[%c0_19, %c1_20, %c0_21, %c0_22] : memref<1x36x16x8xbf16, #tpu.memory_space<vmem>>, vector<1x8x8x8xbf16>
    %19 = vector.shape_cast %18 : vector<1x8x8x8xbf16> to vector<8x8x8xbf16>
    %20 = vector.shape_cast %19 : vector<8x8x8xbf16> to vector<64x8xbf16>
    %c0_23 = arith.constant 0 : index
    %c10 = arith.constant 10 : index
    %c0_24 = arith.constant 0 : index
    %c0_25 = arith.constant 0 : index
    %21 = vector.load %arg1[%c0_23, %c10, %c0_24, %c0_25] : memref<1x36x16x8xbf16, #tpu.memory_space<vmem>>, vector<1x8x8x8xbf16>
    %22 = vector.shape_cast %21 : vector<1x8x8x8xbf16> to vector<8x8x8xbf16>
    %23 = vector.shape_cast %22 : vector<8x8x8xbf16> to vector<64x8xbf16>
    %c0_26 = arith.constant 0 : index
    %c1_27 = arith.constant 1 : index
    %c1_28 = arith.constant 1 : index
    %c0_29 = arith.constant 0 : index
    %24 = vector.load %arg1[%c0_26, %c1_27, %c1_28, %c0_29] : memref<1x36x16x8xbf16, #tpu.memory_space<vmem>>, vector<1x8x8x8xbf16>
    %25 = vector.shape_cast %24 : vector<1x8x8x8xbf16> to vector<8x8x8xbf16>
    %26 = vector.shape_cast %25 : vector<8x8x8xbf16> to vector<64x8xbf16>
    %27 = tpu.concatenate %2, %5, %8, %11, %14, %17, %20, %23, %26 in 1 : vector<64x8xbf16>, vector<64x8xbf16>, vector<64x8xbf16>, vector<64x8xbf16>, vector<64x8xbf16>, vector<64x8xbf16>, vector<64x8xbf16>, vector<64x8xbf16>, vector<64x8xbf16> -> vector<64x72xbf16>
    %c0_30 = arith.constant 0 : index
    %c0_31 = arith.constant 0 : index
    %28 = vector.load %arg2[%c0_30, %c0_31] : memref<72x32xbf16, #tpu.memory_space<vmem>>, vector<72x32xbf16>
    %cst = arith.constant dense<0.000000e+00> : vector<64x32xf32>
    %29 = tpu.matmul %27, %28, %cst {dimension_numbers = #tpu.dot_dimension_numbers<[1], [0], [0], [1], [0, 0, 1, 1], [], []>} : vector<64x72xbf16>, vector<72x32xbf16>, vector<64x32xf32> -> vector<64x32xf32>
    %c0_32 = arith.constant 0 : index
    %c0_33 = arith.constant 0 : index
    %30 = vector.load %arg3[%c0_32, %c0_33] : memref<1x32xf32, #tpu.memory_space<vmem>>, vector<1x32xf32>
    %31 = vector.broadcast %30 : vector<1x32xf32> to vector<64x32xf32>
    %32 = arith.mulf %29, %31 : vector<64x32xf32>
    %c0_34 = arith.constant 0 : index
    %c0_35 = arith.constant 0 : index
    %33 = vector.load %arg4[%c0_34, %c0_35] : memref<1x32xf32, #tpu.memory_space<vmem>>, vector<1x32xf32>
    %34 = vector.broadcast %33 : vector<1x32xf32> to vector<64x32xf32>
    %35 = arith.addf %32, %34 : vector<64x32xf32>
    %36 = vector.extract_strided_slice %35 {offsets = [0, 0], sizes = [64, 16], strides = [1, 1]} : vector<64x32xf32> to vector<64x16xf32>
    %cst_36 = arith.constant 0.000000e+00 : f32
    %37 = vector.broadcast %cst_36 : f32 to vector<64x16xf32>
    %38 = arith.maximumf %36, %37 : vector<64x16xf32>
    %39 = vector.extract_strided_slice %35 {offsets = [0, 16], sizes = [64, 16], strides = [1, 1]} : vector<64x32xf32> to vector<64x16xf32>
    %cst_37 = arith.constant 0.000000e+00 : bf16
    %40 = vector.broadcast %cst_37 : bf16 to vector<1x16x16xbf16>
    %c0_38 = arith.constant 0 : index
    %c0_39 = arith.constant 0 : index
    %c0_40 = arith.constant 0 : index
    %41 = vector.load %arg9[%c0_38, %c0_39, %c0_40] : memref<10x16x16xbf16, #tpu.memory_space<vmem>>, vector<1x16x16xbf16>
    tpu.vector_store %arg9[%c0_38, %c0_39, %c0_40], %40 {strides = array<i32>} : memref<10x16x16xbf16, #tpu.memory_space<vmem>>, vector<1x16x16xbf16>,
    %c9_41 = arith.constant 9 : index
    %c0_42 = arith.constant 0 : index
    %c0_43 = arith.constant 0 : index
    %42 = vector.load %arg9[%c9_41, %c0_42, %c0_43] : memref<10x16x16xbf16, #tpu.memory_space<vmem>>, vector<1x16x16xbf16>
    tpu.vector_store %arg9[%c9_41, %c0_42, %c0_43], %40 {strides = array<i32>} : memref<10x16x16xbf16, #tpu.memory_space<vmem>>, vector<1x16x16xbf16>,
    %cst_44 = arith.constant 0.000000e+00 : bf16
    %43 = vector.broadcast %cst_44 : bf16 to vector<8x1x16xbf16>
    %c1_45 = arith.constant 1 : index
    %c0_46 = arith.constant 0 : index
    %c0_47 = arith.constant 0 : index
    %44 = vector.load %arg9[%c1_45, %c0_46, %c0_47] : memref<10x16x16xbf16, #tpu.memory_space<vmem>>, vector<8x1x16xbf16>
    tpu.vector_store %arg9[%c1_45, %c0_46, %c0_47], %43 {strides = array<i32>} : memref<10x16x16xbf16, #tpu.memory_space<vmem>>, vector<8x1x16xbf16>,
    %c1_48 = arith.constant 1 : index
    %c9_49 = arith.constant 9 : index
    %c0_50 = arith.constant 0 : index
    %45 = vector.load %arg9[%c1_48, %c9_49, %c0_50] : memref<10x16x16xbf16, #tpu.memory_space<vmem>>, vector<8x1x16xbf16>
    tpu.vector_store %arg9[%c1_48, %c9_49, %c0_50], %43 {strides = array<i32>} : memref<10x16x16xbf16, #tpu.memory_space<vmem>>, vector<8x1x16xbf16>,
    %46 = vector.shape_cast %38 : vector<64x16xf32> to vector<8x8x16xf32>
    %47 = arith.truncf %46 : vector<8x8x16xf32> to vector<8x8x16xbf16>
    %c1_51 = arith.constant 1 : index
    %c1_52 = arith.constant 1 : index
    %c0_53 = arith.constant 0 : index
    %48 = vector.load %arg9[%c1_51, %c1_52, %c0_53] : memref<10x16x16xbf16, #tpu.memory_space<vmem>>, vector<8x8x16xbf16>
    tpu.vector_store %arg9[%c1_51, %c1_52, %c0_53], %47 {strides = array<i32>} : memref<10x16x16xbf16, #tpu.memory_space<vmem>>, vector<8x8x16xbf16>,
    %c0_54 = arith.constant 0 : index
    %c0_55 = arith.constant 0 : index
    %c0_56 = arith.constant 0 : index
    %49 = vector.load %arg9[%c0_54, %c0_55, %c0_56] : memref<10x16x16xbf16, #tpu.memory_space<vmem>>, vector<8x8x16xbf16>
    %50 = vector.shape_cast %49 : vector<8x8x16xbf16> to vector<64x16xbf16>
    %c0_57 = arith.constant 0 : index
    %c1_58 = arith.constant 1 : index
    %c0_59 = arith.constant 0 : index
    %51 = vector.load %arg9[%c0_57, %c1_58, %c0_59] : memref<10x16x16xbf16, #tpu.memory_space<vmem>>, vector<8x8x16xbf16>
    %52 = vector.shape_cast %51 : vector<8x8x16xbf16> to vector<64x16xbf16>
    %c0_60 = arith.constant 0 : index
    %c2 = arith.constant 2 : index
    %c0_61 = arith.constant 0 : index
    %53 = vector.load %arg9[%c0_60, %c2, %c0_61] : memref<10x16x16xbf16, #tpu.memory_space<vmem>>, vector<8x8x16xbf16>
    %54 = vector.shape_cast %53 : vector<8x8x16xbf16> to vector<64x16xbf16>
    %c1_62 = arith.constant 1 : index
    %c0_63 = arith.constant 0 : index
    %c0_64 = arith.constant 0 : index
    %55 = vector.load %arg9[%c1_62, %c0_63, %c0_64] : memref<10x16x16xbf16, #tpu.memory_space<vmem>>, vector<8x8x16xbf16>
    %56 = vector.shape_cast %55 : vector<8x8x16xbf16> to vector<64x16xbf16>
    %c1_65 = arith.constant 1 : index
    %c1_66 = arith.constant 1 : index
    %c0_67 = arith.constant 0 : index
    %57 = vector.load %arg9[%c1_65, %c1_66, %c0_67] : memref<10x16x16xbf16, #tpu.memory_space<vmem>>, vector<8x8x16xbf16>
    %58 = vector.shape_cast %57 : vector<8x8x16xbf16> to vector<64x16xbf16>
    %c1_68 = arith.constant 1 : index
    %c2_69 = arith.constant 2 : index
    %c0_70 = arith.constant 0 : index
    %59 = vector.load %arg9[%c1_68, %c2_69, %c0_70] : memref<10x16x16xbf16, #tpu.memory_space<vmem>>, vector<8x8x16xbf16>
    %60 = vector.shape_cast %59 : vector<8x8x16xbf16> to vector<64x16xbf16>
    %c2_71 = arith.constant 2 : index
    %c0_72 = arith.constant 0 : index
    %c0_73 = arith.constant 0 : index
    %61 = vector.load %arg9[%c2_71, %c0_72, %c0_73] : memref<10x16x16xbf16, #tpu.memory_space<vmem>>, vector<8x8x16xbf16>
    %62 = vector.shape_cast %61 : vector<8x8x16xbf16> to vector<64x16xbf16>
    %c2_74 = arith.constant 2 : index
    %c1_75 = arith.constant 1 : index
    %c0_76 = arith.constant 0 : index
    %63 = vector.load %arg9[%c2_74, %c1_75, %c0_76] : memref<10x16x16xbf16, #tpu.memory_space<vmem>>, vector<8x8x16xbf16>
    %64 = vector.shape_cast %63 : vector<8x8x16xbf16> to vector<64x16xbf16>
    %c2_77 = arith.constant 2 : index
    %c2_78 = arith.constant 2 : index
    %c0_79 = arith.constant 0 : index
    %65 = vector.load %arg9[%c2_77, %c2_78, %c0_79] : memref<10x16x16xbf16, #tpu.memory_space<vmem>>, vector<8x8x16xbf16>
    %66 = vector.shape_cast %65 : vector<8x8x16xbf16> to vector<64x16xbf16>
    %67 = tpu.concatenate %50, %52, %54, %56, %58, %60, %62, %64, %66 in 1 : vector<64x16xbf16>, vector<64x16xbf16>, vector<64x16xbf16>, vector<64x16xbf16>, vector<64x16xbf16>, vector<64x16xbf16>, vector<64x16xbf16>, vector<64x16xbf16>, vector<64x16xbf16> -> vector<64x144xbf16>
    %c0_80 = arith.constant 0 : index
    %c0_81 = arith.constant 0 : index
    %68 = vector.load %arg5[%c0_80, %c0_81] : memref<144x16xbf16, #tpu.memory_space<vmem>>, vector<144x16xbf16>
    %cst_82 = arith.constant dense<0.000000e+00> : vector<64x16xf32>
    %69 = tpu.matmul %67, %68, %cst_82 {dimension_numbers = #tpu.dot_dimension_numbers<[1], [0], [0], [1], [0, 0, 1, 1], [], []>} : vector<64x144xbf16>, vector<144x16xbf16>, vector<64x16xf32> -> vector<64x16xf32>
    %c0_83 = arith.constant 0 : index
    %c0_84 = arith.constant 0 : index
    %70 = vector.load %arg6[%c0_83, %c0_84] : memref<1x16xf32, #tpu.memory_space<vmem>>, vector<1x16xf32>
    %71 = vector.broadcast %70 : vector<1x16xf32> to vector<64x16xf32>
    %72 = arith.mulf %69, %71 : vector<64x16xf32>
    %c0_85 = arith.constant 0 : index
    %c0_86 = arith.constant 0 : index
    %73 = vector.load %arg7[%c0_85, %c0_86] : memref<1x16xf32, #tpu.memory_space<vmem>>, vector<1x16xf32>
    %74 = vector.broadcast %73 : vector<1x16xf32> to vector<64x16xf32>
    %75 = arith.addf %72, %74 : vector<64x16xf32>
    %76 = arith.addf %75, %39 : vector<64x16xf32>
    %cst_87 = arith.constant 0.000000e+00 : f32
    %77 = vector.broadcast %cst_87 : f32 to vector<64x16xf32>
    %78 = arith.maximumf %76, %77 : vector<64x16xf32>
    %79 = vector.shape_cast %78 : vector<64x16xf32> to vector<8x8x16xf32>
    %c0_88 = arith.constant 0 : index
    %c0_89 = arith.constant 0 : index
    %c0_90 = arith.constant 0 : index
    %c0_91 = arith.constant 0 : index
    %80 = vector.load %arg8[%c0_88, %c0_89, %c0_90, %c0_91] : memref<1x8x8x16xf32, #tpu.memory_space<vmem>>, vector<1x8x8x16xf32>
    %81 = vector.shape_cast %80 : vector<1x8x8x16xf32> to vector<8x8x16xf32>
    %82 = vector.shape_cast %79 : vector<8x8x16xf32> to vector<1x8x8x16xf32>
    tpu.vector_store %arg8[%c0_88, %c0_89, %c0_90, %c0_91], %82 {strides = array<i32>} : memref<1x8x8x16xf32, #tpu.memory_space<vmem>>, vector<1x8x8x16xf32>,
    return
  }
  func.func @transform_0(%arg0: i32) -> (i32, i32, i32, i32) {
    %c0_i32 = arith.constant 0 : i32
    %c0_i32_0 = arith.constant 0 : i32
    %c0_i32_1 = arith.constant 0 : i32
    %c0_i32_2 = arith.constant 0 : i32
    return %arg0, %c0_i32, %c0_i32_0, %c0_i32_1 : i32, i32, i32, i32
  }
  func.func @transform_1(%arg0: i32) -> (i32, i32) {
    %c0_i32 = arith.constant 0 : i32
    %c0_i32_0 = arith.constant 0 : i32
    %c0_i32_1 = arith.constant 0 : i32
    return %c0_i32, %c0_i32_0 : i32, i32
  }
  func.func @transform_2(%arg0: i32) -> (i32, i32) {
    %c0_i32 = arith.constant 0 : i32
    %c0_i32_0 = arith.constant 0 : i32
    %c0_i32_1 = arith.constant 0 : i32
    return %c0_i32, %c0_i32_0 : i32, i32
  }
  func.func @transform_3(%arg0: i32) -> (i32, i32) {
    %c0_i32 = arith.constant 0 : i32
    %c0_i32_0 = arith.constant 0 : i32
    %c0_i32_1 = arith.constant 0 : i32
    return %c0_i32, %c0_i32_0 : i32, i32
  }
  func.func @transform_4(%arg0: i32) -> (i32, i32) {
    %c0_i32 = arith.constant 0 : i32
    %c0_i32_0 = arith.constant 0 : i32
    %c0_i32_1 = arith.constant 0 : i32
    return %c0_i32, %c0_i32_0 : i32, i32
  }
  func.func @transform_5(%arg0: i32) -> (i32, i32) {
    %c0_i32 = arith.constant 0 : i32
    %c0_i32_0 = arith.constant 0 : i32
    %c0_i32_1 = arith.constant 0 : i32
    return %c0_i32, %c0_i32_0 : i32, i32
  }
  func.func @transform_6(%arg0: i32) -> (i32, i32) {
    %c0_i32 = arith.constant 0 : i32
    %c0_i32_0 = arith.constant 0 : i32
    %c0_i32_1 = arith.constant 0 : i32
    return %c0_i32, %c0_i32_0 : i32, i32
  }
  func.func @transform_7(%arg0: i32) -> (i32, i32, i32, i32) {
    %c0_i32 = arith.constant 0 : i32
    %c0_i32_0 = arith.constant 0 : i32
    %c0_i32_1 = arith.constant 0 : i32
    %c0_i32_2 = arith.constant 0 : i32
    return %arg0, %c0_i32, %c0_i32_0, %c0_i32_1 : i32, i32, i32, i32
  }
}

module attributes {stable_mosaic.version = 11 : i64} {
  func.func @res2d_kernel(%arg0: i32, %arg1: memref<1x36x16x8xbf16, #tpu.memory_space<vmem>>, %arg2: memref<72x32xbf16, #tpu.memory_space<vmem>>, %arg3: memref<1x32xf32, #tpu.memory_space<vmem>>, %arg4: memref<1x32xf32, #tpu.memory_space<vmem>>, %arg5: memref<144x16xbf16, #tpu.memory_space<vmem>>, %arg6: memref<1x16xf32, #tpu.memory_space<vmem>>, %arg7: memref<1x16xf32, #tpu.memory_space<vmem>>, %arg8: memref<1x8x8x16xf32, #tpu.memory_space<vmem>>, %arg9: memref<10x16x16xbf16, #tpu.memory_space<vmem>>) attributes {dimension_semantics = [#tpu.dimension_semantics<parallel>], iteration_bounds = array<i64: 2>, scalar_prefetch = 0 : i64, scratch_operands = 1 : i64, tpu.core_type = #tpu.core_type<tc>, window_params = [{transform_indices = @transform_0, window_bounds = array<i64: 1, 36, 16, 8>}, {pipeline_mode = #tpu.pipeline_mode<synchronous>, transform_indices = @transform_1, window_bounds = array<i64: 72, 32>}, {pipeline_mode = #tpu.pipeline_mode<synchronous>, transform_indices = @transform_2, window_bounds = array<i64: 1, 32>}, {pipeline_mode = #tpu.pipeline_mode<synchronous>, transform_indices = @transform_3, window_bounds = array<i64: 1, 32>}, {pipeline_mode = #tpu.pipeline_mode<synchronous>, transform_indices = @transform_4, window_bounds = array<i64: 144, 16>}, {pipeline_mode = #tpu.pipeline_mode<synchronous>, transform_indices = @transform_5, window_bounds = array<i64: 1, 16>}, {pipeline_mode = #tpu.pipeline_mode<synchronous>, transform_indices = @transform_6, window_bounds = array<i64: 1, 16>}, {transform_indices = @transform_7, window_bounds = array<i64: 1, 8, 8, 16>}]} {
    %c0 = arith.constant 0 : index
    %c0_0 = arith.constant 0 : index
    %c0_1 = arith.constant 0 : index
    %c0_2 = arith.constant 0 : index
    %0 = vector.load %arg1[%c0, %c0_0, %c0_1, %c0_2] : memref<1x36x16x8xbf16, #tpu.memory_space<vmem>>, vector<1x8x8x8xbf16>
    %1 = vector.shape_cast %0 : vector<1x8x8x8xbf16> to vector<8x8x8xbf16>
    %2 = vector.shape_cast %1 : vector<8x8x8xbf16> to vector<64x8xbf16>
    %c0_3 = arith.constant 0 : index
    %c9 = arith.constant 9 : index
    %c0_4 = arith.constant 0 : index
    %c0_5 = arith.constant 0 : index
    %3 = vector.load %arg1[%c0_3, %c9, %c0_4, %c0_5] : memref<1x36x16x8xbf16, #tpu.memory_space<vmem>>, vector<1x8x8x8xbf16>
    %4 = vector.shape_cast %3 : vector<1x8x8x8xbf16> to vector<8x8x8xbf16>
    %5 = vector.shape_cast %4 : vector<8x8x8xbf16> to vector<64x8xbf16>
    %c0_6 = arith.constant 0 : index
    %c0_7 = arith.constant 0 : index
    %c1 = arith.constant 1 : index
    %c0_8 = arith.constant 0 : index
    %6 = vector.load %arg1[%c0_6, %c0_7, %c1, %c0_8] : memref<1x36x16x8xbf16, #tpu.memory_space<vmem>>, vector<1x8x8x8xbf16>
    %7 = vector.shape_cast %6 : vector<1x8x8x8xbf16> to vector<8x8x8xbf16>
    %8 = vector.shape_cast %7 : vector<8x8x8xbf16> to vector<64x8xbf16>
    %c0_9 = arith.constant 0 : index
    %c18 = arith.constant 18 : index
    %c0_10 = arith.constant 0 : index
    %c0_11 = arith.constant 0 : index
    %9 = vector.load %arg1[%c0_9, %c18, %c0_10, %c0_11] : memref<1x36x16x8xbf16, #tpu.memory_space<vmem>>, vector<1x8x8x8xbf16>
    %10 = vector.shape_cast %9 : vector<1x8x8x8xbf16> to vector<8x8x8xbf16>
    %11 = vector.shape_cast %10 : vector<8x8x8xbf16> to vector<64x8xbf16>
    %c0_12 = arith.constant 0 : index
    %c27 = arith.constant 27 : index
    %c0_13 = arith.constant 0 : index
    %c0_14 = arith.constant 0 : index
    %12 = vector.load %arg1[%c0_12, %c27, %c0_13, %c0_14] : memref<1x36x16x8xbf16, #tpu.memory_space<vmem>>, vector<1x8x8x8xbf16>
    %13 = vector.shape_cast %12 : vector<1x8x8x8xbf16> to vector<8x8x8xbf16>
    %14 = vector.shape_cast %13 : vector<8x8x8xbf16> to vector<64x8xbf16>
    %c0_15 = arith.constant 0 : index
    %c18_16 = arith.constant 18 : index
    %c1_17 = arith.constant 1 : index
    %c0_18 = arith.constant 0 : index
    %15 = vector.load %arg1[%c0_15, %c18_16, %c1_17, %c0_18] : memref<1x36x16x8xbf16, #tpu.memory_space<vmem>>, vector<1x8x8x8xbf16>
    %16 = vector.shape_cast %15 : vector<1x8x8x8xbf16> to vector<8x8x8xbf16>
    %17 = vector.shape_cast %16 : vector<8x8x8xbf16> to vector<64x8xbf16>
    %c0_19 = arith.constant 0 : index
    %c1_20 = arith.constant 1 : index
    %c0_21 = arith.constant 0 : index
    %c0_22 = arith.constant 0 : index
    %18 = vector.load %arg1[%c0_19, %c1_20, %c0_21, %c0_22] : memref<1x36x16x8xbf16, #tpu.memory_space<vmem>>, vector<1x8x8x8xbf16>
    %19 = vector.shape_cast %18 : vector<1x8x8x8xbf16> to vector<8x8x8xbf16>
    %20 = vector.shape_cast %19 : vector<8x8x8xbf16> to vector<64x8xbf16>
    %c0_23 = arith.constant 0 : index
    %c10 = arith.constant 10 : index
    %c0_24 = arith.constant 0 : index
    %c0_25 = arith.constant 0 : index
    %21 = vector.load %arg1[%c0_23, %c10, %c0_24, %c0_25] : memref<1x36x16x8xbf16, #tpu.memory_space<vmem>>, vector<1x8x8x8xbf16>
    %22 = vector.shape_cast %21 : vector<1x8x8x8xbf16> to vector<8x8x8xbf16>
    %23 = vector.shape_cast %22 : vector<8x8x8xbf16> to vector<64x8xbf16>
    %c0_26 = arith.constant 0 : index
    %c1_27 = arith.constant 1 : index
    %c1_28 = arith.constant 1 : index
    %c0_29 = arith.constant 0 : index
    %24 = vector.load %arg1[%c0_26, %c1_27, %c1_28, %c0_29] : memref<1x36x16x8xbf16, #tpu.memory_space<vmem>>, vector<1x8x8x8xbf16>
    %25 = vector.shape_cast %24 : vector<1x8x8x8xbf16> to vector<8x8x8xbf16>
    %26 = vector.shape_cast %25 : vector<8x8x8xbf16> to vector<64x8xbf16>
    %27 = tpu.concatenate %2, %5, %8, %11, %14, %17, %20, %23, %26 in 1 : vector<64x8xbf16>, vector<64x8xbf16>, vector<64x8xbf16>, vector<64x8xbf16>, vector<64x8xbf16>, vector<64x8xbf16>, vector<64x8xbf16>, vector<64x8xbf16>, vector<64x8xbf16> -> vector<64x72xbf16>
    %c0_30 = arith.constant 0 : index
    %c0_31 = arith.constant 0 : index
    %28 = vector.load %arg2[%c0_30, %c0_31] : memref<72x32xbf16, #tpu.memory_space<vmem>>, vector<72x32xbf16>
    %cst = arith.constant dense<0.000000e+00> : vector<64x32xf32>
    %29 = tpu.matmul %27, %28, %cst {dimension_numbers = #tpu.dot_dimension_numbers<[1], [0], [0], [1], [0, 0, 1, 1], [], []>} : vector<64x72xbf16>, vector<72x32xbf16>, vector<64x32xf32> -> vector<64x32xf32>
    %c0_32 = arith.constant 0 : index
    %c0_33 = arith.constant 0 : index
    %30 = vector.load %arg3[%c0_32, %c0_33] : memref<1x32xf32, #tpu.memory_space<vmem>>, vector<1x32xf32>
    %31 = vector.broadcast %30 : vector<1x32xf32> to vector<64x32xf32>
    %32 = arith.mulf %29, %31 : vector<64x32xf32>
    %c0_34 = arith.constant 0 : index
    %c0_35 = arith.constant 0 : index
    %33 = vector.load %arg4[%c0_34, %c0_35] : memref<1x32xf32, #tpu.memory_space<vmem>>, vector<1x32xf32>
    %34 = vector.broadcast %33 : vector<1x32xf32> to vector<64x32xf32>
    %35 = arith.addf %32, %34 : vector<64x32xf32>
    %36 = vector.extract_strided_slice %35 {offsets = [0, 0], sizes = [64, 16], strides = [1, 1]} : vector<64x32xf32> to vector<64x16xf32>
    %cst_36 = arith.constant 0.000000e+00 : f32
    %37 = vector.broadcast %cst_36 : f32 to vector<64x16xf32>
    %38 = arith.maximumf %36, %37 : vector<64x16xf32>
    %39 = vector.extract_strided_slice %35 {offsets = [0, 16], sizes = [64, 16], strides = [1, 1]} : vector<64x32xf32> to vector<64x16xf32>
    %cst_37 = arith.constant 0.000000e+00 : bf16
    %40 = vector.broadcast %cst_37 : bf16 to vector<1x16x16xbf16>
    %c0_38 = arith.constant 0 : index
    %c0_39 = arith.constant 0 : index
    %c0_40 = arith.constant 0 : index
    %41 = vector.load %arg9[%c0_38, %c0_39, %c0_40] : memref<10x16x16xbf16, #tpu.memory_space<vmem>>, vector<1x16x16xbf16>
    tpu.vector_store %arg9[%c0_38, %c0_39, %c0_40], %40 {strides = array<i32>} : memref<10x16x16xbf16, #tpu.memory_space<vmem>>, vector<1x16x16xbf16>,
    %c9_41 = arith.constant 9 : index
    %c0_42 = arith.constant 0 : index
    %c0_43 = arith.constant 0 : index
    %42 = vector.load %arg9[%c9_41, %c0_42, %c0_43] : memref<10x16x16xbf16, #tpu.memory_space<vmem>>, vector<1x16x16xbf16>
    tpu.vector_store %arg9[%c9_41, %c0_42, %c0_43], %40 {strides = array<i32>} : memref<10x16x16xbf16, #tpu.memory_space<vmem>>, vector<1x16x16xbf16>,
    %cst_44 = arith.constant 0.000000e+00 : bf16
    %43 = vector.broadcast %cst_44 : bf16 to vector<8x1x16xbf16>
    %c1_45 = arith.constant 1 : index
    %c0_46 = arith.constant 0 : index
    %c0_47 = arith.constant 0 : index
    %44 = vector.load %arg9[%c1_45, %c0_46, %c0_47] : memref<10x16x16xbf16, #tpu.memory_space<vmem>>, vector<8x1x16xbf16>
    tpu.vector_store %arg9[%c1_45, %c0_46, %c0_47], %43 {strides = array<i32>} : memref<10x16x16xbf16, #tpu.memory_space<vmem>>, vector<8x1x16xbf16>,
    %c1_48 = arith.constant 1 : index
    %c9_49 = arith.constant 9 : index
    %c0_50 = arith.constant 0 : index
    %45 = vector.load %arg9[%c1_48, %c9_49, %c0_50] : memref<10x16x16xbf16, #tpu.memory_space<vmem>>, vector<8x1x16xbf16>
    tpu.vector_store %arg9[%c1_48, %c9_49, %c0_50], %43 {strides = array<i32>} : memref<10x16x16xbf16, #tpu.memory_space<vmem>>, vector<8x1x16xbf16>,
    %46 = vector.shape_cast %38 : vector<64x16xf32> to vector<8x8x16xf32>
    %47 = arith.truncf %46 : vector<8x8x16xf32> to vector<8x8x16xbf16>
    %c1_51 = arith.constant 1 : index
    %c1_52 = arith.constant 1 : index
    %c0_53 = arith.constant 0 : index
    %48 = vector.load %arg9[%c1_51, %c1_52, %c0_53] : memref<10x16x16xbf16, #tpu.memory_space<vmem>>, vector<8x8x16xbf16>
    tpu.vector_store %arg9[%c1_51, %c1_52, %c0_53], %47 {strides = array<i32>} : memref<10x16x16xbf16, #tpu.memory_space<vmem>>, vector<8x8x16xbf16>,
    %c0_54 = arith.constant 0 : index
    %c0_55 = arith.constant 0 : index
    %c0_56 = arith.constant 0 : index
    %49 = vector.load %arg9[%c0_54, %c0_55, %c0_56] : memref<10x16x16xbf16, #tpu.memory_space<vmem>>, vector<8x8x16xbf16>
    %50 = vector.shape_cast %49 : vector<8x8x16xbf16> to vector<64x16xbf16>
    %c0_57 = arith.constant 0 : index
    %c1_58 = arith.constant 1 : index
    %c0_59 = arith.constant 0 : index
    %51 = vector.load %arg9[%c0_57, %c1_58, %c0_59] : memref<10x16x16xbf16, #tpu.memory_space<vmem>>, vector<8x8x16xbf16>
    %52 = vector.shape_cast %51 : vector<8x8x16xbf16> to vector<64x16xbf16>
    %c0_60 = arith.constant 0 : index
    %c2 = arith.constant 2 : index
    %c0_61 = arith.constant 0 : index
    %53 = vector.load %arg9[%c0_60, %c2, %c0_61] : memref<10x16x16xbf16, #tpu.memory_space<vmem>>, vector<8x8x16xbf16>
    %54 = vector.shape_cast %53 : vector<8x8x16xbf16> to vector<64x16xbf16>
    %c1_62 = arith.constant 1 : index
    %c0_63 = arith.constant 0 : index
    %c0_64 = arith.constant 0 : index
    %55 = vector.load %arg9[%c1_62, %c0_63, %c0_64] : memref<10x16x16xbf16, #tpu.memory_space<vmem>>, vector<8x8x16xbf16>
    %56 = vector.shape_cast %55 : vector<8x8x16xbf16> to vector<64x16xbf16>
    %c1_65 = arith.constant 1 : index
    %c1_66 = arith.constant 1 : index
    %c0_67 = arith.constant 0 : index
    %57 = vector.load %arg9[%c1_65, %c1_66, %c0_67] : memref<10x16x16xbf16, #tpu.memory_space<vmem>>, vector<8x8x16xbf16>
    %58 = vector.shape_cast %57 : vector<8x8x16xbf16> to vector<64x16xbf16>
    %c1_68 = arith.constant 1 : index
    %c2_69 = arith.constant 2 : index
    %c0_70 = arith.constant 0 : index
    %59 = vector.load %arg9[%c1_68, %c2_69, %c0_70] : memref<10x16x16xbf16, #tpu.memory_space<vmem>>, vector<8x8x16xbf16>
    %60 = vector.shape_cast %59 : vector<8x8x16xbf16> to vector<64x16xbf16>
    %c2_71 = arith.constant 2 : index
    %c0_72 = arith.constant 0 : index
    %c0_73 = arith.constant 0 : index
    %61 = vector.load %arg9[%c2_71, %c0_72, %c0_73] : memref<10x16x16xbf16, #tpu.memory_space<vmem>>, vector<8x8x16xbf16>
    %62 = vector.shape_cast %61 : vector<8x8x16xbf16> to vector<64x16xbf16>
    %c2_74 = arith.constant 2 : index
    %c1_75 = arith.constant 1 : index
    %c0_76 = arith.constant 0 : index
    %63 = vector.load %arg9[%c2_74, %c1_75, %c0_76] : memref<10x16x16xbf16, #tpu.memory_space<vmem>>, vector<8x8x16xbf16>
    %64 = vector.shape_cast %63 : vector<8x8x16xbf16> to vector<64x16xbf16>
    %c2_77 = arith.constant 2 : index
    %c2_78 = arith.constant 2 : index
    %c0_79 = arith.constant 0 : index
    %65 = vector.load %arg9[%c2_77, %c2_78, %c0_79] : memref<10x16x16xbf16, #tpu.memory_space<vmem>>, vector<8x8x16xbf16>
    %66 = vector.shape_cast %65 : vector<8x8x16xbf16> to vector<64x16xbf16>
    %67 = tpu.concatenate %50, %52, %54, %56, %58, %60, %62, %64, %66 in 1 : vector<64x16xbf16>, vector<64x16xbf16>, vector<64x16xbf16>, vector<64x16xbf16>, vector<64x16xbf16>, vector<64x16xbf16>, vector<64x16xbf16>, vector<64x16xbf16>, vector<64x16xbf16> -> vector<64x144xbf16>
    %c0_80 = arith.constant 0 : index
    %c0_81 = arith.constant 0 : index
    %68 = vector.load %arg5[%c0_80, %c0_81] : memref<144x16xbf16, #tpu.memory_space<vmem>>, vector<144x16xbf16>
    %cst_82 = arith.constant dense<0.000000e+00> : vector<64x16xf32>
    %69 = tpu.matmul %67, %68, %cst_82 {dimension_numbers = #tpu.dot_dimension_numbers<[1], [0], [0], [1], [0, 0, 1, 1], [], []>} : vector<64x144xbf16>, vector<144x16xbf16>, vector<64x16xf32> -> vector<64x16xf32>
    %c0_83 = arith.constant 0 : index
    %c0_84 = arith.constant 0 : index
    %70 = vector.load %arg6[%c0_83, %c0_84] : memref<1x16xf32, #tpu.memory_space<vmem>>, vector<1x16xf32>
    %71 = vector.broadcast %70 : vector<1x16xf32> to vector<64x16xf32>
    %72 = arith.mulf %69, %71 : vector<64x16xf32>
    %c0_85 = arith.constant 0 : index
    %c0_86 = arith.constant 0 : index
    %73 = vector.load %arg7[%c0_85, %c0_86] : memref<1x16xf32, #tpu.memory_space<vmem>>, vector<1x16xf32>
    %74 = vector.broadcast %73 : vector<1x16xf32> to vector<64x16xf32>
    %75 = arith.addf %72, %74 : vector<64x16xf32>
    %76 = arith.addf %75, %39 : vector<64x16xf32>
    %cst_87 = arith.constant 0.000000e+00 : f32
    %77 = vector.broadcast %cst_87 : f32 to vector<64x16xf32>
    %78 = arith.maximumf %76, %77 : vector<64x16xf32>
    %79 = vector.shape_cast %78 : vector<64x16xf32> to vector<8x8x16xf32>
    %c0_88 = arith.constant 0 : index
    %c0_89 = arith.constant 0 : index
    %c0_90 = arith.constant 0 : index
    %c0_91 = arith.constant 0 : index
    %80 = vector.load %arg8[%c0_88, %c0_89, %c0_90, %c0_91] : memref<1x8x8x16xf32, #tpu.memory_space<vmem>>, vector<1x8x8x16xf32>
    %81 = vector.shape_cast %80 : vector<1x8x8x16xf32> to vector<8x8x16xf32>
    %82 = vector.shape_cast %79 : vector<8x8x16xf32> to vector<1x8x8x16xf32>
    tpu.vector_store %arg8[%c0_88, %c0_89, %c0_90, %c0_91], %82 {strides = array<i32>} : memref<1x8x8x16xf32, #tpu.memory_space<vmem>>, vector<1x8x8x16xf32>,
    return
  }
  func.func @transform_0(%arg0: i32) -> (i32, i32, i32, i32) {
    %c0_i32 = arith.constant 0 : i32
    %c0_i32_0 = arith.constant 0 : i32
    %c0_i32_1 = arith.constant 0 : i32
    %c0_i32_2 = arith.constant 0 : i32
    return %arg0, %c0_i32, %c0_i32_0, %c0_i32_1 : i32, i32, i32, i32
  }
  func.func @transform_1(%arg0: i32) -> (i32, i32) {
    %c0_i32 = arith.constant 0 : i32
    %c0_i32_0 = arith.constant 0 : i32
    %c0_i32_1 = arith.constant 0 : i32
    return %c0_i32, %c0_i32_0 : i32, i32
  }
  func.func @transform_2(%arg0: i32) -> (i32, i32) {
    %c0_i32 = arith.constant 0 : i32
    %c0_i32_0 = arith.constant 0 : i32
    %c0_i32_1 = arith.constant 0 : i32
    return %c0_i32, %c0_i32_0 : i32, i32
  }
  func.func @transform_3(%arg0: i32) -> (i32, i32) {
    %c0_i32 = arith.constant 0 : i32
    %c0_i32_0 = arith.constant 0 : i32
    %c0_i32_1 = arith.constant 0 : i32
    return %c0_i32, %c0_i32_0 : i32, i32
  }
  func.func @transform_4(%arg0: i32) -> (i32, i32) {
    %c0_i32 = arith.constant 0 : i32
    %c0_i32_0 = arith.constant 0 : i32
    %c0_i32_1 = arith.constant 0 : i32
    return %c0_i32, %c0_i32_0 : i32, i32
  }
  func.func @transform_5(%arg0: i32) -> (i32, i32) {
    %c0_i32 = arith.constant 0 : i32
    %c0_i32_0 = arith.constant 0 : i32
    %c0_i32_1 = arith.constant 0 : i32
    return %c0_i32, %c0_i32_0 : i32, i32
  }
  func.func @transform_6(%arg0: i32) -> (i32, i32) {
    %c0_i32 = arith.constant 0 : i32
    %c0_i32_0 = arith.constant 0 : i32
    %c0_i32_1 = arith.constant 0 : i32
    return %c0_i32, %c0_i32_0 : i32, i32
  }
  func.func @transform_7(%arg0: i32) -> (i32, i32, i32, i32) {
    %c0_i32 = arith.constant 0 : i32
    %c0_i32_0 = arith.constant 0 : i32
    %c0_i32_1 = arith.constant 0 : i32
    %c0_i32_2 = arith.constant 0 : i32
    return %arg0, %c0_i32, %c0_i32_0, %c0_i32_1 : i32, i32, i32, i32
  }
}

</mosaic_0001>

<llo_original>
// kernel: tpu_custom_call.1
$region0: #{tpu_custom_call.1}
  #allocation0 [shape = 'u32[]', space=smem, size = 0x4, offset = 0x4, fixed_abs, tag = 'smem constant byte address 0x4 - core index']
  #allocation1 [shape = 'u32[144,128]{1,0:T(1,128)}', space=vmem, size = 0x12000, scoped, tag = 'internal scratch']
  #allocation2 [shape = 'bf16[10,16,16]{2,1,0:T(8,128)(2,1)}', space=vmem, size = 0xa000, scoped, tag = 'scratch operand']
  %s0 = inlined_call_operand.vmem [shape: bf16[2,36,16,8], index: 0, kind: input, shape index: {}]
  %s1 = inlined_call_operand.vmem [shape: bf16[72,32], index: 1, kind: input, shape index: {}]
  %s2 = inlined_call_operand.vmem [shape: f32[1,32], index: 2, kind: input, shape index: {}]
  %s3 = inlined_call_operand.vmem [shape: f32[1,32], index: 3, kind: input, shape index: {}]
  %s4 = inlined_call_operand.vmem [shape: bf16[144,16], index: 4, kind: input, shape index: {}]
  %s5 = inlined_call_operand.vmem [shape: f32[1,16], index: 5, kind: input, shape index: {}]
  %s6 = inlined_call_operand.vmem [shape: f32[1,16], index: 6, kind: input, shape index: {}]
  %s7 = inlined_call_operand.hbm [shape: f32[2,8,8,16], index: 7, kind: output, shape index: {}]
  %s8 = sld [smem:[#allocation0]]
  $region61: #{tpu_custom_call.1} parent=0
    _
  %s10 = ssub.s32 1, %s8
  %s11 = scalar_select 0, %s10, %s8
  $region1: #{tpu_custom_call.1} parent=0
    #allocation3 [shape = 'u8[65536]{0}', space=vmem, size = 0x10000, scoped, tag = 'output window, operand 0']
    #allocation4 [shape = 's32[2]{0}', space=sflag, size = 0x8, scoped, tag = 'scoped memory for tpu_custom_call.1']
    %12 = vsyncpa [#allocation4], 0
    %s13 = scalar_lea.sflag [#allocation4], 1
    %14 = vsyncpa %s13, 0
    loop: start=0, step=1, limit=4
    $region2: #{tpu_custom_call.1} parent=1 // loop_pre_header
      _
    $region3: #{tpu_custom_call.1} parent=1 // loop_header
      %s16 = sphi 0, %s20
      %p17 = scmp.ge.s32.totalorder %s16, 4
      %s26 = sphi 0, %s28
      %s29 = sphi 0, %s26
      %s30 = sphi 0, %s29
      %s46 = sphi 0, %s30
      %s50 = sphi 0, %s50
      %s52 = sphi 0, %s50
      %s53 = sphi 0, %s52
      %s67 = sphi 0, %s53
      %s71 = sphi 0, %s71
      %s73 = sphi 0, %s71
      %s74 = sphi 0, %s73
      %s88 = sphi 0, %s74
      %s92 = sphi 0, %s92
      %s94 = sphi 0, %s92
      %s95 = sphi 0, %s94
      %s109 = sphi 0, %s95
      %s113 = sphi 0, %s113
      %s115 = sphi 0, %s113
      %s116 = sphi 0, %s115
      %s130 = sphi 0, %s116
      %s134 = sphi 0, %s134
      %s136 = sphi 0, %s134
      %s137 = sphi 0, %s136
      %s151 = sphi 0, %s137
      %s155 = sphi 0, %s155
      %s157 = sphi 0, %s155
      %s158 = sphi 0, %s157
      %s172 = sphi 0, %s158
      %s178 = sphi 0, %s180
      %s181 = sphi 0, %s178
      %s182 = sphi 0, %s181
      %s198 = sphi 0, %s182
    $region4: #{tpu_custom_call.1} parent=1 // loop_header_branch
      %19 = sbr.rel (%p17) target = $region8
    $region5: #{tpu_custom_call.1} parent=1 // loop_body
      %s21 = ssub.s32 %s16, 1
      %s22 = ssub.s32 %s16, 2
      %s23 = sadd.s32 %s16, 1
      %s24 = ssub.s32 %s16, %s23
      %p25 = scmp.eq.s32.totalorder %s24, 0
      %s27 = sadd.s32 %s26, 1
      %s28 = scalar_select %p25, %s26, %s27
      %p31 = pneg %p25
      %p32 = scmp.eq.s32.totalorder %s16, 1
      %p33 = por %p31, %p32
      %p34 = scmp.ne.s32.totalorder %s26, %s29
      %p35 = scmp.eq.s32.totalorder %s16, 0
      %p36 = por %p34, %p35
      %p37 = scmp.ne.s32.totalorder %s26, %s29
      %p38 = scmp.eq.s32.totalorder %s21, 1
      %p39 = por %p37, %p38
      %p40 = scmp.ne.s32.totalorder %s29, %s30
      %p41 = scmp.eq.s32.totalorder %s21, 0
      %p42 = por %p40, %p41
      %p43 = scmp.ne.s32.totalorder %s29, %s30
      %p44 = scmp.eq.s32.totalorder %s22, 1
      %p45 = por %p43, %p44
      %p47 = scmp.ne.s32.totalorder %s30, %s46
      %p48 = scmp.eq.s32.totalorder %s22, 0
      %p49 = por %p47, %p48
      %s51 = sadd.s32 %s50, 1
      %p54 = scmp.eq.s32.totalorder %s16, 1
      %p55 = scmp.ne.s32.totalorder %s50, %s52
      %p56 = scmp.eq.s32.totalorder %s16, 0
      %p57 = por %p55, %p56
      %p58 = scmp.ne.s32.totalorder %s50, %s52
      %p59 = scmp.eq.s32.totalorder %s21, 1
      %p60 = por %p58, %p59
      %p61 = scmp.ne.s32.totalorder %s52, %s53
      %p62 = scmp.eq.s32.totalorder %s21, 0
      %p63 = por %p61, %p62
      %p64 = scmp.ne.s32.totalorder %s52, %s53
      %p65 = scmp.eq.s32.totalorder %s22, 1
      %p66 = por %p64, %p65
      %p68 = scmp.ne.s32.totalorder %s53, %s67
      %p69 = scmp.eq.s32.totalorder %s22, 0
      %p70 = por %p68, %p69
      %s72 = sadd.s32 %s71, 1
      %p75 = scmp.eq.s32.totalorder %s16, 1
      %p76 = scmp.ne.s32.totalorder %s71, %s73
      %p77 = scmp.eq.s32.totalorder %s16, 0
      %p78 = por %p76, %p77
      %p79 = scmp.ne.s32.totalorder %s71, %s73
      %p80 = scmp.eq.s32.totalorder %s21, 1
      %p81 = por %p79, %p80
      %p82 = scmp.ne.s32.totalorder %s73, %s74
      %p83 = scmp.eq.s32.totalorder %s21, 0
      %p84 = por %p82, %p83
      %p85 = scmp.ne.s32.totalorder %s73, %s74
      %p86 = scmp.eq.s32.totalorder %s22, 1
      %p87 = por %p85, %p86
      %p89 = scmp.ne.s32.totalorder %s74, %s88
      %p90 = scmp.eq.s32.totalorder %s22, 0
      %p91 = por %p89, %p90
      %s93 = sadd.s32 %s92, 1
      %p96 = scmp.eq.s32.totalorder %s16, 1
      %p97 = scmp.ne.s32.totalorder %s92, %s94
      %p98 = scmp.eq.s32.totalorder %s16, 0
      %p99 = por %p97, %p98
      %p100 = scmp.ne.s32.totalorder %s92, %s94
      %p101 = scmp.eq.s32.totalorder %s21, 1
      %p102 = por %p100, %p101
      %p103 = scmp.ne.s32.totalorder %s94, %s95
      %p104 = scmp.eq.s32.totalorder %s21, 0
      %p105 = por %p103, %p104
      %p106 = scmp.ne.s32.totalorder %s94, %s95
      %p107 = scmp.eq.s32.totalorder %s22, 1
      %p108 = por %p106, %p107
      %p110 = scmp.ne.s32.totalorder %s95, %s109
      %p111 = scmp.eq.s32.totalorder %s22, 0
      %p112 = por %p110, %p111
      %s114 = sadd.s32 %s113, 1
      %p117 = scmp.eq.s32.totalorder %s16, 1
      %p118 = scmp.ne.s32.totalorder %s113, %s115
      %p119 = scmp.eq.s32.totalorder %s16, 0
      %p120 = por %p118, %p119
      %p121 = scmp.ne.s32.totalorder %s113, %s115
      %p122 = scmp.eq.s32.totalorder %s21, 1
      %p123 = por %p121, %p122
      %p124 = scmp.ne.s32.totalorder %s115, %s116
      %p125 = scmp.eq.s32.totalorder %s21, 0
      %p126 = por %p124, %p125
      %p127 = scmp.ne.s32.totalorder %s115, %s116
      %p128 = scmp.eq.s32.totalorder %s22, 1
      %p129 = por %p127, %p128
      %p131 = scmp.ne.s32.totalorder %s116, %s130
      %p132 = scmp.eq.s32.totalorder %s22, 0
      %p133 = por %p131, %p132
      %s135 = sadd.s32 %s134, 1
      %p138 = scmp.eq.s32.totalorder %s16, 1
      %p139 = scmp.ne.s32.totalorder %s134, %s136
      %p140 = scmp.eq.s32.totalorder %s16, 0
      %p141 = por %p139, %p140
      %p142 = scmp.ne.s32.totalorder %s134, %s136
      %p143 = scmp.eq.s32.totalorder %s21, 1
      %p144 = por %p142, %p143
      %p145 = scmp.ne.s32.totalorder %s136, %s137
      %p146 = scmp.eq.s32.totalorder %s21, 0
      %p147 = por %p145, %p146
      %p148 = scmp.ne.s32.totalorder %s136, %s137
      %p149 = scmp.eq.s32.totalorder %s22, 1
      %p150 = por %p148, %p149
      %p152 = scmp.ne.s32.totalorder %s137, %s151
      %p153 = scmp.eq.s32.totalorder %s22, 0
      %p154 = por %p152, %p153
      %s156 = sadd.s32 %s155, 1
      %p159 = scmp.eq.s32.totalorder %s16, 1
      %p160 = scmp.ne.s32.totalorder %s155, %s157
      %p161 = scmp.eq.s32.totalorder %s16, 0
      %p162 = por %p160, %p161
      %p163 = scmp.ne.s32.totalorder %s155, %s157
      %p164 = scmp.eq.s32.totalorder %s21, 1
      %p165 = por %p163, %p164
      %p166 = scmp.ne.s32.totalorder %s157, %s158
      %p167 = scmp.eq.s32.totalorder %s21, 0
      %p168 = por %p166, %p167
      %p169 = scmp.ne.s32.totalorder %s157, %s158
      %p170 = scmp.eq.s32.totalorder %s22, 1
      %p171 = por %p169, %p170
      %p173 = scmp.ne.s32.totalorder %s158, %s172
      %p174 = scmp.eq.s32.totalorder %s22, 0
      %p175 = por %p173, %p174
      %s176 = ssub.s32 %s16, %s23
      %p177 = scmp.eq.s32.totalorder %s176, 0
      %s179 = sadd.s32 %s178, 1
      %s180 = scalar_select %p177, %s178, %s179
      %p183 = pneg %p177
      %p184 = scmp.eq.s32.totalorder %s16, 1
      %p185 = por %p183, %p184
      %p186 = scmp.ne.s32.totalorder %s178, %s181
      %p187 = scmp.eq.s32.totalorder %s16, 0
      %p188 = por %p186, %p187
      %p189 = scmp.ne.s32.totalorder %s178, %s181
      %p190 = scmp.eq.s32.totalorder %s21, 1
      %p191 = por %p189, %p190
      %p192 = scmp.ne.s32.totalorder %s181, %s182
      %p193 = scmp.eq.s32.totalorder %s21, 0
      %p194 = por %p192, %p193
      %p195 = scmp.ne.s32.totalorder %s181, %s182
      %p196 = scmp.eq.s32.totalorder %s22, 1
      %p197 = por %p195, %p196
      %p199 = scmp.ne.s32.totalorder %s182, %s198
      %p200 = scmp.eq.s32.totalorder %s22, 0
      %p201 = por %p199, %p200
      %p202 = scmp.le.s32.totalorder 1, %s16
      %p203 = scmp.lt.s32.totalorder %s16, 3
      %p204 = pnand %p202, %p203
      %p205 = pneg %p204
      // Predicated region
      $region9: #{tpu_custom_call.1} parent=5 // pred_check
        _
      $region10: #{tpu_custom_call.1} parent=5 // pred_check_branch
        %207 = sbr.rel (%p204) target = $region12
      $region11: #{tpu_custom_call.1} parent=5 // pred_region
        %s208 = ssub.s32 %s16, 1
        // Predicated region
        $region13: #{tpu_custom_call.1} parent=11 // pred_check
          %p209 = pneg %p63
        $region14: #{tpu_custom_call.1} parent=11 // pred_check_branch
          %211 = sbr.rel (%p209) target = $region16
        $region15: #{tpu_custom_call.1} parent=11 // pred_region
          _
        $region16: #{tpu_custom_call.1} parent=11 // pred_fallthru
          _
        // Predicated region
        $region17: #{tpu_custom_call.1} parent=11 // pred_check
          %p212 = pneg %p84
        $region18: #{tpu_custom_call.1} parent=11 // pred_check_branch
          %214 = sbr.rel (%p212) target = $region20
        $region19: #{tpu_custom_call.1} parent=11 // pred_region
          _
        $region20: #{tpu_custom_call.1} parent=11 // pred_fallthru
          _
        // Predicated region
        $region21: #{tpu_custom_call.1} parent=11 // pred_check
          %p215 = pneg %p105
        $region22: #{tpu_custom_call.1} parent=11 // pred_check_branch
          %217 = sbr.rel (%p215) target = $region24
        $region23: #{tpu_custom_call.1} parent=11 // pred_region
          _
        $region24: #{tpu_custom_call.1} parent=11 // pred_fallthru
          _
        // Predicated region
        $region25: #{tpu_custom_call.1} parent=11 // pred_check
          %p218 = pneg %p126
        $region26: #{tpu_custom_call.1} parent=11 // pred_check_branch
          %220 = sbr.rel (%p218) target = $region28
        $region27: #{tpu_custom_call.1} parent=11 // pred_region
          _
        $region28: #{tpu_custom_call.1} parent=11 // pred_fallthru
          _
        // Predicated region
        $region29: #{tpu_custom_call.1} parent=11 // pred_check
          %p221 = pneg %p147
        $region30: #{tpu_custom_call.1} parent=11 // pred_check_branch
          %223 = sbr.rel (%p221) target = $region32
        $region31: #{tpu_custom_call.1} parent=11 // pred_region
          _
        $region32: #{tpu_custom_call.1} parent=11 // pred_fallthru
          _
        // Predicated region
        $region33: #{tpu_custom_call.1} parent=11 // pred_check
          %p224 = pneg %p168
        $region34: #{tpu_custom_call.1} parent=11 // pred_check_branch
          %226 = sbr.rel (%p224) target = $region36
        $region35: #{tpu_custom_call.1} parent=11 // pred_region
          _
        $region36: #{tpu_custom_call.1} parent=11 // pred_fallthru
          _
      $region12: #{tpu_custom_call.1} parent=5 // pred_fallthru
        _
      %p227 = scmp.lt.s32.totalorder %s16, 2
      // Predicated region
      $region37: #{tpu_custom_call.1} parent=5 // pred_check
        %p228 = pneg %p227
      $region38: #{tpu_custom_call.1} parent=5 // pred_check_branch
        %230 = sbr.rel (%p228) target = $region40
      $region39: #{tpu_custom_call.1} parent=5 // pred_region
        // Predicated region
        $region41: #{tpu_custom_call.1} parent=39 // pred_check
          %p231 = pneg %p36
        $region42: #{tpu_custom_call.1} parent=39 // pred_check_branch
          %233 = sbr.rel (%p231) target = $region44
        $region43: #{tpu_custom_call.1} parent=39 // pred_region
          %p234 = scmp.lt.s32.totalorder %s16, 1
          %s235 = scalar_select %p234, %s16, 1
          %s236 = smul.addr %s235, 72
          %s237 = smul.addr %s236, 4
          %s238 = scalar_lea.vmem %s0, %s237
        $region44: #{tpu_custom_call.1} parent=39 // pred_fallthru
          _
      $region40: #{tpu_custom_call.1} parent=5 // pred_fallthru
        _
      %p239 = scmp.le.s32.totalorder 1, %s16
      %p240 = scmp.lt.s32.totalorder %s16, 3
      %p241 = pnand %p239, %p240
      %p242 = pneg %p241
      // Predicated region
      $region45: #{tpu_custom_call.1} parent=5 // pred_check
        _
      $region46: #{tpu_custom_call.1} parent=5 // pred_check_branch
        %244 = sbr.rel (%p241) target = $region48
      $region47: #{tpu_custom_call.1} parent=5 // pred_region
        %s245 = ssub.s32 %s16, 1
        %p246 = scmp.lt.s32.totalorder %s21, 1
        %s247 = scalar_select %p246, %s21, 1
        %s248 = smul.addr %s247, 72
        %s249 = smul.addr %s248, 4
        %s250 = scalar_lea.vmem %s0, %s249
        %p251 = pneg %p42
        %p252 = pneg %p39
        %p253 = pneg %p63
        %p254 = pneg %p60
        %p255 = pneg %p84
        %p256 = pneg %p81
        %p257 = pneg %p105
        %p258 = pneg %p102
        %p259 = pneg %p126
        %p260 = pneg %p123
        %p261 = pneg %p147
        %p262 = pneg %p144
        %p263 = pneg %p168
        %p264 = pneg %p165
        %p265 = pneg %p194
        %p266 = pneg %p191
        %s267 = sand.u32 %s181, 1
        %s268 = scalar_lea.sflag [#allocation4], %s267
        %s269 = sand.u32 %s181, 1
        %s270 = smul.addr %s269, 64
        %s271 = scalar_lea.vmem [#allocation3], %s270
        %p272 = scmp.lt.s32.totalorder %s21, 1
        %s273 = scalar_select %p272, %s21, 1
        %s274 = smul.addr %s273, 72
        %s275 = smul.addr %s274, 4
        %s276 = scalar_lea.vmem %s0, %s275
        %v278 = vld [vmem:[%s276] sm:$0xf]
        %v279 = vld [vmem:[%s276 + $0x8] sm:$0xf]
        %v280 = vld [vmem:[%s276 + $0x10] sm:$0xf]
        %v281 = vld [vmem:[%s276 + $0x18] sm:$0xf]
        %v282 = vld [vmem:[%s276 + $0x20] sm:$0xf]
        %v283 = vld [vmem:[%s276 + $0x28] sm:$0xf]
        %v284 = vld [vmem:[%s276 + $0x30] sm:$0xf]
        %v285 = vld [vmem:[%s276 + $0x38] sm:$0xf]
        %s286 = scalar_lea.vmem %s276, 72
        %v287 = vld [vmem:[%s286] sm:$0xf]
        %v288 = vld [vmem:[%s286 + $0x8] sm:$0xf]
        %v289 = vld [vmem:[%s286 + $0x10] sm:$0xf]
        %v290 = vld [vmem:[%s286 + $0x18] sm:$0xf]
        %v291 = vld [vmem:[%s286 + $0x20] sm:$0xf]
        %v292 = vld [vmem:[%s286 + $0x28] sm:$0xf]
        %v293 = vld [vmem:[%s286 + $0x30] sm:$0xf]
        %v294 = vld [vmem:[%s286 + $0x38] sm:$0xf]
        %v295 = vld [vmem:[%s276 + $0x4] sm:$0x1]
        %v296 = vld [vmem:[%s276 + $0xc] sm:$0x1]
        %v297 = vld [vmem:[%s276 + $0x14] sm:$0x1]
        %v298 = vld [vmem:[%s276 + $0x1c] sm:$0x1]
        %v299 = vld [vmem:[%s276 + $0x24] sm:$0x1]
        %v300 = vld [vmem:[%s276 + $0x2c] sm:$0x1]
        %v301 = vld [vmem:[%s276 + $0x34] sm:$0x1]
        %v302 = vld [vmem:[%s276 + $0x3c] sm:$0x1]
        %vm303 = vsmask.f32 3328
        %vm304 = vsmask.f32 7440
        %vm305 = vmor %vm303, %vm304
        %v307 = vshrl.u32 %v278, 16
        %v309 = vrot.slane %v307, 4
        %v310 = vshll.u32 %v278, 16
        %v312 = vrot.slane %v310, 5
        %v313 = vor.u32 %v309, %v312
        %v314 = vrot.slane %v313, 4
        %v316 = vshll.u32 %v295, 16
        %v318 = vrot.slane %v316, 5
        %v319 = vsel %vm305, %v314, %v318
        %v321 = vshrl.u32 %v279, 16
        %v323 = vrot.slane %v321, 4
        %v324 = vshll.u32 %v279, 16
        %v326 = vrot.slane %v324, 5
        %v327 = vor.u32 %v323, %v326
        %v328 = vrot.slane %v327, 4
        %v330 = vshll.u32 %v296, 16
        %v332 = vrot.slane %v330, 5
        %v333 = vsel %vm305, %v328, %v332
        %v335 = vshrl.u32 %v280, 16
        %v337 = vrot.slane %v335, 4
        %v338 = vshll.u32 %v280, 16
        %v340 = vrot.slane %v338, 5
        %v341 = vor.u32 %v337, %v340
        %v342 = vrot.slane %v341, 4
        %v344 = vshll.u32 %v297, 16
        %v346 = vrot.slane %v344, 5
        %v347 = vsel %vm305, %v342, %v346
        %v349 = vshrl.u32 %v281, 16
        %v351 = vrot.slane %v349, 4
        %v352 = vshll.u32 %v281, 16
        %v354 = vrot.slane %v352, 5
        %v355 = vor.u32 %v351, %v354
        %v356 = vrot.slane %v355, 4
        %v358 = vshll.u32 %v298, 16
        %v360 = vrot.slane %v358, 5
        %v361 = vsel %vm305, %v356, %v360
        %v363 = vshrl.u32 %v282, 16
        %v365 = vrot.slane %v363, 4
        %v366 = vshll.u32 %v282, 16
        %v368 = vrot.slane %v366, 5
        %v369 = vor.u32 %v365, %v368
        %v370 = vrot.slane %v369, 4
        %v372 = vshll.u32 %v299, 16
        %v374 = vrot.slane %v372, 5
        %v375 = vsel %vm305, %v370, %v374
        %v377 = vshrl.u32 %v283, 16
        %v379 = vrot.slane %v377, 4
        %v380 = vshll.u32 %v283, 16
        %v382 = vrot.slane %v380, 5
        %v383 = vor.u32 %v379, %v382
        %v384 = vrot.slane %v383, 4
        %v386 = vshll.u32 %v300, 16
        %v388 = vrot.slane %v386, 5
        %v389 = vsel %vm305, %v384, %v388
        %v391 = vshrl.u32 %v284, 16
        %v393 = vrot.slane %v391, 4
        %v394 = vshll.u32 %v284, 16
        %v396 = vrot.slane %v394, 5
        %v397 = vor.u32 %v393, %v396
        %v398 = vrot.slane %v397, 4
        %v400 = vshll.u32 %v301, 16
        %v402 = vrot.slane %v400, 5
        %v403 = vsel %vm305, %v398, %v402
        %v405 = vshrl.u32 %v285, 16
        %v407 = vrot.slane %v405, 4
        %v408 = vshll.u32 %v285, 16
        %v410 = vrot.slane %v408, 5
        %v411 = vor.u32 %v407, %v410
        %v412 = vrot.slane %v411, 4
        %v414 = vshll.u32 %v302, 16
        %v416 = vrot.slane %v414, 5
        %v417 = vsel %vm305, %v412, %v416
        %s418 = scalar_lea.vmem %s276, 144
        %v419 = vld [vmem:[%s418] sm:$0xf]
        %v420 = vld [vmem:[%s418 + $0x8] sm:$0xf]
        %v421 = vld [vmem:[%s418 + $0x10] sm:$0xf]
        %v422 = vld [vmem:[%s418 + $0x18] sm:$0xf]
        %v423 = vld [vmem:[%s418 + $0x20] sm:$0xf]
        %v424 = vld [vmem:[%s418 + $0x28] sm:$0xf]
        %v425 = vld [vmem:[%s418 + $0x30] sm:$0xf]
        %v426 = vld [vmem:[%s418 + $0x38] sm:$0xf]
        %s427 = scalar_lea.vmem %s276, 216
        %v428 = vld [vmem:[%s427] sm:$0xf]
        %v429 = vld [vmem:[%s427 + $0x8] sm:$0xf]
        %v430 = vld [vmem:[%s427 + $0x10] sm:$0xf]
        %v431 = vld [vmem:[%s427 + $0x18] sm:$0xf]
        %v432 = vld [vmem:[%s427 + $0x20] sm:$0xf]
        %v433 = vld [vmem:[%s427 + $0x28] sm:$0xf]
        %v434 = vld [vmem:[%s427 + $0x30] sm:$0xf]
        %v435 = vld [vmem:[%s427 + $0x38] sm:$0xf]
        %v436 = vld [vmem:[%s418 + $0x4] sm:$0x1]
        %v437 = vld [vmem:[%s418 + $0xc] sm:$0x1]
        %v438 = vld [vmem:[%s418 + $0x14] sm:$0x1]
        %v439 = vld [vmem:[%s418 + $0x1c] sm:$0x1]
        %v440 = vld [vmem:[%s418 + $0x24] sm:$0x1]
        %v441 = vld [vmem:[%s418 + $0x2c] sm:$0x1]
        %v442 = vld [vmem:[%s418 + $0x34] sm:$0x1]
        %v443 = vld [vmem:[%s418 + $0x3c] sm:$0x1]
        %v445 = vshrl.u32 %v419, 16
        %v447 = vrot.slane %v445, 4
        %v448 = vshll.u32 %v419, 16
        %v450 = vrot.slane %v448, 5
        %v451 = vor.u32 %v447, %v450
        %v452 = vrot.slane %v451, 4
        %v454 = vshll.u32 %v436, 16
        %v456 = vrot.slane %v454, 5
        %v457 = vsel %vm305, %v452, %v456
        %v459 = vshrl.u32 %v420, 16
        %v461 = vrot.slane %v459, 4
        %v462 = vshll.u32 %v420, 16
        %v464 = vrot.slane %v462, 5
        %v465 = vor.u32 %v461, %v464
        %v466 = vrot.slane %v465, 4
        %v468 = vshll.u32 %v437, 16
        %v470 = vrot.slane %v468, 5
        %v471 = vsel %vm305, %v466, %v470
        %v473 = vshrl.u32 %v421, 16
        %v475 = vrot.slane %v473, 4
        %v476 = vshll.u32 %v421, 16
        %v478 = vrot.slane %v476, 5
        %v479 = vor.u32 %v475, %v478
        %v480 = vrot.slane %v479, 4
        %v482 = vshll.u32 %v438, 16
        %v484 = vrot.slane %v482, 5
        %v485 = vsel %vm305, %v480, %v484
        %v487 = vshrl.u32 %v422, 16
        %v489 = vrot.slane %v487, 4
        %v490 = vshll.u32 %v422, 16
        %v492 = vrot.slane %v490, 5
        %v493 = vor.u32 %v489, %v492
        %v494 = vrot.slane %v493, 4
        %v496 = vshll.u32 %v439, 16
        %v498 = vrot.slane %v496, 5
        %v499 = vsel %vm305, %v494, %v498
        %v501 = vshrl.u32 %v423, 16
        %v503 = vrot.slane %v501, 4
        %v504 = vshll.u32 %v423, 16
        %v506 = vrot.slane %v504, 5
        %v507 = vor.u32 %v503, %v506
        %v508 = vrot.slane %v507, 4
        %v510 = vshll.u32 %v440, 16
        %v512 = vrot.slane %v510, 5
        %v513 = vsel %vm305, %v508, %v512
        %v515 = vshrl.u32 %v424, 16
        %v517 = vrot.slane %v515, 4
        %v518 = vshll.u32 %v424, 16
        %v520 = vrot.slane %v518, 5
        %v521 = vor.u32 %v517, %v520
        %v522 = vrot.slane %v521, 4
        %v524 = vshll.u32 %v441, 16
        %v526 = vrot.slane %v524, 5
        %v527 = vsel %vm305, %v522, %v526
        %v529 = vshrl.u32 %v425, 16
        %v531 = vrot.slane %v529, 4
        %v532 = vshll.u32 %v425, 16
        %v534 = vrot.slane %v532, 5
        %v535 = vor.u32 %v531, %v534
        %v536 = vrot.slane %v535, 4
        %v538 = vshll.u32 %v442, 16
        %v540 = vrot.slane %v538, 5
        %v541 = vsel %vm305, %v536, %v540
        %v543 = vshrl.u32 %v426, 16
        %v545 = vrot.slane %v543, 4
        %v546 = vshll.u32 %v426, 16
        %v548 = vrot.slane %v546, 5
        %v549 = vor.u32 %v545, %v548
        %v550 = vrot.slane %v549, 4
        %v552 = vshll.u32 %v443, 16
        %v554 = vrot.slane %v552, 5
        %v555 = vsel %vm305, %v550, %v554
        %s556 = scalar_lea.vmem %s276, 8
        %v557 = vld [vmem:[%s556] sm:$0xf]
        %v558 = vld [vmem:[%s556 + $0x8] sm:$0xf]
        %v559 = vld [vmem:[%s556 + $0x10] sm:$0xf]
        %v560 = vld [vmem:[%s556 + $0x18] sm:$0xf]
        %v561 = vld [vmem:[%s556 + $0x20] sm:$0xf]
        %v562 = vld [vmem:[%s556 + $0x28] sm:$0xf]
        %v563 = vld [vmem:[%s556 + $0x30] sm:$0xf]
        %v564 = vld [vmem:[%s556 + $0x38] sm:$0xf]
        %s565 = scalar_lea.vmem %s276, 80
        %v566 = vld [vmem:[%s565] sm:$0xf]
        %v567 = vld [vmem:[%s565 + $0x8] sm:$0xf]
        %v568 = vld [vmem:[%s565 + $0x10] sm:$0xf]
        %v569 = vld [vmem:[%s565 + $0x18] sm:$0xf]
        %v570 = vld [vmem:[%s565 + $0x20] sm:$0xf]
        %v571 = vld [vmem:[%s565 + $0x28] sm:$0xf]
        %v572 = vld [vmem:[%s565 + $0x30] sm:$0xf]
        %v573 = vld [vmem:[%s565 + $0x38] sm:$0xf]
        %v574 = vld [vmem:[%s556 + $0x4] sm:$0x1]
        %v575 = vld [vmem:[%s556 + $0xc] sm:$0x1]
        %v576 = vld [vmem:[%s556 + $0x14] sm:$0x1]
        %v577 = vld [vmem:[%s556 + $0x1c] sm:$0x1]
        %v578 = vld [vmem:[%s556 + $0x24] sm:$0x1]
        %v579 = vld [vmem:[%s556 + $0x2c] sm:$0x1]
        %v580 = vld [vmem:[%s556 + $0x34] sm:$0x1]
        %v581 = vld [vmem:[%s556 + $0x3c] sm:$0x1]
        %v583 = vshrl.u32 %v557, 16
        %v585 = vrot.slane %v583, 4
        %v586 = vshll.u32 %v557, 16
        %v588 = vrot.slane %v586, 5
        %v589 = vor.u32 %v585, %v588
        %v590 = vrot.slane %v589, 4
        %v592 = vshll.u32 %v574, 16
        %v594 = vrot.slane %v592, 5
        %v595 = vsel %vm305, %v590, %v594
        %v597 = vshrl.u32 %v558, 16
        %v599 = vrot.slane %v597, 4
        %v600 = vshll.u32 %v558, 16
        %v602 = vrot.slane %v600, 5
        %v603 = vor.u32 %v599, %v602
        %v604 = vrot.slane %v603, 4
        %v606 = vshll.u32 %v575, 16
        %v608 = vrot.slane %v606, 5
        %v609 = vsel %vm305, %v604, %v608
        %v611 = vshrl.u32 %v559, 16
        %v613 = vrot.slane %v611, 4
        %v614 = vshll.u32 %v559, 16
        %v616 = vrot.slane %v614, 5
        %v617 = vor.u32 %v613, %v616
        %v618 = vrot.slane %v617, 4
        %v620 = vshll.u32 %v576, 16
        %v622 = vrot.slane %v620, 5
        %v623 = vsel %vm305, %v618, %v622
        %v625 = vshrl.u32 %v560, 16
        %v627 = vrot.slane %v625, 4
        %v628 = vshll.u32 %v560, 16
        %v630 = vrot.slane %v628, 5
        %v631 = vor.u32 %v627, %v630
        %v632 = vrot.slane %v631, 4
        %v634 = vshll.u32 %v577, 16
        %v636 = vrot.slane %v634, 5
        %v637 = vsel %vm305, %v632, %v636
        %v639 = vshrl.u32 %v561, 16
        %v641 = vrot.slane %v639, 4
        %v642 = vshll.u32 %v561, 16
        %v644 = vrot.slane %v642, 5
        %v645 = vor.u32 %v641, %v644
        %v646 = vrot.slane %v645, 4
        %v648 = vshll.u32 %v578, 16
        %v650 = vrot.slane %v648, 5
        %v651 = vsel %vm305, %v646, %v650
        %v653 = vshrl.u32 %v562, 16
        %v655 = vrot.slane %v653, 4
        %v656 = vshll.u32 %v562, 16
        %v658 = vrot.slane %v656, 5
        %v659 = vor.u32 %v655, %v658
        %v660 = vrot.slane %v659, 4
        %v662 = vshll.u32 %v579, 16
        %v664 = vrot.slane %v662, 5
        %v665 = vsel %vm305, %v660, %v664
        %v667 = vshrl.u32 %v563, 16
        %v669 = vrot.slane %v667, 4
        %v670 = vshll.u32 %v563, 16
        %v672 = vrot.slane %v670, 5
        %v673 = vor.u32 %v669, %v672
        %v674 = vrot.slane %v673, 4
        %v676 = vshll.u32 %v580, 16
        %v678 = vrot.slane %v676, 5
        %v679 = vsel %vm305, %v674, %v678
        %v681 = vshrl.u32 %v564, 16
        %v683 = vrot.slane %v681, 4
        %v684 = vshll.u32 %v564, 16
        %v686 = vrot.slane %v684, 5
        %v687 = vor.u32 %v683, %v686
        %v688 = vrot.slane %v687, 4
        %v690 = vshll.u32 %v581, 16
        %v692 = vrot.slane %v690, 5
        %v693 = vsel %vm305, %v688, %v692
        %v702 = vunpack.c.l.b16 %v278
        %v703 = vunpack.c.l.b16 %v279
        %v704 = vunpack.c.l.b16 %v280
        %v705 = vunpack.c.l.b16 %v281
        %v706 = vunpack.c.l.b16 %v282
        %v707 = vunpack.c.l.b16 %v283
        %v708 = vunpack.c.l.b16 %v284
        %v709 = vunpack.c.l.b16 %v285
        %v710 = vpack.c.b16 %v703, %v702
        %v711 = vpack.c.b16 %v705, %v704
        %v712 = vpack.c.b16 %v707, %v706
        %v713 = vpack.c.b16 %v709, %v708
        %v722 = vunpack.c.l.b16 %v287
        %v723 = vunpack.c.l.b16 %v288
        %v724 = vunpack.c.l.b16 %v289
        %v725 = vunpack.c.l.b16 %v290
        %v726 = vunpack.c.l.b16 %v291
        %v727 = vunpack.c.l.b16 %v292
        %v728 = vunpack.c.l.b16 %v293
        %v729 = vunpack.c.l.b16 %v294
        %v730 = vpack.c.b16 %v723, %v722
        %v731 = vpack.c.b16 %v725, %v724
        %v732 = vpack.c.b16 %v727, %v726
        %v733 = vpack.c.b16 %v729, %v728
        %734 = vrot.lane.b32.xlu0 %v730, 8
        %v735 = vpop.permute.xlu0 %734
        %736 = vrot.lane.b32.xlu0 %v731, 8
        %v737 = vpop.permute.xlu0 %736
        %738 = vrot.lane.b32.xlu0 %v732, 8
        %v739 = vpop.permute.xlu0 %738
        %740 = vrot.lane.b32.xlu0 %v733, 8
        %v741 = vpop.permute.xlu0 %740
        %v742 = vunpack.c.l.b16 %v319
        %v743 = vunpack.c.l.b16 %v333
        %v744 = vunpack.c.l.b16 %v347
        %v745 = vunpack.c.l.b16 %v361
        %v746 = vunpack.c.l.b16 %v375
        %v747 = vunpack.c.l.b16 %v389
        %v748 = vunpack.c.l.b16 %v403
        %v749 = vunpack.c.l.b16 %v417
        %v750 = vpack.c.b16 %v743, %v742
        %v751 = vpack.c.b16 %v745, %v744
        %v752 = vpack.c.b16 %v747, %v746
        %v753 = vpack.c.b16 %v749, %v748
        %754 = vrot.lane.b32.xlu0 %v750, 16
        %v755 = vpop.permute.xlu0 %754
        %756 = vrot.lane.b32.xlu0 %v751, 16
        %v757 = vpop.permute.xlu0 %756
        %758 = vrot.lane.b32.xlu0 %v752, 16
        %v759 = vpop.permute.xlu0 %758
        %760 = vrot.lane.b32.xlu0 %v753, 16
        %v761 = vpop.permute.xlu0 %760
        %v770 = vunpack.c.l.b16 %v419
        %v771 = vunpack.c.l.b16 %v420
        %v772 = vunpack.c.l.b16 %v421
        %v773 = vunpack.c.l.b16 %v422
        %v774 = vunpack.c.l.b16 %v423
        %v775 = vunpack.c.l.b16 %v424
        %v776 = vunpack.c.l.b16 %v425
        %v777 = vunpack.c.l.b16 %v426
        %v778 = vpack.c.b16 %v771, %v770
        %v779 = vpack.c.b16 %v773, %v772
        %v780 = vpack.c.b16 %v775, %v774
        %v781 = vpack.c.b16 %v777, %v776
        %782 = vrot.lane.b32.xlu0 %v778, 24
        %v783 = vpop.permute.xlu0 %782
        %784 = vrot.lane.b32.xlu0 %v779, 24
        %v785 = vpop.permute.xlu0 %784
        %786 = vrot.lane.b32.xlu0 %v780, 24
        %v787 = vpop.permute.xlu0 %786
        %788 = vrot.lane.b32.xlu0 %v781, 24
        %v789 = vpop.permute.xlu0 %788
        %v798 = vunpack.c.l.b16 %v428
        %v799 = vunpack.c.l.b16 %v429
        %v800 = vunpack.c.l.b16 %v430
        %v801 = vunpack.c.l.b16 %v431
        %v802 = vunpack.c.l.b16 %v432
        %v803 = vunpack.c.l.b16 %v433
        %v804 = vunpack.c.l.b16 %v434
        %v805 = vunpack.c.l.b16 %v435
        %v806 = vpack.c.b16 %v799, %v798
        %v807 = vpack.c.b16 %v801, %v800
        %v808 = vpack.c.b16 %v803, %v802
        %v809 = vpack.c.b16 %v805, %v804
        %810 = vrot.lane.b32.xlu0 %v806, 32
        %v811 = vpop.permute.xlu0 %810
        %812 = vrot.lane.b32.xlu0 %v807, 32
        %v813 = vpop.permute.xlu0 %812
        %814 = vrot.lane.b32.xlu0 %v808, 32
        %v815 = vpop.permute.xlu0 %814
        %816 = vrot.lane.b32.xlu0 %v809, 32
        %v817 = vpop.permute.xlu0 %816
        %v818 = vunpack.c.l.b16 %v457
        %v819 = vunpack.c.l.b16 %v471
        %v820 = vunpack.c.l.b16 %v485
        %v821 = vunpack.c.l.b16 %v499
        %v822 = vunpack.c.l.b16 %v513
        %v823 = vunpack.c.l.b16 %v527
        %v824 = vunpack.c.l.b16 %v541
        %v825 = vunpack.c.l.b16 %v555
        %v826 = vpack.c.b16 %v819, %v818
        %v827 = vpack.c.b16 %v821, %v820
        %v828 = vpack.c.b16 %v823, %v822
        %v829 = vpack.c.b16 %v825, %v824
        %830 = vrot.lane.b32.xlu0 %v826, 40
        %v831 = vpop.permute.xlu0 %830
        %832 = vrot.lane.b32.xlu0 %v827, 40
        %v833 = vpop.permute.xlu0 %832
        %834 = vrot.lane.b32.xlu0 %v828, 40
        %v835 = vpop.permute.xlu0 %834
        %836 = vrot.lane.b32.xlu0 %v829, 40
        %v837 = vpop.permute.xlu0 %836
        %v846 = vunpack.c.l.b16 %v557
        %v847 = vunpack.c.l.b16 %v558
        %v848 = vunpack.c.l.b16 %v559
        %v849 = vunpack.c.l.b16 %v560
        %v850 = vunpack.c.l.b16 %v561
        %v851 = vunpack.c.l.b16 %v562
        %v852 = vunpack.c.l.b16 %v563
        %v853 = vunpack.c.l.b16 %v564
        %v854 = vpack.c.b16 %v847, %v846
        %v855 = vpack.c.b16 %v849, %v848
        %v856 = vpack.c.b16 %v851, %v850
        %v857 = vpack.c.b16 %v853, %v852
        %858 = vrot.lane.b32.xlu0 %v854, 48
        %v859 = vpop.permute.xlu0 %858
        %860 = vrot.lane.b32.xlu0 %v855, 48
        %v861 = vpop.permute.xlu0 %860
        %862 = vrot.lane.b32.xlu0 %v856, 48
        %v863 = vpop.permute.xlu0 %862
        %864 = vrot.lane.b32.xlu0 %v857, 48
        %v865 = vpop.permute.xlu0 %864
        %v874 = vunpack.c.l.b16 %v566
        %v875 = vunpack.c.l.b16 %v567
        %v876 = vunpack.c.l.b16 %v568
        %v877 = vunpack.c.l.b16 %v569
        %v878 = vunpack.c.l.b16 %v570
        %v879 = vunpack.c.l.b16 %v571
        %v880 = vunpack.c.l.b16 %v572
        %v881 = vunpack.c.l.b16 %v573
        %v882 = vpack.c.b16 %v875, %v874
        %v883 = vpack.c.b16 %v877, %v876
        %v884 = vpack.c.b16 %v879, %v878
        %v885 = vpack.c.b16 %v881, %v880
        %886 = vrot.lane.b32.xlu0 %v882, 56
        %v887 = vpop.permute.xlu0 %886
        %888 = vrot.lane.b32.xlu0 %v883, 56
        %v889 = vpop.permute.xlu0 %888
        %890 = vrot.lane.b32.xlu0 %v884, 56
        %v891 = vpop.permute.xlu0 %890
        %892 = vrot.lane.b32.xlu0 %v885, 56
        %v893 = vpop.permute.xlu0 %892
        %v894 = vunpack.c.l.b16 %v595
        %v895 = vunpack.c.l.b16 %v609
        %v896 = vunpack.c.l.b16 %v623
        %v897 = vunpack.c.l.b16 %v637
        %v898 = vunpack.c.l.b16 %v651
        %v899 = vunpack.c.l.b16 %v665
        %v900 = vunpack.c.l.b16 %v679
        %v901 = vunpack.c.l.b16 %v693
        %v902 = vpack.c.b16 %v895, %v894
        %v903 = vpack.c.b16 %v897, %v896
        %v904 = vpack.c.b16 %v899, %v898
        %v905 = vpack.c.b16 %v901, %v900
        %906 = vrot.lane.b32.xlu0 %v902, 64
        %v907 = vpop.permute.xlu0 %906
        %908 = vrot.lane.b32.xlu0 %v903, 64
        %v909 = vpop.permute.xlu0 %908
        %910 = vrot.lane.b32.xlu0 %v904, 64
        %v911 = vpop.permute.xlu0 %910
        %912 = vrot.lane.b32.xlu0 %v905, 64
        %v913 = vpop.permute.xlu0 %912
        %vm914 = vcmask 64512
        %v917 = vsel %vm914, %v710, %v735
        %v920 = vsel %vm914, %v711, %v737
        %v923 = vsel %vm914, %v712, %v739
        %v926 = vsel %vm914, %v713, %v741
        %vm927 = vcmask 130048
        %v929 = vsel %vm927, %v917, %v755
        %v931 = vsel %vm927, %v920, %v757
        %v933 = vsel %vm927, %v923, %v759
        %v935 = vsel %vm927, %v926, %v761
        %vm936 = vcmask 195584
        %v938 = vsel %vm936, %v929, %v783
        %v940 = vsel %vm936, %v931, %v785
        %v942 = vsel %vm936, %v933, %v787
        %v944 = vsel %vm936, %v935, %v789
        %vm945 = vcmask 261120
        %v947 = vsel %vm945, %v938, %v811
        %v949 = vsel %vm945, %v940, %v813
        %v951 = vsel %vm945, %v942, %v815
        %v953 = vsel %vm945, %v944, %v817
        %vm954 = vcmask 326656
        %v956 = vsel %vm954, %v947, %v831
        %v958 = vsel %vm954, %v949, %v833
        %v960 = vsel %vm954, %v951, %v835
        %v962 = vsel %vm954, %v953, %v837
        %vm963 = vcmask 392192
        %v965 = vsel %vm963, %v956, %v859
        %v967 = vsel %vm963, %v958, %v861
        %v969 = vsel %vm963, %v960, %v863
        %v971 = vsel %vm963, %v962, %v865
        %vm972 = vcmask 457728
        %v974 = vsel %vm972, %v965, %v887
        %v976 = vsel %vm972, %v967, %v889
        %v978 = vsel %vm972, %v969, %v891
        %v980 = vsel %vm972, %v971, %v893
        %vm981 = vcmask 523264
        %v983 = vsel %vm981, %v974, %v907
        %v985 = vsel %vm981, %v976, %v909
        %v987 = vsel %vm981, %v978, %v911
        %v989 = vsel %vm981, %v980, %v913
        %v990 = vld [vmem:[%s1] sm:$0xf]
        %v991 = vld [vmem:[%s1 + $0x4] sm:$0xf]
        %v992 = vld [vmem:[%s1 + $0x8] sm:$0xf]
        %v993 = vld [vmem:[%s1 + $0xc] sm:$0xf]
        %v994 = vld [vmem:[%s1 + $0x10] sm:$0xf]
        %v995 = vld [vmem:[%s1 + $0x14] sm:$0xf]
        %v996 = vld [vmem:[%s1 + $0x18] sm:$0xf]
        %v997 = vld [vmem:[%s1 + $0x1c] sm:$0xf]
        %v998 = vld [vmem:[%s1 + $0x20] sm:$0xf]
        %v1008 = vunpack.c.l.b16 %v990
        %v1009 = vunpack.c.l.b16 %v991
        %v1010 = vunpack.c.l.b16 %v992
        %v1011 = vunpack.c.l.b16 %v993
        %v1012 = vunpack.c.l.b16 %v994
        %v1013 = vunpack.c.l.b16 %v995
        %v1014 = vunpack.c.l.b16 %v996
        %v1015 = vunpack.c.l.b16 %v997
        %v1016 = vunpack.c.l.b16 %v998
        %v1017 = vpack.c.b16 %v1009, %v1008
        %v1018 = vpack.c.b16 %v1011, %v1010
        %v1019 = vpack.c.b16 %v1013, %v1012
        %v1020 = vpack.c.b16 %v1015, %v1014
        %v1021 = vpack.c.b16 %v1016, %v1016
        %vm1026 = vcmask 588800
        %v1027 = vsel %vm1026, %v983, 0
        %v1029 = vsel %vm1026, %v985, 0
        %v1031 = vsel %vm1026, %v987, 0
        %v1033 = vsel %vm1026, %v989, 0
        %vm1035 = vcmask 1043456
        %v1037 = vsel %vm1035, %v1021, 0
        %1039 = vmatprep.subr.bf16.mxu0 0
        %1040 = vmatpush1.bf16.msra.mxu0 0
        %1041 = vmatprep.subr.bf16.mxu0 0
        %1042 = vmatpush1.bf16.msra.mxu0 0
        %1043 = vmatprep.subr.bf16.mxu0 0
        %1044 = vmatpush1.bf16.msra.mxu0 0
        %1045 = vmatprep.subr.bf16.mxu0 0
        %1046 = vmatpush1.bf16.msra.mxu0 %v1037
        %1047 = vmatprep.subr.bf16.mxu0 0
        %1048 = vmatpush1.bf16.msra.mxu0 %v1020
        %1049 = vmatprep.subr.bf16.mxu0 0
        %1050 = vmatpush1.bf16.msra.mxu0 %v1019
        %1051 = vmatprep.subr.bf16.mxu0 0
        %1052 = vmatpush1.bf16.msra.mxu0 %v1018
        %1053 = vmatprep.subr.bf16.mxu0 0
        %1054 = vmatpush1.bf16.msra.mxu0 %v1017
        %1055 = vmatprep.subr.bf16.mxu0 0
        %1056 = vmatpush2.bf16.msra.mxu0 0
        %1057 = vmatprep.subr.bf16.mxu0 0
        %1058 = vmatpush2.bf16.msra.mxu0 0
        %1059 = vmatprep.subr.bf16.mxu0 0
        %1060 = vmatpush2.bf16.msra.mxu0 0
        %1061 = vmatprep.subr.bf16.mxu0 0
        %1062 = vmatpush2.bf16.msra.mxu0 0
        %1063 = vmatprep.subr.bf16.mxu0 0
        %1064 = vmatpush2.bf16.msra.mxu0 0
        %1065 = vmatprep.subr.bf16.mxu0 0
        %1066 = vmatpush2.bf16.msra.mxu0 0
        %1067 = vmatprep.subr.bf16.mxu0 0
        %1068 = vmatpush2.bf16.msra.mxu0 0
        %1069 = vmatprep.subr.bf16.mxu0 0
        %1070 = vmatpush2.bf16.msra.mxu0 0
        %1071 = vmatprep.mubr.bf16.mxu0 0
        %1072 = vmatmul.mubr.bf16.gmra.mxu0 %v1027
        %v1073 = vpop.f32.mrf.mxu0
        %v1074 = vadd.f32 0.0, %v1073
        %v1075 = vpop.f32.mrf.mxu0
        %v1076 = vpop.f32.mrf.mxu0
        %v1077 = vadd.f32 0.0, %v1076
        %v1078 = vpop.f32.mrf.mxu0
        %1079 = vmatprep.mubr.bf16.mxu0 0
        %1080 = vmatmul.mubr.bf16.gmra.mxu0 %v1029
        %v1081 = vpop.f32.mrf.mxu0
        %v1082 = vadd.f32 0.0, %v1081
        %v1083 = vpop.f32.mrf.mxu0
        %v1084 = vpop.f32.mrf.mxu0
        %v1085 = vadd.f32 0.0, %v1084
        %v1086 = vpop.f32.mrf.mxu0
        %1087 = vmatprep.mubr.bf16.mxu0 0
        %1088 = vmatmul.mubr.bf16.gmra.mxu0 %v1031
        %v1089 = vpop.f32.mrf.mxu0
        %v1090 = vadd.f32 0.0, %v1089
        %v1091 = vpop.f32.mrf.mxu0
        %v1092 = vpop.f32.mrf.mxu0
        %v1093 = vadd.f32 0.0, %v1092
        %v1094 = vpop.f32.mrf.mxu0
        %1095 = vmatprep.mubr.bf16.mxu0 0
        %1096 = vmatmul.mubr.bf16.gmra.mxu0 %v1033
        %v1097 = vpop.f32.mrf.mxu0
        %v1098 = vadd.f32 0.0, %v1097
        %v1099 = vpop.f32.mrf.mxu0
        %v1100 = vpop.f32.mrf.mxu0
        %v1101 = vadd.f32 0.0, %v1100
        %v1102 = vpop.f32.mrf.mxu0
        %1103 = vdwg.mxu0
        %v1104 = vld [vmem:[%s2] sm:$0x1]
        %v1106 = vlaneseq
        %v1107 = vshrl.u32 %v1106, 7
        %v1108 = vsub.s32 0, %v1107
        %v1109 = vrot.slane %v1104, %v1108
        %v1111 = vmul.f32 %v1074, %v1109
        %v1112 = vmul.f32 %v1077, %v1109
        %v1113 = vmul.f32 %v1082, %v1109
        %v1114 = vmul.f32 %v1085, %v1109
        %v1115 = vmul.f32 %v1090, %v1109
        %v1116 = vmul.f32 %v1093, %v1109
        %v1117 = vmul.f32 %v1098, %v1109
        %v1118 = vmul.f32 %v1101, %v1109
        %v1119 = vld [vmem:[%s3] sm:$0x1]
        %v1121 = vlaneseq
        %v1122 = vshrl.u32 %v1121, 7
        %v1123 = vsub.s32 0, %v1122
        %v1124 = vrot.slane %v1119, %v1123
        %v1126 = vadd.f32 %v1111, %v1124
        %v1127 = vadd.f32 %v1112, %v1124
        %v1128 = vadd.f32 %v1113, %v1124
        %v1129 = vadd.f32 %v1114, %v1124
        %v1130 = vadd.f32 %v1115, %v1124
        %v1131 = vadd.f32 %v1116, %v1124
        %v1132 = vadd.f32 %v1117, %v1124
        %v1133 = vadd.f32 %v1118, %v1124
        %v1134 = vmax.f32 %v1126, 0.0
        %v1135 = vmax.f32 %v1127, 0.0
        %v1136 = vmax.f32 %v1128, 0.0
        %v1137 = vmax.f32 %v1129, 0.0
        %v1138 = vmax.f32 %v1130, 0.0
        %v1139 = vmax.f32 %v1131, 0.0
        %v1140 = vmax.f32 %v1132, 0.0
        %v1141 = vmax.f32 %v1133, 0.0
        %vm1142 = vcmask 125952
        %1143 = vst.msk [vmem:[#allocation2] sm:$0xf] %vm1142, 0
        %1144 = vst.msk [vmem:[#allocation2 + $0x4] sm:$0xf] %vm1142, 0
        %s1145 = scalar_lea.vmem [#allocation2], 72
        %1146 = vst.msk [vmem:[%s1145] sm:$0xf] %vm1142, 0
        %1147 = vst.msk [vmem:[%s1145 + $0x4] sm:$0xf] %vm1142, 0
        %s1148 = scalar_lea.vmem [#allocation2], 8
        %vm1149 = vcmask 122880
        %vm1150 = vsmask.f32 256
        %vm1151 = vmand %vm1149, %vm1150
        %v1152 = vld [vmem:[%s1148] sm:$0x1]
        %v1153 = vsel %vm1151, 0, %v1152
        %1154 = vst [vmem:[%s1148] sm:$0x1] %v1153
        %v1155 = vld [vmem:[%s1148 + $0x8] sm:$0x1]
        %v1156 = vsel %vm1151, 0, %v1155
        %1157 = vst [vmem:[%s1148 + $0x8] sm:$0x1] %v1156
        %v1158 = vld [vmem:[%s1148 + $0x10] sm:$0x1]
        %v1159 = vsel %vm1151, 0, %v1158
        %1160 = vst [vmem:[%s1148 + $0x10] sm:$0x1] %v1159
        %v1161 = vld [vmem:[%s1148 + $0x18] sm:$0x1]
        %v1162 = vsel %vm1151, 0, %v1161
        %1163 = vst [vmem:[%s1148 + $0x18] sm:$0x1] %v1162
        %v1164 = vld [vmem:[%s1148 + $0x20] sm:$0x1]
        %v1165 = vsel %vm1151, 0, %v1164
        %1166 = vst [vmem:[%s1148 + $0x20] sm:$0x1] %v1165
        %v1167 = vld [vmem:[%s1148 + $0x28] sm:$0x1]
        %v1168 = vsel %vm1151, 0, %v1167
        %1169 = vst [vmem:[%s1148 + $0x28] sm:$0x1] %v1168
        %v1170 = vld [vmem:[%s1148 + $0x30] sm:$0x1]
        %v1171 = vsel %vm1151, 0, %v1170
        %1172 = vst [vmem:[%s1148 + $0x30] sm:$0x1] %v1171
        %v1173 = vld [vmem:[%s1148 + $0x38] sm:$0x1]
        %v1174 = vsel %vm1151, 0, %v1173
        %1175 = vst [vmem:[%s1148 + $0x38] sm:$0x1] %v1174
        %vm1176 = vsmask.f32 7938
        %vm1177 = vmand %vm1149, %vm1176
        %v1178 = vld [vmem:[%s1148 + $0x4] sm:$0x1]
        %v1179 = vsel %vm1177, 0, %v1178
        %1180 = vst [vmem:[%s1148 + $0x4] sm:$0x1] %v1179
        %v1181 = vld [vmem:[%s1148 + $0xc] sm:$0x1]
        %v1182 = vsel %vm1177, 0, %v1181
        %1183 = vst [vmem:[%s1148 + $0xc] sm:$0x1] %v1182
        %v1184 = vld [vmem:[%s1148 + $0x14] sm:$0x1]
        %v1185 = vsel %vm1177, 0, %v1184
        %1186 = vst [vmem:[%s1148 + $0x14] sm:$0x1] %v1185
        %v1187 = vld [vmem:[%s1148 + $0x1c] sm:$0x1]
        %v1188 = vsel %vm1177, 0, %v1187
        %1189 = vst [vmem:[%s1148 + $0x1c] sm:$0x1] %v1188
        %v1190 = vld [vmem:[%s1148 + $0x24] sm:$0x1]
        %v1191 = vsel %vm1177, 0, %v1190
        %1192 = vst [vmem:[%s1148 + $0x24] sm:$0x1] %v1191
        %v1193 = vld [vmem:[%s1148 + $0x2c] sm:$0x1]
        %v1194 = vsel %vm1177, 0, %v1193
        %1195 = vst [vmem:[%s1148 + $0x2c] sm:$0x1] %v1194
        %v1196 = vld [vmem:[%s1148 + $0x34] sm:$0x1]
        %v1197 = vsel %vm1177, 0, %v1196
        %1198 = vst [vmem:[%s1148 + $0x34] sm:$0x1] %v1197
        %v1199 = vld [vmem:[%s1148 + $0x3c] sm:$0x1]
        %v1200 = vsel %vm1177, 0, %v1199
        %1201 = vst [vmem:[%s1148 + $0x3c] sm:$0x1] %v1200
        %v1202 = vpack.c.bf16 %v1134, %v1134
        %v1203 = vpack.c.bf16 %v1135, %v1135
        %v1204 = vpack.c.bf16 %v1136, %v1136
        %v1205 = vpack.c.bf16 %v1137, %v1137
        %v1206 = vpack.c.bf16 %v1138, %v1138
        %v1207 = vpack.c.bf16 %v1139, %v1139
        %v1208 = vpack.c.bf16 %v1140, %v1140
        %v1209 = vpack.c.bf16 %v1141, %v1141
        %v1218 = vunpack.c.l.b16 %v1202
        %v1219 = vunpack.c.l.b16 %v1203
        %v1220 = vunpack.c.l.b16 %v1204
        %v1221 = vunpack.c.l.b16 %v1205
        %v1222 = vunpack.c.l.b16 %v1206
        %v1223 = vunpack.c.l.b16 %v1207
        %v1224 = vunpack.c.l.b16 %v1208
        %v1225 = vunpack.c.l.b16 %v1209
        %v1226 = vpack.c.b16 %v1218, %v1218
        %v1227 = vpack.c.b16 %v1219, %v1219
        %v1228 = vpack.c.b16 %v1220, %v1220
        %v1229 = vpack.c.b16 %v1221, %v1221
        %v1230 = vpack.c.b16 %v1222, %v1222
        %v1231 = vpack.c.b16 %v1223, %v1223
        %v1232 = vpack.c.b16 %v1224, %v1224
        %v1233 = vpack.c.b16 %v1225, %v1225
        %v1235 = vshrl.u32 %v1226, 16
        %v1237 = vrot.slane %v1235, 7
        %v1238 = vshll.u32 %v1226, 16
        %v1240 = vor.u32 %v1237, %v1238
        %v1241 = vrot.slane %v1237, 4
        %v1243 = vshrl.u32 %v1227, 16
        %v1245 = vrot.slane %v1243, 7
        %v1246 = vshll.u32 %v1227, 16
        %v1248 = vor.u32 %v1245, %v1246
        %v1249 = vrot.slane %v1245, 4
        %v1251 = vshrl.u32 %v1228, 16
        %v1253 = vrot.slane %v1251, 7
        %v1254 = vshll.u32 %v1228, 16
        %v1256 = vor.u32 %v1253, %v1254
        %v1257 = vrot.slane %v1253, 4
        %v1259 = vshrl.u32 %v1229, 16
        %v1261 = vrot.slane %v1259, 7
        %v1262 = vshll.u32 %v1229, 16
        %v1264 = vor.u32 %v1261, %v1262
        %v1265 = vrot.slane %v1261, 4
        %v1267 = vshrl.u32 %v1230, 16
        %v1269 = vrot.slane %v1267, 7
        %v1270 = vshll.u32 %v1230, 16
        %v1272 = vor.u32 %v1269, %v1270
        %v1273 = vrot.slane %v1269, 4
        %v1275 = vshrl.u32 %v1231, 16
        %v1277 = vrot.slane %v1275, 7
        %v1278 = vshll.u32 %v1231, 16
        %v1280 = vor.u32 %v1277, %v1278
        %v1281 = vrot.slane %v1277, 4
        %v1283 = vshrl.u32 %v1232, 16
        %v1285 = vrot.slane %v1283, 7
        %v1286 = vshll.u32 %v1232, 16
        %v1288 = vor.u32 %v1285, %v1286
        %v1289 = vrot.slane %v1285, 4
        %v1291 = vshrl.u32 %v1233, 16
        %v1293 = vrot.slane %v1291, 7
        %v1294 = vshll.u32 %v1233, 16
        %v1296 = vor.u32 %v1293, %v1294
        %v1297 = vrot.slane %v1293, 4
        %vm1314 = vcmask 125952
        %vm1315 = vmand %vm1314, %vm1176
        %v1316 = vld [vmem:[%s1148] sm:$0xf]
        %v1317 = vsel %vm1315, %v1240, %v1316
        %1318 = vst [vmem:[%s1148] sm:$0xf] %v1317
        %v1319 = vld [vmem:[%s1148 + $0x4] sm:$0x1]
        %v1320 = vsel %vm1151, %v1241, %v1319
        %1321 = vst [vmem:[%s1148 + $0x4] sm:$0x1] %v1320
        %v1322 = vld [vmem:[%s1148 + $0x8] sm:$0xf]
        %v1323 = vsel %vm1315, %v1248, %v1322
        %1324 = vst [vmem:[%s1148 + $0x8] sm:$0xf] %v1323
        %v1325 = vld [vmem:[%s1148 + $0xc] sm:$0x1]
        %v1326 = vsel %vm1151, %v1249, %v1325
        %1327 = vst [vmem:[%s1148 + $0xc] sm:$0x1] %v1326
        %v1328 = vld [vmem:[%s1148 + $0x10] sm:$0xf]
        %v1329 = vsel %vm1315, %v1256, %v1328
        %1330 = vst [vmem:[%s1148 + $0x10] sm:$0xf] %v1329
        %v1331 = vld [vmem:[%s1148 + $0x14] sm:$0x1]
        %v1332 = vsel %vm1151, %v1257, %v1331
        %1333 = vst [vmem:[%s1148 + $0x14] sm:$0x1] %v1332
        %v1334 = vld [vmem:[%s1148 + $0x18] sm:$0xf]
        %v1335 = vsel %vm1315, %v1264, %v1334
        %1336 = vst [vmem:[%s1148 + $0x18] sm:$0xf] %v1335
        %v1337 = vld [vmem:[%s1148 + $0x1c] sm:$0x1]
        %v1338 = vsel %vm1151, %v1265, %v1337
        %1339 = vst [vmem:[%s1148 + $0x1c] sm:$0x1] %v1338
        %v1340 = vld [vmem:[%s1148 + $0x20] sm:$0xf]
        %v1341 = vsel %vm1315, %v1272, %v1340
        %1342 = vst [vmem:[%s1148 + $0x20] sm:$0xf] %v1341
        %v1343 = vld [vmem:[%s1148 + $0x24] sm:$0x1]
        %v1344 = vsel %vm1151, %v1273, %v1343
        %1345 = vst [vmem:[%s1148 + $0x24] sm:$0x1] %v1344
        %v1346 = vld [vmem:[%s1148 + $0x28] sm:$0xf]
        %v1347 = vsel %vm1315, %v1280, %v1346
        %1348 = vst [vmem:[%s1148 + $0x28] sm:$0xf] %v1347
        %v1349 = vld [vmem:[%s1148 + $0x2c] sm:$0x1]
        %v1350 = vsel %vm1151, %v1281, %v1349
        %1351 = vst [vmem:[%s1148 + $0x2c] sm:$0x1] %v1350
        %v1352 = vld [vmem:[%s1148 + $0x30] sm:$0xf]
        %v1353 = vsel %vm1315, %v1288, %v1352
        %1354 = vst [vmem:[%s1148 + $0x30] sm:$0xf] %v1353
        %v1355 = vld [vmem:[%s1148 + $0x34] sm:$0x1]
        %v1356 = vsel %vm1151, %v1289, %v1355
        %1357 = vst [vmem:[%s1148 + $0x34] sm:$0x1] %v1356
        %v1358 = vld [vmem:[%s1148 + $0x38] sm:$0xf]
        %v1359 = vsel %vm1315, %v1296, %v1358
        %1360 = vst [vmem:[%s1148 + $0x38] sm:$0xf] %v1359
        %v1361 = vld [vmem:[%s1148 + $0x3c] sm:$0x1]
        %v1362 = vsel %vm1151, %v1297, %v1361
        %1363 = vst [vmem:[%s1148 + $0x3c] sm:$0x1] %v1362
        %v1364 = vld [vmem:[#allocation2] sm:$0xf]
        %v1365 = vld [vmem:[#allocation2 + $0x8] sm:$0xf]
        %v1366 = vld [vmem:[#allocation2 + $0x10] sm:$0xf]
        %v1367 = vld [vmem:[#allocation2 + $0x18] sm:$0xf]
        %v1368 = vld [vmem:[#allocation2 + $0x20] sm:$0xf]
        %v1369 = vld [vmem:[#allocation2 + $0x28] sm:$0xf]
        %v1370 = vld [vmem:[#allocation2 + $0x30] sm:$0xf]
        %v1371 = vld [vmem:[#allocation2 + $0x38] sm:$0xf]
        %v1372 = vld [vmem:[#allocation2 + $0x4] sm:$0x1]
        %v1373 = vld [vmem:[#allocation2 + $0xc] sm:$0x1]
        %v1374 = vld [vmem:[#allocation2 + $0x14] sm:$0x1]
        %v1375 = vld [vmem:[#allocation2 + $0x1c] sm:$0x1]
        %v1376 = vld [vmem:[#allocation2 + $0x24] sm:$0x1]
        %v1377 = vld [vmem:[#allocation2 + $0x2c] sm:$0x1]
        %v1378 = vld [vmem:[#allocation2 + $0x34] sm:$0x1]
        %v1379 = vld [vmem:[#allocation2 + $0x3c] sm:$0x1]
        %v1381 = vshrl.u32 %v1364, 16
        %v1383 = vrot.slane %v1381, 4
        %v1384 = vshll.u32 %v1364, 16
        %v1386 = vrot.slane %v1384, 5
        %v1387 = vor.u32 %v1383, %v1386
        %v1388 = vrot.slane %v1387, 4
        %v1390 = vshll.u32 %v1372, 16
        %v1392 = vrot.slane %v1390, 5
        %v1393 = vsel %vm305, %v1388, %v1392
        %v1395 = vshrl.u32 %v1365, 16
        %v1397 = vrot.slane %v1395, 4
        %v1398 = vshll.u32 %v1365, 16
        %v1400 = vrot.slane %v1398, 5
        %v1401 = vor.u32 %v1397, %v1400
        %v1402 = vrot.slane %v1401, 4
        %v1404 = vshll.u32 %v1373, 16
        %v1406 = vrot.slane %v1404, 5
        %v1407 = vsel %vm305, %v1402, %v1406
        %v1409 = vshrl.u32 %v1366, 16
        %v1411 = vrot.slane %v1409, 4
        %v1412 = vshll.u32 %v1366, 16
        %v1414 = vrot.slane %v1412, 5
        %v1415 = vor.u32 %v1411, %v1414
        %v1416 = vrot.slane %v1415, 4
        %v1418 = vshll.u32 %v1374, 16
        %v1420 = vrot.slane %v1418, 5
        %v1421 = vsel %vm305, %v1416, %v1420
        %v1423 = vshrl.u32 %v1367, 16
        %v1425 = vrot.slane %v1423, 4
        %v1426 = vshll.u32 %v1367, 16
        %v1428 = vrot.slane %v1426, 5
        %v1429 = vor.u32 %v1425, %v1428
        %v1430 = vrot.slane %v1429, 4
        %v1432 = vshll.u32 %v1375, 16
        %v1434 = vrot.slane %v1432, 5
        %v1435 = vsel %vm305, %v1430, %v1434
        %v1437 = vshrl.u32 %v1368, 16
        %v1439 = vrot.slane %v1437, 4
        %v1440 = vshll.u32 %v1368, 16
        %v1442 = vrot.slane %v1440, 5
        %v1443 = vor.u32 %v1439, %v1442
        %v1444 = vrot.slane %v1443, 4
        %v1446 = vshll.u32 %v1376, 16
        %v1448 = vrot.slane %v1446, 5
        %v1449 = vsel %vm305, %v1444, %v1448
        %v1451 = vshrl.u32 %v1369, 16
        %v1453 = vrot.slane %v1451, 4
        %v1454 = vshll.u32 %v1369, 16
        %v1456 = vrot.slane %v1454, 5
        %v1457 = vor.u32 %v1453, %v1456
        %v1458 = vrot.slane %v1457, 4
        %v1460 = vshll.u32 %v1377, 16
        %v1462 = vrot.slane %v1460, 5
        %v1463 = vsel %vm305, %v1458, %v1462
        %v1465 = vshrl.u32 %v1370, 16
        %v1467 = vrot.slane %v1465, 4
        %v1468 = vshll.u32 %v1370, 16
        %v1470 = vrot.slane %v1468, 5
        %v1471 = vor.u32 %v1467, %v1470
        %v1472 = vrot.slane %v1471, 4
        %v1474 = vshll.u32 %v1378, 16
        %v1476 = vrot.slane %v1474, 5
        %v1477 = vsel %vm305, %v1472, %v1476
        %v1479 = vshrl.u32 %v1371, 16
        %v1481 = vrot.slane %v1479, 4
        %v1482 = vshll.u32 %v1371, 16
        %v1484 = vrot.slane %v1482, 5
        %v1485 = vor.u32 %v1481, %v1484
        %v1486 = vrot.slane %v1485, 4
        %v1488 = vshll.u32 %v1379, 16
        %v1490 = vrot.slane %v1488, 5
        %v1491 = vsel %vm305, %v1486, %v1490
        %v1492 = vld [vmem:[#allocation2] sm:$0xe]
        %v1493 = vld [vmem:[#allocation2 + $0x8] sm:$0xe]
        %v1494 = vld [vmem:[#allocation2 + $0x10] sm:$0xe]
        %v1495 = vld [vmem:[#allocation2 + $0x18] sm:$0xe]
        %v1496 = vld [vmem:[#allocation2 + $0x20] sm:$0xe]
        %v1497 = vld [vmem:[#allocation2 + $0x28] sm:$0xe]
        %v1498 = vld [vmem:[#allocation2 + $0x30] sm:$0xe]
        %v1499 = vld [vmem:[#allocation2 + $0x38] sm:$0xe]
        %vm1516 = vcmask 1042432
        %vm1517 = vcmask 1046532
        %vm1518 = vmor %vm1516, %vm1517
        %v1519 = vrot.slane %v1492, 5
        %v1520 = vrot.slane %v1519, 4
        %v1521 = vrot.slane %v1372, 5
        %v1522 = vsel %vm1518, %v1520, %v1521
        %v1523 = vrot.slane %v1493, 5
        %v1524 = vrot.slane %v1523, 4
        %v1525 = vrot.slane %v1373, 5
        %v1526 = vsel %vm1518, %v1524, %v1525
        %v1527 = vrot.slane %v1494, 5
        %v1528 = vrot.slane %v1527, 4
        %v1529 = vrot.slane %v1374, 5
        %v1530 = vsel %vm1518, %v1528, %v1529
        %v1531 = vrot.slane %v1495, 5
        %v1532 = vrot.slane %v1531, 4
        %v1533 = vrot.slane %v1375, 5
        %v1534 = vsel %vm1518, %v1532, %v1533
        %v1535 = vrot.slane %v1496, 5
        %v1536 = vrot.slane %v1535, 4
        %v1537 = vrot.slane %v1376, 5
        %v1538 = vsel %vm1518, %v1536, %v1537
        %v1539 = vrot.slane %v1497, 5
        %v1540 = vrot.slane %v1539, 4
        %v1541 = vrot.slane %v1377, 5
        %v1542 = vsel %vm1518, %v1540, %v1541
        %v1543 = vrot.slane %v1498, 5
        %v1544 = vrot.slane %v1543, 4
        %v1545 = vrot.slane %v1378, 5
        %v1546 = vsel %vm1518, %v1544, %v1545
        %v1547 = vrot.slane %v1499, 5
        %v1548 = vrot.slane %v1547, 4
        %v1549 = vrot.slane %v1379, 5
        %v1550 = vsel %vm1518, %v1548, %v1549
        %v1551 = vld [vmem:[%s1148] sm:$0xf]
        %v1552 = vld [vmem:[%s1148 + $0x8] sm:$0xf]
        %v1553 = vld [vmem:[%s1148 + $0x10] sm:$0xf]
        %v1554 = vld [vmem:[%s1148 + $0x18] sm:$0xf]
        %v1555 = vld [vmem:[%s1148 + $0x20] sm:$0xf]
        %v1556 = vld [vmem:[%s1148 + $0x28] sm:$0xf]
        %v1557 = vld [vmem:[%s1148 + $0x30] sm:$0xf]
        %v1558 = vld [vmem:[%s1148 + $0x38] sm:$0xf]
        %v1559 = vld [vmem:[%s1148 + $0x4] sm:$0x1]
        %v1560 = vld [vmem:[%s1148 + $0xc] sm:$0x1]
        %v1561 = vld [vmem:[%s1148 + $0x14] sm:$0x1]
        %v1562 = vld [vmem:[%s1148 + $0x1c] sm:$0x1]
        %v1563 = vld [vmem:[%s1148 + $0x24] sm:$0x1]
        %v1564 = vld [vmem:[%s1148 + $0x2c] sm:$0x1]
        %v1565 = vld [vmem:[%s1148 + $0x34] sm:$0x1]
        %v1566 = vld [vmem:[%s1148 + $0x3c] sm:$0x1]
        %v1568 = vshrl.u32 %v1551, 16
        %v1570 = vrot.slane %v1568, 4
        %v1571 = vshll.u32 %v1551, 16
        %v1573 = vrot.slane %v1571, 5
        %v1574 = vor.u32 %v1570, %v1573
        %v1575 = vrot.slane %v1574, 4
        %v1577 = vshll.u32 %v1559, 16
        %v1579 = vrot.slane %v1577, 5
        %v1580 = vsel %vm305, %v1575, %v1579
        %v1582 = vshrl.u32 %v1552, 16
        %v1584 = vrot.slane %v1582, 4
        %v1585 = vshll.u32 %v1552, 16
        %v1587 = vrot.slane %v1585, 5
        %v1588 = vor.u32 %v1584, %v1587
        %v1589 = vrot.slane %v1588, 4
        %v1591 = vshll.u32 %v1560, 16
        %v1593 = vrot.slane %v1591, 5
        %v1594 = vsel %vm305, %v1589, %v1593
        %v1596 = vshrl.u32 %v1553, 16
        %v1598 = vrot.slane %v1596, 4
        %v1599 = vshll.u32 %v1553, 16
        %v1601 = vrot.slane %v1599, 5
        %v1602 = vor.u32 %v1598, %v1601
        %v1603 = vrot.slane %v1602, 4
        %v1605 = vshll.u32 %v1561, 16
        %v1607 = vrot.slane %v1605, 5
        %v1608 = vsel %vm305, %v1603, %v1607
        %v1610 = vshrl.u32 %v1554, 16
        %v1612 = vrot.slane %v1610, 4
        %v1613 = vshll.u32 %v1554, 16
        %v1615 = vrot.slane %v1613, 5
        %v1616 = vor.u32 %v1612, %v1615
        %v1617 = vrot.slane %v1616, 4
        %v1619 = vshll.u32 %v1562, 16
        %v1621 = vrot.slane %v1619, 5
        %v1622 = vsel %vm305, %v1617, %v1621
        %v1624 = vshrl.u32 %v1555, 16
        %v1626 = vrot.slane %v1624, 4
        %v1627 = vshll.u32 %v1555, 16
        %v1629 = vrot.slane %v1627, 5
        %v1630 = vor.u32 %v1626, %v1629
        %v1631 = vrot.slane %v1630, 4
        %v1633 = vshll.u32 %v1563, 16
        %v1635 = vrot.slane %v1633, 5
        %v1636 = vsel %vm305, %v1631, %v1635
        %v1638 = vshrl.u32 %v1556, 16
        %v1640 = vrot.slane %v1638, 4
        %v1641 = vshll.u32 %v1556, 16
        %v1643 = vrot.slane %v1641, 5
        %v1644 = vor.u32 %v1640, %v1643
        %v1645 = vrot.slane %v1644, 4
        %v1647 = vshll.u32 %v1564, 16
        %v1649 = vrot.slane %v1647, 5
        %v1650 = vsel %vm305, %v1645, %v1649
        %v1652 = vshrl.u32 %v1557, 16
        %v1654 = vrot.slane %v1652, 4
        %v1655 = vshll.u32 %v1557, 16
        %v1657 = vrot.slane %v1655, 5
        %v1658 = vor.u32 %v1654, %v1657
        %v1659 = vrot.slane %v1658, 4
        %v1661 = vshll.u32 %v1565, 16
        %v1663 = vrot.slane %v1661, 5
        %v1664 = vsel %vm305, %v1659, %v1663
        %v1666 = vshrl.u32 %v1558, 16
        %v1668 = vrot.slane %v1666, 4
        %v1669 = vshll.u32 %v1558, 16
        %v1671 = vrot.slane %v1669, 5
        %v1672 = vor.u32 %v1668, %v1671
        %v1673 = vrot.slane %v1672, 4
        %v1675 = vshll.u32 %v1566, 16
        %v1677 = vrot.slane %v1675, 5
        %v1678 = vsel %vm305, %v1673, %v1677
        %v1679 = vld [vmem:[%s1148] sm:$0xe]
        %v1680 = vld [vmem:[%s1148 + $0x8] sm:$0xe]
        %v1681 = vld [vmem:[%s1148 + $0x10] sm:$0xe]
        %v1682 = vld [vmem:[%s1148 + $0x18] sm:$0xe]
        %v1683 = vld [vmem:[%s1148 + $0x20] sm:$0xe]
        %v1684 = vld [vmem:[%s1148 + $0x28] sm:$0xe]
        %v1685 = vld [vmem:[%s1148 + $0x30] sm:$0xe]
        %v1686 = vld [vmem:[%s1148 + $0x38] sm:$0xe]
        %v1703 = vrot.slane %v1679, 5
        %v1704 = vrot.slane %v1703, 4
        %v1705 = vrot.slane %v1559, 5
        %v1706 = vsel %vm1518, %v1704, %v1705
        %v1707 = vrot.slane %v1680, 5
        %v1708 = vrot.slane %v1707, 4
        %v1709 = vrot.slane %v1560, 5
        %v1710 = vsel %vm1518, %v1708, %v1709
        %v1711 = vrot.slane %v1681, 5
        %v1712 = vrot.slane %v1711, 4
        %v1713 = vrot.slane %v1561, 5
        %v1714 = vsel %vm1518, %v1712, %v1713
        %v1715 = vrot.slane %v1682, 5
        %v1716 = vrot.slane %v1715, 4
        %v1717 = vrot.slane %v1562, 5
        %v1718 = vsel %vm1518, %v1716, %v1717
        %v1719 = vrot.slane %v1683, 5
        %v1720 = vrot.slane %v1719, 4
        %v1721 = vrot.slane %v1563, 5
        %v1722 = vsel %vm1518, %v1720, %v1721
        %v1723 = vrot.slane %v1684, 5
        %v1724 = vrot.slane %v1723, 4
        %v1725 = vrot.slane %v1564, 5
        %v1726 = vsel %vm1518, %v1724, %v1725
        %v1727 = vrot.slane %v1685, 5
        %v1728 = vrot.slane %v1727, 4
        %v1729 = vrot.slane %v1565, 5
        %v1730 = vsel %vm1518, %v1728, %v1729
        %v1731 = vrot.slane %v1686, 5
        %v1732 = vrot.slane %v1731, 4
        %v1733 = vrot.slane %v1566, 5
        %v1734 = vsel %vm1518, %v1732, %v1733
        %s1735 = scalar_lea.vmem [#allocation2], 16
        %v1736 = vld [vmem:[%s1735] sm:$0xf]
        %v1737 = vld [vmem:[%s1735 + $0x8] sm:$0xf]
        %v1738 = vld [vmem:[%s1735 + $0x10] sm:$0xf]
        %v1739 = vld [vmem:[%s1735 + $0x18] sm:$0xf]
        %v1740 = vld [vmem:[%s1735 + $0x20] sm:$0xf]
        %v1741 = vld [vmem:[%s1735 + $0x28] sm:$0xf]
        %v1742 = vld [vmem:[%s1735 + $0x30] sm:$0xf]
        %v1743 = vld [vmem:[%s1735 + $0x38] sm:$0xf]
        %v1744 = vld [vmem:[%s1735 + $0x4] sm:$0x1]
        %v1745 = vld [vmem:[%s1735 + $0xc] sm:$0x1]
        %v1746 = vld [vmem:[%s1735 + $0x14] sm:$0x1]
        %v1747 = vld [vmem:[%s1735 + $0x1c] sm:$0x1]
        %v1748 = vld [vmem:[%s1735 + $0x24] sm:$0x1]
        %v1749 = vld [vmem:[%s1735 + $0x2c] sm:$0x1]
        %v1750 = vld [vmem:[%s1735 + $0x34] sm:$0x1]
        %v1751 = vld [vmem:[%s1735 + $0x3c] sm:$0x1]
        %v1753 = vshrl.u32 %v1736, 16
        %v1755 = vrot.slane %v1753, 4
        %v1756 = vshll.u32 %v1736, 16
        %v1758 = vrot.slane %v1756, 5
        %v1759 = vor.u32 %v1755, %v1758
        %v1760 = vrot.slane %v1759, 4
        %v1762 = vshll.u32 %v1744, 16
        %v1764 = vrot.slane %v1762, 5
        %v1765 = vsel %vm305, %v1760, %v1764
        %v1767 = vshrl.u32 %v1737, 16
        %v1769 = vrot.slane %v1767, 4
        %v1770 = vshll.u32 %v1737, 16
        %v1772 = vrot.slane %v1770, 5
        %v1773 = vor.u32 %v1769, %v1772
        %v1774 = vrot.slane %v1773, 4
        %v1776 = vshll.u32 %v1745, 16
        %v1778 = vrot.slane %v1776, 5
        %v1779 = vsel %vm305, %v1774, %v1778
        %v1781 = vshrl.u32 %v1738, 16
        %v1783 = vrot.slane %v1781, 4
        %v1784 = vshll.u32 %v1738, 16
        %v1786 = vrot.slane %v1784, 5
        %v1787 = vor.u32 %v1783, %v1786
        %v1788 = vrot.slane %v1787, 4
        %v1790 = vshll.u32 %v1746, 16
        %v1792 = vrot.slane %v1790, 5
        %v1793 = vsel %vm305, %v1788, %v1792
        %v1795 = vshrl.u32 %v1739, 16
        %v1797 = vrot.slane %v1795, 4
        %v1798 = vshll.u32 %v1739, 16
        %v1800 = vrot.slane %v1798, 5
        %v1801 = vor.u32 %v1797, %v1800
        %v1802 = vrot.slane %v1801, 4
        %v1804 = vshll.u32 %v1747, 16
        %v1806 = vrot.slane %v1804, 5
        %v1807 = vsel %vm305, %v1802, %v1806
        %v1809 = vshrl.u32 %v1740, 16
        %v1811 = vrot.slane %v1809, 4
        %v1812 = vshll.u32 %v1740, 16
        %v1814 = vrot.slane %v1812, 5
        %v1815 = vor.u32 %v1811, %v1814
        %v1816 = vrot.slane %v1815, 4
        %v1818 = vshll.u32 %v1748, 16
        %v1820 = vrot.slane %v1818, 5
        %v1821 = vsel %vm305, %v1816, %v1820
        %v1823 = vshrl.u32 %v1741, 16
        %v1825 = vrot.slane %v1823, 4
        %v1826 = vshll.u32 %v1741, 16
        %v1828 = vrot.slane %v1826, 5
        %v1829 = vor.u32 %v1825, %v1828
        %v1830 = vrot.slane %v1829, 4
        %v1832 = vshll.u32 %v1749, 16
        %v1834 = vrot.slane %v1832, 5
        %v1835 = vsel %vm305, %v1830, %v1834
        %v1837 = vshrl.u32 %v1742, 16
        %v1839 = vrot.slane %v1837, 4
        %v1840 = vshll.u32 %v1742, 16
        %v1842 = vrot.slane %v1840, 5
        %v1843 = vor.u32 %v1839, %v1842
        %v1844 = vrot.slane %v1843, 4
        %v1846 = vshll.u32 %v1750, 16
        %v1848 = vrot.slane %v1846, 5
        %v1849 = vsel %vm305, %v1844, %v1848
        %v1851 = vshrl.u32 %v1743, 16
        %v1853 = vrot.slane %v1851, 4
        %v1854 = vshll.u32 %v1743, 16
        %v1856 = vrot.slane %v1854, 5
        %v1857 = vor.u32 %v1853, %v1856
        %v1858 = vrot.slane %v1857, 4
        %v1860 = vshll.u32 %v1751, 16
        %v1862 = vrot.slane %v1860, 5
        %v1863 = vsel %vm305, %v1858, %v1862
        %v1864 = vld [vmem:[%s1735] sm:$0xe]
        %v1865 = vld [vmem:[%s1735 + $0x8] sm:$0xe]
        %v1866 = vld [vmem:[%s1735 + $0x10] sm:$0xe]
        %v1867 = vld [vmem:[%s1735 + $0x18] sm:$0xe]
        %v1868 = vld [vmem:[%s1735 + $0x20] sm:$0xe]
        %v1869 = vld [vmem:[%s1735 + $0x28] sm:$0xe]
        %v1870 = vld [vmem:[%s1735 + $0x30] sm:$0xe]
        %v1871 = vld [vmem:[%s1735 + $0x38] sm:$0xe]
        %v1888 = vrot.slane %v1864, 5
        %v1889 = vrot.slane %v1888, 4
        %v1890 = vrot.slane %v1744, 5
        %v1891 = vsel %vm1518, %v1889, %v1890
        %v1892 = vrot.slane %v1865, 5
        %v1893 = vrot.slane %v1892, 4
        %v1894 = vrot.slane %v1745, 5
        %v1895 = vsel %vm1518, %v1893, %v1894
        %v1896 = vrot.slane %v1866, 5
        %v1897 = vrot.slane %v1896, 4
        %v1898 = vrot.slane %v1746, 5
        %v1899 = vsel %vm1518, %v1897, %v1898
        %v1900 = vrot.slane %v1867, 5
        %v1901 = vrot.slane %v1900, 4
        %v1902 = vrot.slane %v1747, 5
        %v1903 = vsel %vm1518, %v1901, %v1902
        %v1904 = vrot.slane %v1868, 5
        %v1905 = vrot.slane %v1904, 4
        %v1906 = vrot.slane %v1748, 5
        %v1907 = vsel %vm1518, %v1905, %v1906
        %v1908 = vrot.slane %v1869, 5
        %v1909 = vrot.slane %v1908, 4
        %v1910 = vrot.slane %v1749, 5
        %v1911 = vsel %vm1518, %v1909, %v1910
        %v1912 = vrot.slane %v1870, 5
        %v1913 = vrot.slane %v1912, 4
        %v1914 = vrot.slane %v1750, 5
        %v1915 = vsel %vm1518, %v1913, %v1914
        %v1916 = vrot.slane %v1871, 5
        %v1917 = vrot.slane %v1916, 4
        %v1918 = vrot.slane %v1751, 5
        %v1919 = vsel %vm1518, %v1917, %v1918
        %v1928 = vunpack.c.l.b16 %v1364
        %v1929 = vunpack.c.l.b16 %v1365
        %v1930 = vunpack.c.l.b16 %v1366
        %v1931 = vunpack.c.l.b16 %v1367
        %v1932 = vunpack.c.l.b16 %v1368
        %v1933 = vunpack.c.l.b16 %v1369
        %v1934 = vunpack.c.l.b16 %v1370
        %v1935 = vunpack.c.l.b16 %v1371
        %v1936 = vpack.c.b16 %v1929, %v1928
        %v1937 = vpack.c.b16 %v1931, %v1930
        %v1938 = vpack.c.b16 %v1933, %v1932
        %v1939 = vpack.c.b16 %v1935, %v1934
        %v1940 = vunpack.c.l.b16 %v1393
        %v1941 = vunpack.c.l.b16 %v1407
        %v1942 = vunpack.c.l.b16 %v1421
        %v1943 = vunpack.c.l.b16 %v1435
        %v1944 = vunpack.c.l.b16 %v1449
        %v1945 = vunpack.c.l.b16 %v1463
        %v1946 = vunpack.c.l.b16 %v1477
        %v1947 = vunpack.c.l.b16 %v1491
        %v1948 = vpack.c.b16 %v1941, %v1940
        %v1949 = vpack.c.b16 %v1943, %v1942
        %v1950 = vpack.c.b16 %v1945, %v1944
        %v1951 = vpack.c.b16 %v1947, %v1946
        %1952 = vrot.lane.b32.xlu0 %v1948, 16
        %v1953 = vpop.permute.xlu0 %1952
        %1954 = vrot.lane.b32.xlu0 %v1949, 16
        %v1955 = vpop.permute.xlu0 %1954
        %1956 = vrot.lane.b32.xlu0 %v1950, 16
        %v1957 = vpop.permute.xlu0 %1956
        %1958 = vrot.lane.b32.xlu0 %v1951, 16
        %v1959 = vpop.permute.xlu0 %1958
        %v1960 = vunpack.c.l.b16 %v1522
        %v1961 = vunpack.c.l.b16 %v1526
        %v1962 = vunpack.c.l.b16 %v1530
        %v1963 = vunpack.c.l.b16 %v1534
        %v1964 = vunpack.c.l.b16 %v1538
        %v1965 = vunpack.c.l.b16 %v1542
        %v1966 = vunpack.c.l.b16 %v1546
        %v1967 = vunpack.c.l.b16 %v1550
        %v1968 = vpack.c.b16 %v1961, %v1960
        %v1969 = vpack.c.b16 %v1963, %v1962
        %v1970 = vpack.c.b16 %v1965, %v1964
        %v1971 = vpack.c.b16 %v1967, %v1966
        %1972 = vrot.lane.b32.xlu0 %v1968, 32
        %v1973 = vpop.permute.xlu0 %1972
        %1974 = vrot.lane.b32.xlu0 %v1969, 32
        %v1975 = vpop.permute.xlu0 %1974
        %1976 = vrot.lane.b32.xlu0 %v1970, 32
        %v1977 = vpop.permute.xlu0 %1976
        %1978 = vrot.lane.b32.xlu0 %v1971, 32
        %v1979 = vpop.permute.xlu0 %1978
        %v1988 = vunpack.c.l.b16 %v1551
        %v1989 = vunpack.c.l.b16 %v1552
        %v1990 = vunpack.c.l.b16 %v1553
        %v1991 = vunpack.c.l.b16 %v1554
        %v1992 = vunpack.c.l.b16 %v1555
        %v1993 = vunpack.c.l.b16 %v1556
        %v1994 = vunpack.c.l.b16 %v1557
        %v1995 = vunpack.c.l.b16 %v1558
        %v1996 = vpack.c.b16 %v1989, %v1988
        %v1997 = vpack.c.b16 %v1991, %v1990
        %v1998 = vpack.c.b16 %v1993, %v1992
        %v1999 = vpack.c.b16 %v1995, %v1994
        %2000 = vrot.lane.b32.xlu0 %v1996, 48
        %v2001 = vpop.permute.xlu0 %2000
        %2002 = vrot.lane.b32.xlu0 %v1997, 48
        %v2003 = vpop.permute.xlu0 %2002
        %2004 = vrot.lane.b32.xlu0 %v1998, 48
        %v2005 = vpop.permute.xlu0 %2004
        %2006 = vrot.lane.b32.xlu0 %v1999, 48
        %v2007 = vpop.permute.xlu0 %2006
        %v2008 = vunpack.c.l.b16 %v1580
        %v2009 = vunpack.c.l.b16 %v1594
        %v2010 = vunpack.c.l.b16 %v1608
        %v2011 = vunpack.c.l.b16 %v1622
        %v2012 = vunpack.c.l.b16 %v1636
        %v2013 = vunpack.c.l.b16 %v1650
        %v2014 = vunpack.c.l.b16 %v1664
        %v2015 = vunpack.c.l.b16 %v1678
        %v2016 = vpack.c.b16 %v2009, %v2008
        %v2017 = vpack.c.b16 %v2011, %v2010
        %v2018 = vpack.c.b16 %v2013, %v2012
        %v2019 = vpack.c.b16 %v2015, %v2014
        %2020 = vrot.lane.b32.xlu0 %v2016, 64
        %v2021 = vpop.permute.xlu0 %2020
        %2022 = vrot.lane.b32.xlu0 %v2017, 64
        %v2023 = vpop.permute.xlu0 %2022
        %2024 = vrot.lane.b32.xlu0 %v2018, 64
        %v2025 = vpop.permute.xlu0 %2024
        %2026 = vrot.lane.b32.xlu0 %v2019, 64
        %v2027 = vpop.permute.xlu0 %2026
        %v2028 = vunpack.c.l.b16 %v1706
        %v2029 = vunpack.c.l.b16 %v1710
        %v2030 = vunpack.c.l.b16 %v1714
        %v2031 = vunpack.c.l.b16 %v1718
        %v2032 = vunpack.c.l.b16 %v1722
        %v2033 = vunpack.c.l.b16 %v1726
        %v2034 = vunpack.c.l.b16 %v1730
        %v2035 = vunpack.c.l.b16 %v1734
        %v2036 = vpack.c.b16 %v2029, %v2028
        %v2037 = vpack.c.b16 %v2031, %v2030
        %v2038 = vpack.c.b16 %v2033, %v2032
        %v2039 = vpack.c.b16 %v2035, %v2034
        %2040 = vrot.lane.b32.xlu0 %v2036, 80
        %v2041 = vpop.permute.xlu0 %2040
        %2042 = vrot.lane.b32.xlu0 %v2037, 80
        %v2043 = vpop.permute.xlu0 %2042
        %2044 = vrot.lane.b32.xlu0 %v2038, 80
        %v2045 = vpop.permute.xlu0 %2044
        %2046 = vrot.lane.b32.xlu0 %v2039, 80
        %v2047 = vpop.permute.xlu0 %2046
        %v2056 = vunpack.c.l.b16 %v1736
        %v2057 = vunpack.c.l.b16 %v1737
        %v2058 = vunpack.c.l.b16 %v1738
        %v2059 = vunpack.c.l.b16 %v1739
        %v2060 = vunpack.c.l.b16 %v1740
        %v2061 = vunpack.c.l.b16 %v1741
        %v2062 = vunpack.c.l.b16 %v1742
        %v2063 = vunpack.c.l.b16 %v1743
        %v2064 = vpack.c.b16 %v2057, %v2056
        %v2065 = vpack.c.b16 %v2059, %v2058
        %v2066 = vpack.c.b16 %v2061, %v2060
        %v2067 = vpack.c.b16 %v2063, %v2062
        %2068 = vrot.lane.b32.xlu0 %v2064, 96
        %v2069 = vpop.permute.xlu0 %2068
        %2070 = vrot.lane.b32.xlu0 %v2065, 96
        %v2071 = vpop.permute.xlu0 %2070
        %2072 = vrot.lane.b32.xlu0 %v2066, 96
        %v2073 = vpop.permute.xlu0 %2072
        %2074 = vrot.lane.b32.xlu0 %v2067, 96
        %v2075 = vpop.permute.xlu0 %2074
        %v2076 = vunpack.c.l.b16 %v1765
        %v2077 = vunpack.c.l.b16 %v1779
        %v2078 = vunpack.c.l.b16 %v1793
        %v2079 = vunpack.c.l.b16 %v1807
        %v2080 = vunpack.c.l.b16 %v1821
        %v2081 = vunpack.c.l.b16 %v1835
        %v2082 = vunpack.c.l.b16 %v1849
        %v2083 = vunpack.c.l.b16 %v1863
        %v2084 = vpack.c.b16 %v2077, %v2076
        %v2085 = vpack.c.b16 %v2079, %v2078
        %v2086 = vpack.c.b16 %v2081, %v2080
        %v2087 = vpack.c.b16 %v2083, %v2082
        %2088 = vrot.lane.b32.xlu0 %v2084, 112
        %v2089 = vpop.permute.xlu0 %2088
        %2090 = vrot.lane.b32.xlu0 %v2085, 112
        %v2091 = vpop.permute.xlu0 %2090
        %2092 = vrot.lane.b32.xlu0 %v2086, 112
        %v2093 = vpop.permute.xlu0 %2092
        %2094 = vrot.lane.b32.xlu0 %v2087, 112
        %v2095 = vpop.permute.xlu0 %2094
        %v2096 = vunpack.c.l.b16 %v1891
        %v2097 = vunpack.c.l.b16 %v1895
        %v2098 = vunpack.c.l.b16 %v1899
        %v2099 = vunpack.c.l.b16 %v1903
        %v2100 = vunpack.c.l.b16 %v1907
        %v2101 = vunpack.c.l.b16 %v1911
        %v2102 = vunpack.c.l.b16 %v1915
        %v2103 = vunpack.c.l.b16 %v1919
        %v2104 = vpack.c.b16 %v2097, %v2096
        %v2105 = vpack.c.b16 %v2099, %v2098
        %v2106 = vpack.c.b16 %v2101, %v2100
        %v2107 = vpack.c.b16 %v2103, %v2102
        %v2110 = vsel %vm927, %v1936, %v1953
        %v2113 = vsel %vm927, %v1937, %v1955
        %v2116 = vsel %vm927, %v1938, %v1957
        %v2119 = vsel %vm927, %v1939, %v1959
        %v2121 = vsel %vm945, %v2110, %v1973
        %v2123 = vsel %vm945, %v2113, %v1975
        %v2125 = vsel %vm945, %v2116, %v1977
        %v2127 = vsel %vm945, %v2119, %v1979
        %v2129 = vsel %vm963, %v2121, %v2001
        %v2131 = vsel %vm963, %v2123, %v2003
        %v2133 = vsel %vm963, %v2125, %v2005
        %v2135 = vsel %vm963, %v2127, %v2007
        %v2137 = vsel %vm981, %v2129, %v2021
        %v2139 = vsel %vm981, %v2131, %v2023
        %v2141 = vsel %vm981, %v2133, %v2025
        %v2143 = vsel %vm981, %v2135, %v2027
        %vm2144 = vcmask 654336
        %v2146 = vsel %vm2144, %v2137, %v2041
        %v2148 = vsel %vm2144, %v2139, %v2043
        %v2150 = vsel %vm2144, %v2141, %v2045
        %v2152 = vsel %vm2144, %v2143, %v2047
        %vm2153 = vcmask 785408
        %v2155 = vsel %vm2153, %v2146, %v2069
        %v2157 = vsel %vm2153, %v2148, %v2071
        %v2159 = vsel %vm2153, %v2150, %v2073
        %v2161 = vsel %vm2153, %v2152, %v2075
        %vm2162 = vcmask 916480
        %v2164 = vsel %vm2162, %v2155, %v2089
        %v2167 = vsel %vm2162, %v2157, %v2091
        %v2170 = vsel %vm2162, %v2159, %v2093
        %v2173 = vsel %vm2162, %v2161, %v2095
        %v2175 = vld [vmem:[%s4] sm:$0xf]
        %v2176 = vld [vmem:[%s4 + $0x4] sm:$0xf]
        %v2177 = vld [vmem:[%s4 + $0x8] sm:$0xf]
        %v2178 = vld [vmem:[%s4 + $0xc] sm:$0xf]
        %v2179 = vld [vmem:[%s4 + $0x10] sm:$0xf]
        %v2180 = vld [vmem:[%s4 + $0x14] sm:$0xf]
        %v2181 = vld [vmem:[%s4 + $0x18] sm:$0xf]
        %v2182 = vld [vmem:[%s4 + $0x1c] sm:$0xf]
        %v2183 = vld [vmem:[%s4 + $0x20] sm:$0xf]
        %v2184 = vld [vmem:[%s4 + $0x24] sm:$0xf]
        %v2185 = vld [vmem:[%s4 + $0x28] sm:$0xf]
        %v2186 = vld [vmem:[%s4 + $0x2c] sm:$0xf]
        %v2187 = vld [vmem:[%s4 + $0x30] sm:$0xf]
        %v2188 = vld [vmem:[%s4 + $0x34] sm:$0xf]
        %v2189 = vld [vmem:[%s4 + $0x38] sm:$0xf]
        %v2190 = vld [vmem:[%s4 + $0x3c] sm:$0xf]
        %v2191 = vld [vmem:[%s4 + $0x40] sm:$0xf]
        %v2192 = vld [vmem:[%s4 + $0x44] sm:$0xf]
        %v2211 = vunpack.c.l.b16 %v2175
        %v2212 = vunpack.c.l.b16 %v2176
        %v2213 = vunpack.c.l.b16 %v2177
        %v2214 = vunpack.c.l.b16 %v2178
        %v2215 = vunpack.c.l.b16 %v2179
        %v2216 = vunpack.c.l.b16 %v2180
        %v2217 = vunpack.c.l.b16 %v2181
        %v2218 = vunpack.c.l.b16 %v2182
        %v2219 = vunpack.c.l.b16 %v2183
        %v2220 = vunpack.c.l.b16 %v2184
        %v2221 = vunpack.c.l.b16 %v2185
        %v2222 = vunpack.c.l.b16 %v2186
        %v2223 = vunpack.c.l.b16 %v2187
        %v2224 = vunpack.c.l.b16 %v2188
        %v2225 = vunpack.c.l.b16 %v2189
        %v2226 = vunpack.c.l.b16 %v2190
        %v2227 = vunpack.c.l.b16 %v2191
        %v2228 = vunpack.c.l.b16 %v2192
        %v2229 = vpack.c.b16 %v2212, %v2211
        %v2230 = vpack.c.b16 %v2214, %v2213
        %v2231 = vpack.c.b16 %v2216, %v2215
        %v2232 = vpack.c.b16 %v2218, %v2217
        %v2233 = vpack.c.b16 %v2220, %v2219
        %v2234 = vpack.c.b16 %v2222, %v2221
        %v2235 = vpack.c.b16 %v2224, %v2223
        %v2236 = vpack.c.b16 %v2226, %v2225
        %v2237 = vpack.c.b16 %v2228, %v2227
        %v2248 = vsel %vm927, %v2104, 0
        %v2251 = vsel %vm927, %v2105, 0
        %v2254 = vsel %vm927, %v2106, 0
        %v2257 = vsel %vm927, %v2107, 0
        %2259 = vmatprep.subr.bf16.mxu0 0
        %2260 = vmatpush1.bf16.msra.mxu0 %v2236
        %2261 = vmatprep.subr.bf16.mxu0 0
        %2262 = vmatpush1.bf16.msra.mxu0 %v2235
        %2263 = vmatprep.subr.bf16.mxu0 0
        %2264 = vmatpush1.bf16.msra.mxu0 %v2234
        %2265 = vmatprep.subr.bf16.mxu0 0
        %2266 = vmatpush1.bf16.msra.mxu0 %v2233
        %2267 = vmatprep.subr.bf16.mxu0 0
        %2268 = vmatpush1.bf16.msra.mxu0 %v2232
        %2269 = vmatprep.subr.bf16.mxu0 0
        %2270 = vmatpush1.bf16.msra.mxu0 %v2231
        %2271 = vmatprep.subr.bf16.mxu0 0
        %2272 = vmatpush1.bf16.msra.mxu0 %v2230
        %2273 = vmatprep.subr.bf16.mxu0 0
        %2274 = vmatpush1.bf16.msra.mxu0 %v2229
        %2275 = vmatprep.subr.bf16.mxu0 0
        %2276 = vmatpush2.bf16.msra.mxu0 0
        %2277 = vmatprep.subr.bf16.mxu0 0
        %2278 = vmatpush2.bf16.msra.mxu0 0
        %2279 = vmatprep.subr.bf16.mxu0 0
        %2280 = vmatpush2.bf16.msra.mxu0 0
        %2281 = vmatprep.subr.bf16.mxu0 0
        %2282 = vmatpush2.bf16.msra.mxu0 0
        %2283 = vmatprep.subr.bf16.mxu0 0
        %2284 = vmatpush2.bf16.msra.mxu0 0
        %2285 = vmatprep.subr.bf16.mxu0 0
        %2286 = vmatpush2.bf16.msra.mxu0 0
        %2287 = vmatprep.subr.bf16.mxu0 0
        %2288 = vmatpush2.bf16.msra.mxu0 0
        %2289 = vmatprep.subr.bf16.mxu0 0
        %2290 = vmatpush2.bf16.msra.mxu0 %v2237
        %2291 = vmatprep.mubr.bf16.mxu0 %v2248
        %2292 = vmatmul.mubr.bf16.gmra.mxu0 %v2164
        %v2293 = vpop.f32.mrf.mxu0
        %v2294 = vadd.f32 0.0, %v2293
        %v2295 = vpop.f32.mrf.mxu0
        %v2296 = vpop.f32.mrf.mxu0
        %v2297 = vadd.f32 0.0, %v2296
        %v2298 = vpop.f32.mrf.mxu0
        %2299 = vmatprep.mubr.bf16.mxu0 %v2251
        %2300 = vmatmul.mubr.bf16.gmra.mxu0 %v2167
        %v2301 = vpop.f32.mrf.mxu0
        %v2302 = vadd.f32 0.0, %v2301
        %v2303 = vpop.f32.mrf.mxu0
        %v2304 = vpop.f32.mrf.mxu0
        %v2305 = vadd.f32 0.0, %v2304
        %v2306 = vpop.f32.mrf.mxu0
        %2307 = vmatprep.mubr.bf16.mxu0 %v2254
        %2308 = vmatmul.mubr.bf16.gmra.mxu0 %v2170
        %v2309 = vpop.f32.mrf.mxu0
        %v2310 = vadd.f32 0.0, %v2309
        %v2311 = vpop.f32.mrf.mxu0
        %v2312 = vpop.f32.mrf.mxu0
        %v2313 = vadd.f32 0.0, %v2312
        %v2314 = vpop.f32.mrf.mxu0
        %2315 = vmatprep.mubr.bf16.mxu0 %v2257
        %2316 = vmatmul.mubr.bf16.gmra.mxu0 %v2173
        %v2317 = vpop.f32.mrf.mxu0
        %v2318 = vadd.f32 0.0, %v2317
        %v2319 = vpop.f32.mrf.mxu0
        %v2320 = vpop.f32.mrf.mxu0
        %v2321 = vadd.f32 0.0, %v2320
        %v2322 = vpop.f32.mrf.mxu0
        %2323 = vdwg.mxu0
        %v2324 = vld [vmem:[%s5] sm:$0x1]
        %v2326 = vlaneseq
        %v2327 = vshrl.u32 %v2326, 7
        %v2328 = vsub.s32 0, %v2327
        %v2329 = vrot.slane %v2324, %v2328
        %v2331 = vmul.f32 %v2294, %v2329
        %v2332 = vmul.f32 %v2297, %v2329
        %v2333 = vmul.f32 %v2302, %v2329
        %v2334 = vmul.f32 %v2305, %v2329
        %v2335 = vmul.f32 %v2310, %v2329
        %v2336 = vmul.f32 %v2313, %v2329
        %v2337 = vmul.f32 %v2318, %v2329
        %v2338 = vmul.f32 %v2321, %v2329
        %v2339 = vld [vmem:[%s6] sm:$0x1]
        %v2341 = vlaneseq
        %v2342 = vshrl.u32 %v2341, 7
        %v2343 = vsub.s32 0, %v2342
        %v2344 = vrot.slane %v2339, %v2343
        %v2346 = vadd.f32 %v2331, %v2344
        %v2347 = vadd.f32 %v2332, %v2344
        %v2348 = vadd.f32 %v2333, %v2344
        %v2349 = vadd.f32 %v2334, %v2344
        %v2350 = vadd.f32 %v2335, %v2344
        %v2351 = vadd.f32 %v2336, %v2344
        %v2352 = vadd.f32 %v2337, %v2344
        %v2353 = vadd.f32 %v2338, %v2344
        %2362 = vrot.lane.b32.xlu0 %v1126, 112
        %v2363 = vpop.permute.xlu0 %2362
        %2364 = vrot.lane.b32.xlu0 %v1127, 112
        %v2365 = vpop.permute.xlu0 %2364
        %2366 = vrot.lane.b32.xlu0 %v1128, 112
        %v2367 = vpop.permute.xlu0 %2366
        %2368 = vrot.lane.b32.xlu0 %v1129, 112
        %v2369 = vpop.permute.xlu0 %2368
        %2370 = vrot.lane.b32.xlu0 %v1130, 112
        %v2371 = vpop.permute.xlu0 %2370
        %2372 = vrot.lane.b32.xlu0 %v1131, 112
        %v2373 = vpop.permute.xlu0 %2372
        %2374 = vrot.lane.b32.xlu0 %v1132, 112
        %v2375 = vpop.permute.xlu0 %2374
        %2376 = vrot.lane.b32.xlu0 %v1133, 112
        %v2377 = vpop.permute.xlu0 %2376
        %v2386 = vadd.f32 %v2346, %v2363
        %v2387 = vadd.f32 %v2347, %v2365
        %v2388 = vadd.f32 %v2348, %v2367
        %v2389 = vadd.f32 %v2349, %v2369
        %v2390 = vadd.f32 %v2350, %v2371
        %v2391 = vadd.f32 %v2351, %v2373
        %v2392 = vadd.f32 %v2352, %v2375
        %v2393 = vadd.f32 %v2353, %v2377
        %v2394 = vmax.f32 %v2386, 0.0
        %v2395 = vmax.f32 %v2387, 0.0
        %v2396 = vmax.f32 %v2388, 0.0
        %v2397 = vmax.f32 %v2389, 0.0
        %v2398 = vmax.f32 %v2390, 0.0
        %v2399 = vmax.f32 %v2391, 0.0
        %v2400 = vmax.f32 %v2392, 0.0
        %v2401 = vmax.f32 %v2393, 0.0
        %2402 = vst.msk [vmem:[%s271] sm:$0xff] %vm927, %v2394
        %2403 = vst.msk [vmem:[%s271 + $0x8] sm:$0xff] %vm927, %v2395
        %2404 = vst.msk [vmem:[%s271 + $0x10] sm:$0xff] %vm927, %v2396
        %2405 = vst.msk [vmem:[%s271 + $0x18] sm:$0xff] %vm927, %v2397
        %2406 = vst.msk [vmem:[%s271 + $0x20] sm:$0xff] %vm927, %v2398
        %2407 = vst.msk [vmem:[%s271 + $0x28] sm:$0xff] %vm927, %v2399
        %2408 = vst.msk [vmem:[%s271 + $0x30] sm:$0xff] %vm927, %v2400
        %2409 = vst.msk [vmem:[%s271 + $0x38] sm:$0xff] %vm927, %v2401
        %s2410 = sand.u32 %s181, 1
        %s2411 = scalar_lea.sflag [#allocation4], %s2410
        %s2412 = sand.u32 %s181, 1
        %s2413 = smul.addr %s2412, 64
        %s2414 = scalar_lea.vmem [#allocation3], %s2413
        // Predicated region
        $region49: #{tpu_custom_call.1} parent=47 // pred_check
          %p2415 = pneg %p191
        $region50: #{tpu_custom_call.1} parent=47 // pred_check_branch
          %2417 = sbr.rel (%p2415) target = $region52
        $region51: #{tpu_custom_call.1} parent=47 // pred_region
          %s2419 = ssub.s32 1024, 1024
          %2420 = vsyncadd %s2411, %s2419
          %s2421 = smul.addr %s21, 8
          %s2422 = smul.addr %s2421, 128
          %s2423 = scalar_lea.hbm %s7, %s2422
          %s2424 = sshll.u32 %s2414, 4
          %s2425 = int_to_ptr.vmem [resolvable:$true] %s2424
          %2430 = dma.vmem_to_hbm [thread:$0]  %s2425, 1024, %s2423, %s2411, 128, 128, 8
        $region52: #{tpu_custom_call.1} parent=47 // pred_fallthru
          _
      $region48: #{tpu_custom_call.1} parent=5 // pred_fallthru
        _
      %p2431 = scmp.le.s32.totalorder 2, %s16
      // Predicated region
      $region53: #{tpu_custom_call.1} parent=5 // pred_check
        %p2432 = pneg %p2431
      $region54: #{tpu_custom_call.1} parent=5 // pred_check_branch
        %2434 = sbr.rel (%p2432) target = $region56
      $region55: #{tpu_custom_call.1} parent=5 // pred_region
        %s2435 = ssub.s32 %s16, 2
        // Predicated region
        $region57: #{tpu_custom_call.1} parent=55 // pred_check
          %p2436 = pneg %p197
        $region58: #{tpu_custom_call.1} parent=55 // pred_check_branch
          %2438 = sbr.rel (%p2436) target = $region60
        $region59: #{tpu_custom_call.1} parent=55 // pred_region
          %s2439 = sand.u32 %s182, 1
          %s2440 = scalar_lea.sflag [#allocation4], %s2439
          %s2441 = sand.u32 %s182, 1
          %s2442 = smul.addr %s2441, 64
          %s2443 = scalar_lea.vmem [#allocation3], %s2442
          %2444 = dma.done %s2440, 1024
        $region60: #{tpu_custom_call.1} parent=55 // pred_fallthru
          _
      $region56: #{tpu_custom_call.1} parent=5 // pred_fallthru
        _
    $region6: #{tpu_custom_call.1} parent=1 // loop_footer
      %s20 = sadd.s32 1, %s16
    $region7: #{tpu_custom_call.1} parent=1 // loop_footer_branch
      %15 = sbr.rel target = $region3
    $region8: #{tpu_custom_call.1} parent=1 // loop_exit
      _
    %2445 = vsyncpa [#allocation4], 1
    %s2446 = scalar_lea.sflag [#allocation4], 1
    %2447 = vsyncpa %s2446, 1

// kernel: tpu_custom_call.1
$region0: #{tpu_custom_call.1}
  #allocation0 [shape = 'u32[]', space=smem, size = 0x4, offset = 0x4, fixed_abs, tag = 'smem constant byte address 0x4 - core index']
  #allocation1 [shape = 'u32[144,128]{1,0:T(1,128)}', space=vmem, size = 0x12000, scoped, tag = 'internal scratch']
  #allocation2 [shape = 'bf16[10,16,16]{2,1,0:T(8,128)(2,1)}', space=vmem, size = 0xa000, scoped, tag = 'scratch operand']
  %s0 = inlined_call_operand.vmem [shape: bf16[2,36,16,8], index: 0, kind: input, shape index: {}]
  %s1 = inlined_call_operand.vmem [shape: bf16[72,32], index: 1, kind: input, shape index: {}]
  %s2 = inlined_call_operand.vmem [shape: f32[1,32], index: 2, kind: input, shape index: {}]
  %s3 = inlined_call_operand.vmem [shape: f32[1,32], index: 3, kind: input, shape index: {}]
  %s4 = inlined_call_operand.vmem [shape: bf16[144,16], index: 4, kind: input, shape index: {}]
  %s5 = inlined_call_operand.vmem [shape: f32[1,16], index: 5, kind: input, shape index: {}]
  %s6 = inlined_call_operand.vmem [shape: f32[1,16], index: 6, kind: input, shape index: {}]
  %s7 = inlined_call_operand.hbm [shape: f32[2,8,8,16], index: 7, kind: output, shape index: {}]
  %s8 = sld [smem:[#allocation0]]
  $region61: #{tpu_custom_call.1} parent=0
    _
  %s10 = ssub.s32 1, %s8
  %s11 = scalar_select 0, %s10, %s8
  $region1: #{tpu_custom_call.1} parent=0
    #allocation3 [shape = 'u8[65536]{0}', space=vmem, size = 0x10000, scoped, tag = 'output window, operand 0']
    #allocation4 [shape = 's32[2]{0}', space=sflag, size = 0x8, scoped, tag = 'scoped memory for tpu_custom_call.1']
    %12 = vsyncpa [#allocation4], 0
    %s13 = scalar_lea.sflag [#allocation4], 1
    %14 = vsyncpa %s13, 0
    loop: start=0, step=1, limit=4
    $region2: #{tpu_custom_call.1} parent=1 // loop_pre_header
      _
    $region3: #{tpu_custom_call.1} parent=1 // loop_header
      %s16 = sphi 0, %s20
      %p17 = scmp.ge.s32.totalorder %s16, 4
      %s26 = sphi 0, %s28
      %s29 = sphi 0, %s26
      %s30 = sphi 0, %s29
      %s46 = sphi 0, %s30
      %s50 = sphi 0, %s50
      %s52 = sphi 0, %s50
      %s53 = sphi 0, %s52
      %s67 = sphi 0, %s53
      %s71 = sphi 0, %s71
      %s73 = sphi 0, %s71
      %s74 = sphi 0, %s73
      %s88 = sphi 0, %s74
      %s92 = sphi 0, %s92
      %s94 = sphi 0, %s92
      %s95 = sphi 0, %s94
      %s109 = sphi 0, %s95
      %s113 = sphi 0, %s113
      %s115 = sphi 0, %s113
      %s116 = sphi 0, %s115
      %s130 = sphi 0, %s116
      %s134 = sphi 0, %s134
      %s136 = sphi 0, %s134
      %s137 = sphi 0, %s136
      %s151 = sphi 0, %s137
      %s155 = sphi 0, %s155
      %s157 = sphi 0, %s155
      %s158 = sphi 0, %s157
      %s172 = sphi 0, %s158
      %s178 = sphi 0, %s180
      %s181 = sphi 0, %s178
      %s182 = sphi 0, %s181
      %s198 = sphi 0, %s182
    $region4: #{tpu_custom_call.1} parent=1 // loop_header_branch
      %19 = sbr.rel (%p17) target = $region8
    $region5: #{tpu_custom_call.1} parent=1 // loop_body
      %s21 = ssub.s32 %s16, 1
      %s22 = ssub.s32 %s16, 2
      %s23 = sadd.s32 %s16, 1
      %s24 = ssub.s32 %s16, %s23
      %p25 = scmp.eq.s32.totalorder %s24, 0
      %s27 = sadd.s32 %s26, 1
      %s28 = scalar_select %p25, %s26, %s27
      %p31 = pneg %p25
      %p32 = scmp.eq.s32.totalorder %s16, 1
      %p33 = por %p31, %p32
      %p34 = scmp.ne.s32.totalorder %s26, %s29
      %p35 = scmp.eq.s32.totalorder %s16, 0
      %p36 = por %p34, %p35
      %p37 = scmp.ne.s32.totalorder %s26, %s29
      %p38 = scmp.eq.s32.totalorder %s21, 1
      %p39 = por %p37, %p38
      %p40 = scmp.ne.s32.totalorder %s29, %s30
      %p41 = scmp.eq.s32.totalorder %s21, 0
      %p42 = por %p40, %p41
      %p43 = scmp.ne.s32.totalorder %s29, %s30
      %p44 = scmp.eq.s32.totalorder %s22, 1
      %p45 = por %p43, %p44
      %p47 = scmp.ne.s32.totalorder %s30, %s46
      %p48 = scmp.eq.s32.totalorder %s22, 0
      %p49 = por %p47, %p48
      %s51 = sadd.s32 %s50, 1
      %p54 = scmp.eq.s32.totalorder %s16, 1
      %p55 = scmp.ne.s32.totalorder %s50, %s52
      %p56 = scmp.eq.s32.totalorder %s16, 0
      %p57 = por %p55, %p56
      %p58 = scmp.ne.s32.totalorder %s50, %s52
      %p59 = scmp.eq.s32.totalorder %s21, 1
      %p60 = por %p58, %p59
      %p61 = scmp.ne.s32.totalorder %s52, %s53
      %p62 = scmp.eq.s32.totalorder %s21, 0
      %p63 = por %p61, %p62
      %p64 = scmp.ne.s32.totalorder %s52, %s53
      %p65 = scmp.eq.s32.totalorder %s22, 1
      %p66 = por %p64, %p65
      %p68 = scmp.ne.s32.totalorder %s53, %s67
      %p69 = scmp.eq.s32.totalorder %s22, 0
      %p70 = por %p68, %p69
      %s72 = sadd.s32 %s71, 1
      %p75 = scmp.eq.s32.totalorder %s16, 1
      %p76 = scmp.ne.s32.totalorder %s71, %s73
      %p77 = scmp.eq.s32.totalorder %s16, 0
      %p78 = por %p76, %p77
      %p79 = scmp.ne.s32.totalorder %s71, %s73
      %p80 = scmp.eq.s32.totalorder %s21, 1
      %p81 = por %p79, %p80
      %p82 = scmp.ne.s32.totalorder %s73, %s74
      %p83 = scmp.eq.s32.totalorder %s21, 0
      %p84 = por %p82, %p83
      %p85 = scmp.ne.s32.totalorder %s73, %s74
      %p86 = scmp.eq.s32.totalorder %s22, 1
      %p87 = por %p85, %p86
      %p89 = scmp.ne.s32.totalorder %s74, %s88
      %p90 = scmp.eq.s32.totalorder %s22, 0
      %p91 = por %p89, %p90
      %s93 = sadd.s32 %s92, 1
      %p96 = scmp.eq.s32.totalorder %s16, 1
      %p97 = scmp.ne.s32.totalorder %s92, %s94
      %p98 = scmp.eq.s32.totalorder %s16, 0
      %p99 = por %p97, %p98
      %p100 = scmp.ne.s32.totalorder %s92, %s94
      %p101 = scmp.eq.s32.totalorder %s21, 1
      %p102 = por %p100, %p101
      %p103 = scmp.ne.s32.totalorder %s94, %s95
      %p104 = scmp.eq.s32.totalorder %s21, 0
      %p105 = por %p103, %p104
      %p106 = scmp.ne.s32.totalorder %s94, %s95
      %p107 = scmp.eq.s32.totalorder %s22, 1
      %p108 = por %p106, %p107
      %p110 = scmp.ne.s32.totalorder %s95, %s109
      %p111 = scmp.eq.s32.totalorder %s22, 0
      %p112 = por %p110, %p111
      %s114 = sadd.s32 %s113, 1
      %p117 = scmp.eq.s32.totalorder %s16, 1
      %p118 = scmp.ne.s32.totalorder %s113, %s115
      %p119 = scmp.eq.s32.totalorder %s16, 0
      %p120 = por %p118, %p119
      %p121 = scmp.ne.s32.totalorder %s113, %s115
      %p122 = scmp.eq.s32.totalorder %s21, 1
      %p123 = por %p121, %p122
      %p124 = scmp.ne.s32.totalorder %s115, %s116
      %p125 = scmp.eq.s32.totalorder %s21, 0
      %p126 = por %p124, %p125
      %p127 = scmp.ne.s32.totalorder %s115, %s116
      %p128 = scmp.eq.s32.totalorder %s22, 1
      %p129 = por %p127, %p128
      %p131 = scmp.ne.s32.totalorder %s116, %s130
      %p132 = scmp.eq.s32.totalorder %s22, 0
      %p133 = por %p131, %p132
      %s135 = sadd.s32 %s134, 1
      %p138 = scmp.eq.s32.totalorder %s16, 1
      %p139 = scmp.ne.s32.totalorder %s134, %s136
      %p140 = scmp.eq.s32.totalorder %s16, 0
      %p141 = por %p139, %p140
      %p142 = scmp.ne.s32.totalorder %s134, %s136
      %p143 = scmp.eq.s32.totalorder %s21, 1
      %p144 = por %p142, %p143
      %p145 = scmp.ne.s32.totalorder %s136, %s137
      %p146 = scmp.eq.s32.totalorder %s21, 0
      %p147 = por %p145, %p146
      %p148 = scmp.ne.s32.totalorder %s136, %s137
      %p149 = scmp.eq.s32.totalorder %s22, 1
      %p150 = por %p148, %p149
      %p152 = scmp.ne.s32.totalorder %s137, %s151
      %p153 = scmp.eq.s32.totalorder %s22, 0
      %p154 = por %p152, %p153
      %s156 = sadd.s32 %s155, 1
      %p159 = scmp.eq.s32.totalorder %s16, 1
      %p160 = scmp.ne.s32.totalorder %s155, %s157
      %p161 = scmp.eq.s32.totalorder %s16, 0
      %p162 = por %p160, %p161
      %p163 = scmp.ne.s32.totalorder %s155, %s157
      %p164 = scmp.eq.s32.totalorder %s21, 1
      %p165 = por %p163, %p164
      %p166 = scmp.ne.s32.totalorder %s157, %s158
      %p167 = scmp.eq.s32.totalorder %s21, 0
      %p168 = por %p166, %p167
      %p169 = scmp.ne.s32.totalorder %s157, %s158
      %p170 = scmp.eq.s32.totalorder %s22, 1
      %p171 = por %p169, %p170
      %p173 = scmp.ne.s32.totalorder %s158, %s172
      %p174 = scmp.eq.s32.totalorder %s22, 0
      %p175 = por %p173, %p174
      %s176 = ssub.s32 %s16, %s23
      %p177 = scmp.eq.s32.totalorder %s176, 0
      %s179 = sadd.s32 %s178, 1
      %s180 = scalar_select %p177, %s178, %s179
      %p183 = pneg %p177
      %p184 = scmp.eq.s32.totalorder %s16, 1
      %p185 = por %p183, %p184
      %p186 = scmp.ne.s32.totalorder %s178, %s181
      %p187 = scmp.eq.s32.totalorder %s16, 0
      %p188 = por %p186, %p187
      %p189 = scmp.ne.s32.totalorder %s178, %s181
      %p190 = scmp.eq.s32.totalorder %s21, 1
      %p191 = por %p189, %p190
      %p192 = scmp.ne.s32.totalorder %s181, %s182
      %p193 = scmp.eq.s32.totalorder %s21, 0
      %p194 = por %p192, %p193
      %p195 = scmp.ne.s32.totalorder %s181, %s182
      %p196 = scmp.eq.s32.totalorder %s22, 1
      %p197 = por %p195, %p196
      %p199 = scmp.ne.s32.totalorder %s182, %s198
      %p200 = scmp.eq.s32.totalorder %s22, 0
      %p201 = por %p199, %p200
      %p202 = scmp.le.s32.totalorder 1, %s16
      %p203 = scmp.lt.s32.totalorder %s16, 3
      %p204 = pnand %p202, %p203
      %p205 = pneg %p204
      // Predicated region
      $region9: #{tpu_custom_call.1} parent=5 // pred_check
        _
      $region10: #{tpu_custom_call.1} parent=5 // pred_check_branch
        %207 = sbr.rel (%p204) target = $region12
      $region11: #{tpu_custom_call.1} parent=5 // pred_region
        %s208 = ssub.s32 %s16, 1
        // Predicated region
        $region13: #{tpu_custom_call.1} parent=11 // pred_check
          %p209 = pneg %p63
        $region14: #{tpu_custom_call.1} parent=11 // pred_check_branch
          %211 = sbr.rel (%p209) target = $region16
        $region15: #{tpu_custom_call.1} parent=11 // pred_region
          _
        $region16: #{tpu_custom_call.1} parent=11 // pred_fallthru
          _
        // Predicated region
        $region17: #{tpu_custom_call.1} parent=11 // pred_check
          %p212 = pneg %p84
        $region18: #{tpu_custom_call.1} parent=11 // pred_check_branch
          %214 = sbr.rel (%p212) target = $region20
        $region19: #{tpu_custom_call.1} parent=11 // pred_region
          _
        $region20: #{tpu_custom_call.1} parent=11 // pred_fallthru
          _
        // Predicated region
        $region21: #{tpu_custom_call.1} parent=11 // pred_check
          %p215 = pneg %p105
        $region22: #{tpu_custom_call.1} parent=11 // pred_check_branch
          %217 = sbr.rel (%p215) target = $region24
        $region23: #{tpu_custom_call.1} parent=11 // pred_region
          _
        $region24: #{tpu_custom_call.1} parent=11 // pred_fallthru
          _
        // Predicated region
        $region25: #{tpu_custom_call.1} parent=11 // pred_check
          %p218 = pneg %p126
        $region26: #{tpu_custom_call.1} parent=11 // pred_check_branch
          %220 = sbr.rel (%p218) target = $region28
        $region27: #{tpu_custom_call.1} parent=11 // pred_region
          _
        $region28: #{tpu_custom_call.1} parent=11 // pred_fallthru
          _
        // Predicated region
        $region29: #{tpu_custom_call.1} parent=11 // pred_check
          %p221 = pneg %p147
        $region30: #{tpu_custom_call.1} parent=11 // pred_check_branch
          %223 = sbr.rel (%p221) target = $region32
        $region31: #{tpu_custom_call.1} parent=11 // pred_region
          _
        $region32: #{tpu_custom_call.1} parent=11 // pred_fallthru
          _
        // Predicated region
        $region33: #{tpu_custom_call.1} parent=11 // pred_check
          %p224 = pneg %p168
        $region34: #{tpu_custom_call.1} parent=11 // pred_check_branch
          %226 = sbr.rel (%p224) target = $region36
        $region35: #{tpu_custom_call.1} parent=11 // pred_region
          _
        $region36: #{tpu_custom_call.1} parent=11 // pred_fallthru
          _
      $region12: #{tpu_custom_call.1} parent=5 // pred_fallthru
        _
      %p227 = scmp.lt.s32.totalorder %s16, 2
      // Predicated region
      $region37: #{tpu_custom_call.1} parent=5 // pred_check
        %p228 = pneg %p227
      $region38: #{tpu_custom_call.1} parent=5 // pred_check_branch
        %230 = sbr.rel (%p228) target = $region40
      $region39: #{tpu_custom_call.1} parent=5 // pred_region
        // Predicated region
        $region41: #{tpu_custom_call.1} parent=39 // pred_check
          %p231 = pneg %p36
        $region42: #{tpu_custom_call.1} parent=39 // pred_check_branch
          %233 = sbr.rel (%p231) target = $region44
        $region43: #{tpu_custom_call.1} parent=39 // pred_region
          %p234 = scmp.lt.s32.totalorder %s16, 1
          %s235 = scalar_select %p234, %s16, 1
          %s236 = smul.addr %s235, 72
          %s237 = smul.addr %s236, 4
          %s238 = scalar_lea.vmem %s0, %s237
        $region44: #{tpu_custom_call.1} parent=39 // pred_fallthru
          _
      $region40: #{tpu_custom_call.1} parent=5 // pred_fallthru
        _
      %p239 = scmp.le.s32.totalorder 1, %s16
      %p240 = scmp.lt.s32.totalorder %s16, 3
      %p241 = pnand %p239, %p240
      %p242 = pneg %p241
      // Predicated region
      $region45: #{tpu_custom_call.1} parent=5 // pred_check
        _
      $region46: #{tpu_custom_call.1} parent=5 // pred_check_branch
        %244 = sbr.rel (%p241) target = $region48
      $region47: #{tpu_custom_call.1} parent=5 // pred_region
        %s245 = ssub.s32 %s16, 1
        %p246 = scmp.lt.s32.totalorder %s21, 1
        %s247 = scalar_select %p246, %s21, 1
        %s248 = smul.addr %s247, 72
        %s249 = smul.addr %s248, 4
        %s250 = scalar_lea.vmem %s0, %s249
        %p251 = pneg %p42
        %p252 = pneg %p39
        %p253 = pneg %p63
        %p254 = pneg %p60
        %p255 = pneg %p84
        %p256 = pneg %p81
        %p257 = pneg %p105
        %p258 = pneg %p102
        %p259 = pneg %p126
        %p260 = pneg %p123
        %p261 = pneg %p147
        %p262 = pneg %p144
        %p263 = pneg %p168
        %p264 = pneg %p165
        %p265 = pneg %p194
        %p266 = pneg %p191
        %s267 = sand.u32 %s181, 1
        %s268 = scalar_lea.sflag [#allocation4], %s267
        %s269 = sand.u32 %s181, 1
        %s270 = smul.addr %s269, 64
        %s271 = scalar_lea.vmem [#allocation3], %s270
        %p272 = scmp.lt.s32.totalorder %s21, 1
        %s273 = scalar_select %p272, %s21, 1
        %s274 = smul.addr %s273, 72
        %s275 = smul.addr %s274, 4
        %s276 = scalar_lea.vmem %s0, %s275
        %v278 = vld [vmem:[%s276] sm:$0xf]
        %v279 = vld [vmem:[%s276 + $0x8] sm:$0xf]
        %v280 = vld [vmem:[%s276 + $0x10] sm:$0xf]
        %v281 = vld [vmem:[%s276 + $0x18] sm:$0xf]
        %v282 = vld [vmem:[%s276 + $0x20] sm:$0xf]
        %v283 = vld [vmem:[%s276 + $0x28] sm:$0xf]
        %v284 = vld [vmem:[%s276 + $0x30] sm:$0xf]
        %v285 = vld [vmem:[%s276 + $0x38] sm:$0xf]
        %s286 = scalar_lea.vmem %s276, 72
        %v287 = vld [vmem:[%s286] sm:$0xf]
        %v288 = vld [vmem:[%s286 + $0x8] sm:$0xf]
        %v289 = vld [vmem:[%s286 + $0x10] sm:$0xf]
        %v290 = vld [vmem:[%s286 + $0x18] sm:$0xf]
        %v291 = vld [vmem:[%s286 + $0x20] sm:$0xf]
        %v292 = vld [vmem:[%s286 + $0x28] sm:$0xf]
        %v293 = vld [vmem:[%s286 + $0x30] sm:$0xf]
        %v294 = vld [vmem:[%s286 + $0x38] sm:$0xf]
        %v295 = vld [vmem:[%s276 + $0x4] sm:$0x1]
        %v296 = vld [vmem:[%s276 + $0xc] sm:$0x1]
        %v297 = vld [vmem:[%s276 + $0x14] sm:$0x1]
        %v298 = vld [vmem:[%s276 + $0x1c] sm:$0x1]
        %v299 = vld [vmem:[%s276 + $0x24] sm:$0x1]
        %v300 = vld [vmem:[%s276 + $0x2c] sm:$0x1]
        %v301 = vld [vmem:[%s276 + $0x34] sm:$0x1]
        %v302 = vld [vmem:[%s276 + $0x3c] sm:$0x1]
        %vm303 = vsmask.f32 3328
        %vm304 = vsmask.f32 7440
        %vm305 = vmor %vm303, %vm304
        %v307 = vshrl.u32 %v278, 16
        %v309 = vrot.slane %v307, 4
        %v310 = vshll.u32 %v278, 16
        %v312 = vrot.slane %v310, 5
        %v313 = vor.u32 %v309, %v312
        %v314 = vrot.slane %v313, 4
        %v316 = vshll.u32 %v295, 16
        %v318 = vrot.slane %v316, 5
        %v319 = vsel %vm305, %v314, %v318
        %v321 = vshrl.u32 %v279, 16
        %v323 = vrot.slane %v321, 4
        %v324 = vshll.u32 %v279, 16
        %v326 = vrot.slane %v324, 5
        %v327 = vor.u32 %v323, %v326
        %v328 = vrot.slane %v327, 4
        %v330 = vshll.u32 %v296, 16
        %v332 = vrot.slane %v330, 5
        %v333 = vsel %vm305, %v328, %v332
        %v335 = vshrl.u32 %v280, 16
        %v337 = vrot.slane %v335, 4
        %v338 = vshll.u32 %v280, 16
        %v340 = vrot.slane %v338, 5
        %v341 = vor.u32 %v337, %v340
        %v342 = vrot.slane %v341, 4
        %v344 = vshll.u32 %v297, 16
        %v346 = vrot.slane %v344, 5
        %v347 = vsel %vm305, %v342, %v346
        %v349 = vshrl.u32 %v281, 16
        %v351 = vrot.slane %v349, 4
        %v352 = vshll.u32 %v281, 16
        %v354 = vrot.slane %v352, 5
        %v355 = vor.u32 %v351, %v354
        %v356 = vrot.slane %v355, 4
        %v358 = vshll.u32 %v298, 16
        %v360 = vrot.slane %v358, 5
        %v361 = vsel %vm305, %v356, %v360
        %v363 = vshrl.u32 %v282, 16
        %v365 = vrot.slane %v363, 4
        %v366 = vshll.u32 %v282, 16
        %v368 = vrot.slane %v366, 5
        %v369 = vor.u32 %v365, %v368
        %v370 = vrot.slane %v369, 4
        %v372 = vshll.u32 %v299, 16
        %v374 = vrot.slane %v372, 5
        %v375 = vsel %vm305, %v370, %v374
        %v377 = vshrl.u32 %v283, 16
        %v379 = vrot.slane %v377, 4
        %v380 = vshll.u32 %v283, 16
        %v382 = vrot.slane %v380, 5
        %v383 = vor.u32 %v379, %v382
        %v384 = vrot.slane %v383, 4
        %v386 = vshll.u32 %v300, 16
        %v388 = vrot.slane %v386, 5
        %v389 = vsel %vm305, %v384, %v388
        %v391 = vshrl.u32 %v284, 16
        %v393 = vrot.slane %v391, 4
        %v394 = vshll.u32 %v284, 16
        %v396 = vrot.slane %v394, 5
        %v397 = vor.u32 %v393, %v396
        %v398 = vrot.slane %v397, 4
        %v400 = vshll.u32 %v301, 16
        %v402 = vrot.slane %v400, 5
        %v403 = vsel %vm305, %v398, %v402
        %v405 = vshrl.u32 %v285, 16
        %v407 = vrot.slane %v405, 4
        %v408 = vshll.u32 %v285, 16
        %v410 = vrot.slane %v408, 5
        %v411 = vor.u32 %v407, %v410
        %v412 = vrot.slane %v411, 4
        %v414 = vshll.u32 %v302, 16
        %v416 = vrot.slane %v414, 5
        %v417 = vsel %vm305, %v412, %v416
        %s418 = scalar_lea.vmem %s276, 144
        %v419 = vld [vmem:[%s418] sm:$0xf]
        %v420 = vld [vmem:[%s418 + $0x8] sm:$0xf]
        %v421 = vld [vmem:[%s418 + $0x10] sm:$0xf]
        %v422 = vld [vmem:[%s418 + $0x18] sm:$0xf]
        %v423 = vld [vmem:[%s418 + $0x20] sm:$0xf]
        %v424 = vld [vmem:[%s418 + $0x28] sm:$0xf]
        %v425 = vld [vmem:[%s418 + $0x30] sm:$0xf]
        %v426 = vld [vmem:[%s418 + $0x38] sm:$0xf]
        %s427 = scalar_lea.vmem %s276, 216
        %v428 = vld [vmem:[%s427] sm:$0xf]
        %v429 = vld [vmem:[%s427 + $0x8] sm:$0xf]
        %v430 = vld [vmem:[%s427 + $0x10] sm:$0xf]
        %v431 = vld [vmem:[%s427 + $0x18] sm:$0xf]
        %v432 = vld [vmem:[%s427 + $0x20] sm:$0xf]
        %v433 = vld [vmem:[%s427 + $0x28] sm:$0xf]
        %v434 = vld [vmem:[%s427 + $0x30] sm:$0xf]
        %v435 = vld [vmem:[%s427 + $0x38] sm:$0xf]
        %v436 = vld [vmem:[%s418 + $0x4] sm:$0x1]
        %v437 = vld [vmem:[%s418 + $0xc] sm:$0x1]
        %v438 = vld [vmem:[%s418 + $0x14] sm:$0x1]
        %v439 = vld [vmem:[%s418 + $0x1c] sm:$0x1]
        %v440 = vld [vmem:[%s418 + $0x24] sm:$0x1]
        %v441 = vld [vmem:[%s418 + $0x2c] sm:$0x1]
        %v442 = vld [vmem:[%s418 + $0x34] sm:$0x1]
        %v443 = vld [vmem:[%s418 + $0x3c] sm:$0x1]
        %v445 = vshrl.u32 %v419, 16
        %v447 = vrot.slane %v445, 4
        %v448 = vshll.u32 %v419, 16
        %v450 = vrot.slane %v448, 5
        %v451 = vor.u32 %v447, %v450
        %v452 = vrot.slane %v451, 4
        %v454 = vshll.u32 %v436, 16
        %v456 = vrot.slane %v454, 5
        %v457 = vsel %vm305, %v452, %v456
        %v459 = vshrl.u32 %v420, 16
        %v461 = vrot.slane %v459, 4
        %v462 = vshll.u32 %v420, 16
        %v464 = vrot.slane %v462, 5
        %v465 = vor.u32 %v461, %v464
        %v466 = vrot.slane %v465, 4
        %v468 = vshll.u32 %v437, 16
        %v470 = vrot.slane %v468, 5
        %v471 = vsel %vm305, %v466, %v470
        %v473 = vshrl.u32 %v421, 16
        %v475 = vrot.slane %v473, 4
        %v476 = vshll.u32 %v421, 16
        %v478 = vrot.slane %v476, 5
        %v479 = vor.u32 %v475, %v478
        %v480 = vrot.slane %v479, 4
        %v482 = vshll.u32 %v438, 16
        %v484 = vrot.slane %v482, 5
        %v485 = vsel %vm305, %v480, %v484
        %v487 = vshrl.u32 %v422, 16
        %v489 = vrot.slane %v487, 4
        %v490 = vshll.u32 %v422, 16
        %v492 = vrot.slane %v490, 5
        %v493 = vor.u32 %v489, %v492
        %v494 = vrot.slane %v493, 4
        %v496 = vshll.u32 %v439, 16
        %v498 = vrot.slane %v496, 5
        %v499 = vsel %vm305, %v494, %v498
        %v501 = vshrl.u32 %v423, 16
        %v503 = vrot.slane %v501, 4
        %v504 = vshll.u32 %v423, 16
        %v506 = vrot.slane %v504, 5
        %v507 = vor.u32 %v503, %v506
        %v508 = vrot.slane %v507, 4
        %v510 = vshll.u32 %v440, 16
        %v512 = vrot.slane %v510, 5
        %v513 = vsel %vm305, %v508, %v512
        %v515 = vshrl.u32 %v424, 16
        %v517 = vrot.slane %v515, 4
        %v518 = vshll.u32 %v424, 16
        %v520 = vrot.slane %v518, 5
        %v521 = vor.u32 %v517, %v520
        %v522 = vrot.slane %v521, 4
        %v524 = vshll.u32 %v441, 16
        %v526 = vrot.slane %v524, 5
        %v527 = vsel %vm305, %v522, %v526
        %v529 = vshrl.u32 %v425, 16
        %v531 = vrot.slane %v529, 4
        %v532 = vshll.u32 %v425, 16
        %v534 = vrot.slane %v532, 5
        %v535 = vor.u32 %v531, %v534
        %v536 = vrot.slane %v535, 4
        %v538 = vshll.u32 %v442, 16
        %v540 = vrot.slane %v538, 5
        %v541 = vsel %vm305, %v536, %v540
        %v543 = vshrl.u32 %v426, 16
        %v545 = vrot.slane %v543, 4
        %v546 = vshll.u32 %v426, 16
        %v548 = vrot.slane %v546, 5
        %v549 = vor.u32 %v545, %v548
        %v550 = vrot.slane %v549, 4
        %v552 = vshll.u32 %v443, 16
        %v554 = vrot.slane %v552, 5
        %v555 = vsel %vm305, %v550, %v554
        %s556 = scalar_lea.vmem %s276, 8
        %v557 = vld [vmem:[%s556] sm:$0xf]
        %v558 = vld [vmem:[%s556 + $0x8] sm:$0xf]
        %v559 = vld [vmem:[%s556 + $0x10] sm:$0xf]
        %v560 = vld [vmem:[%s556 + $0x18] sm:$0xf]
        %v561 = vld [vmem:[%s556 + $0x20] sm:$0xf]
        %v562 = vld [vmem:[%s556 + $0x28] sm:$0xf]
        %v563 = vld [vmem:[%s556 + $0x30] sm:$0xf]
        %v564 = vld [vmem:[%s556 + $0x38] sm:$0xf]
        %s565 = scalar_lea.vmem %s276, 80
        %v566 = vld [vmem:[%s565] sm:$0xf]
        %v567 = vld [vmem:[%s565 + $0x8] sm:$0xf]
        %v568 = vld [vmem:[%s565 + $0x10] sm:$0xf]
        %v569 = vld [vmem:[%s565 + $0x18] sm:$0xf]
        %v570 = vld [vmem:[%s565 + $0x20] sm:$0xf]
        %v571 = vld [vmem:[%s565 + $0x28] sm:$0xf]
        %v572 = vld [vmem:[%s565 + $0x30] sm:$0xf]
        %v573 = vld [vmem:[%s565 + $0x38] sm:$0xf]
        %v574 = vld [vmem:[%s556 + $0x4] sm:$0x1]
        %v575 = vld [vmem:[%s556 + $0xc] sm:$0x1]
        %v576 = vld [vmem:[%s556 + $0x14] sm:$0x1]
        %v577 = vld [vmem:[%s556 + $0x1c] sm:$0x1]
        %v578 = vld [vmem:[%s556 + $0x24] sm:$0x1]
        %v579 = vld [vmem:[%s556 + $0x2c] sm:$0x1]
        %v580 = vld [vmem:[%s556 + $0x34] sm:$0x1]
        %v581 = vld [vmem:[%s556 + $0x3c] sm:$0x1]
        %v583 = vshrl.u32 %v557, 16
        %v585 = vrot.slane %v583, 4
        %v586 = vshll.u32 %v557, 16
        %v588 = vrot.slane %v586, 5
        %v589 = vor.u32 %v585, %v588
        %v590 = vrot.slane %v589, 4
        %v592 = vshll.u32 %v574, 16
        %v594 = vrot.slane %v592, 5
        %v595 = vsel %vm305, %v590, %v594
        %v597 = vshrl.u32 %v558, 16
        %v599 = vrot.slane %v597, 4
        %v600 = vshll.u32 %v558, 16
        %v602 = vrot.slane %v600, 5
        %v603 = vor.u32 %v599, %v602
        %v604 = vrot.slane %v603, 4
        %v606 = vshll.u32 %v575, 16
        %v608 = vrot.slane %v606, 5
        %v609 = vsel %vm305, %v604, %v608
        %v611 = vshrl.u32 %v559, 16
        %v613 = vrot.slane %v611, 4
        %v614 = vshll.u32 %v559, 16
        %v616 = vrot.slane %v614, 5
        %v617 = vor.u32 %v613, %v616
        %v618 = vrot.slane %v617, 4
        %v620 = vshll.u32 %v576, 16
        %v622 = vrot.slane %v620, 5
        %v623 = vsel %vm305, %v618, %v622
        %v625 = vshrl.u32 %v560, 16
        %v627 = vrot.slane %v625, 4
        %v628 = vshll.u32 %v560, 16
        %v630 = vrot.slane %v628, 5
        %v631 = vor.u32 %v627, %v630
        %v632 = vrot.slane %v631, 4
        %v634 = vshll.u32 %v577, 16
        %v636 = vrot.slane %v634, 5
        %v637 = vsel %vm305, %v632, %v636
        %v639 = vshrl.u32 %v561, 16
        %v641 = vrot.slane %v639, 4
        %v642 = vshll.u32 %v561, 16
        %v644 = vrot.slane %v642, 5
        %v645 = vor.u32 %v641, %v644
        %v646 = vrot.slane %v645, 4
        %v648 = vshll.u32 %v578, 16
        %v650 = vrot.slane %v648, 5
        %v651 = vsel %vm305, %v646, %v650
        %v653 = vshrl.u32 %v562, 16
        %v655 = vrot.slane %v653, 4
        %v656 = vshll.u32 %v562, 16
        %v658 = vrot.slane %v656, 5
        %v659 = vor.u32 %v655, %v658
        %v660 = vrot.slane %v659, 4
        %v662 = vshll.u32 %v579, 16
        %v664 = vrot.slane %v662, 5
        %v665 = vsel %vm305, %v660, %v664
        %v667 = vshrl.u32 %v563, 16
        %v669 = vrot.slane %v667, 4
        %v670 = vshll.u32 %v563, 16
        %v672 = vrot.slane %v670, 5
        %v673 = vor.u32 %v669, %v672
        %v674 = vrot.slane %v673, 4
        %v676 = vshll.u32 %v580, 16
        %v678 = vrot.slane %v676, 5
        %v679 = vsel %vm305, %v674, %v678
        %v681 = vshrl.u32 %v564, 16
        %v683 = vrot.slane %v681, 4
        %v684 = vshll.u32 %v564, 16
        %v686 = vrot.slane %v684, 5
        %v687 = vor.u32 %v683, %v686
        %v688 = vrot.slane %v687, 4
        %v690 = vshll.u32 %v581, 16
        %v692 = vrot.slane %v690, 5
        %v693 = vsel %vm305, %v688, %v692
        %v702 = vunpack.c.l.b16 %v278
        %v703 = vunpack.c.l.b16 %v279
        %v704 = vunpack.c.l.b16 %v280
        %v705 = vunpack.c.l.b16 %v281
        %v706 = vunpack.c.l.b16 %v282
        %v707 = vunpack.c.l.b16 %v283
        %v708 = vunpack.c.l.b16 %v284
        %v709 = vunpack.c.l.b16 %v285
        %v710 = vpack.c.b16 %v703, %v702
        %v711 = vpack.c.b16 %v705, %v704
        %v712 = vpack.c.b16 %v707, %v706
        %v713 = vpack.c.b16 %v709, %v708
        %v722 = vunpack.c.l.b16 %v287
        %v723 = vunpack.c.l.b16 %v288
        %v724 = vunpack.c.l.b16 %v289
        %v725 = vunpack.c.l.b16 %v290
        %v726 = vunpack.c.l.b16 %v291
        %v727 = vunpack.c.l.b16 %v292
        %v728 = vunpack.c.l.b16 %v293
        %v729 = vunpack.c.l.b16 %v294
        %v730 = vpack.c.b16 %v723, %v722
        %v731 = vpack.c.b16 %v725, %v724
        %v732 = vpack.c.b16 %v727, %v726
        %v733 = vpack.c.b16 %v729, %v728
        %734 = vrot.lane.b32.xlu0 %v730, 8
        %v735 = vpop.permute.xlu0 %734
        %736 = vrot.lane.b32.xlu0 %v731, 8
        %v737 = vpop.permute.xlu0 %736
        %738 = vrot.lane.b32.xlu0 %v732, 8
        %v739 = vpop.permute.xlu0 %738
        %740 = vrot.lane.b32.xlu0 %v733, 8
        %v741 = vpop.permute.xlu0 %740
        %v742 = vunpack.c.l.b16 %v319
        %v743 = vunpack.c.l.b16 %v333
        %v744 = vunpack.c.l.b16 %v347
        %v745 = vunpack.c.l.b16 %v361
        %v746 = vunpack.c.l.b16 %v375
        %v747 = vunpack.c.l.b16 %v389
        %v748 = vunpack.c.l.b16 %v403
        %v749 = vunpack.c.l.b16 %v417
        %v750 = vpack.c.b16 %v743, %v742
        %v751 = vpack.c.b16 %v745, %v744
        %v752 = vpack.c.b16 %v747, %v746
        %v753 = vpack.c.b16 %v749, %v748
        %754 = vrot.lane.b32.xlu0 %v750, 16
        %v755 = vpop.permute.xlu0 %754
        %756 = vrot.lane.b32.xlu0 %v751, 16
        %v757 = vpop.permute.xlu0 %756
        %758 = vrot.lane.b32.xlu0 %v752, 16
        %v759 = vpop.permute.xlu0 %758
        %760 = vrot.lane.b32.xlu0 %v753, 16
        %v761 = vpop.permute.xlu0 %760
        %v770 = vunpack.c.l.b16 %v419
        %v771 = vunpack.c.l.b16 %v420
        %v772 = vunpack.c.l.b16 %v421
        %v773 = vunpack.c.l.b16 %v422
        %v774 = vunpack.c.l.b16 %v423
        %v775 = vunpack.c.l.b16 %v424
        %v776 = vunpack.c.l.b16 %v425
        %v777 = vunpack.c.l.b16 %v426
        %v778 = vpack.c.b16 %v771, %v770
        %v779 = vpack.c.b16 %v773, %v772
        %v780 = vpack.c.b16 %v775, %v774
        %v781 = vpack.c.b16 %v777, %v776
        %782 = vrot.lane.b32.xlu0 %v778, 24
        %v783 = vpop.permute.xlu0 %782
        %784 = vrot.lane.b32.xlu0 %v779, 24
        %v785 = vpop.permute.xlu0 %784
        %786 = vrot.lane.b32.xlu0 %v780, 24
        %v787 = vpop.permute.xlu0 %786
        %788 = vrot.lane.b32.xlu0 %v781, 24
        %v789 = vpop.permute.xlu0 %788
        %v798 = vunpack.c.l.b16 %v428
        %v799 = vunpack.c.l.b16 %v429
        %v800 = vunpack.c.l.b16 %v430
        %v801 = vunpack.c.l.b16 %v431
        %v802 = vunpack.c.l.b16 %v432
        %v803 = vunpack.c.l.b16 %v433
        %v804 = vunpack.c.l.b16 %v434
        %v805 = vunpack.c.l.b16 %v435
        %v806 = vpack.c.b16 %v799, %v798
        %v807 = vpack.c.b16 %v801, %v800
        %v808 = vpack.c.b16 %v803, %v802
        %v809 = vpack.c.b16 %v805, %v804
        %810 = vrot.lane.b32.xlu0 %v806, 32
        %v811 = vpop.permute.xlu0 %810
        %812 = vrot.lane.b32.xlu0 %v807, 32
        %v813 = vpop.permute.xlu0 %812
        %814 = vrot.lane.b32.xlu0 %v808, 32
        %v815 = vpop.permute.xlu0 %814
        %816 = vrot.lane.b32.xlu0 %v809, 32
        %v817 = vpop.permute.xlu0 %816
        %v818 = vunpack.c.l.b16 %v457
        %v819 = vunpack.c.l.b16 %v471
        %v820 = vunpack.c.l.b16 %v485
        %v821 = vunpack.c.l.b16 %v499
        %v822 = vunpack.c.l.b16 %v513
        %v823 = vunpack.c.l.b16 %v527
        %v824 = vunpack.c.l.b16 %v541
        %v825 = vunpack.c.l.b16 %v555
        %v826 = vpack.c.b16 %v819, %v818
        %v827 = vpack.c.b16 %v821, %v820
        %v828 = vpack.c.b16 %v823, %v822
        %v829 = vpack.c.b16 %v825, %v824
        %830 = vrot.lane.b32.xlu0 %v826, 40
        %v831 = vpop.permute.xlu0 %830
        %832 = vrot.lane.b32.xlu0 %v827, 40
        %v833 = vpop.permute.xlu0 %832
        %834 = vrot.lane.b32.xlu0 %v828, 40
        %v835 = vpop.permute.xlu0 %834
        %836 = vrot.lane.b32.xlu0 %v829, 40
        %v837 = vpop.permute.xlu0 %836
        %v846 = vunpack.c.l.b16 %v557
        %v847 = vunpack.c.l.b16 %v558
        %v848 = vunpack.c.l.b16 %v559
        %v849 = vunpack.c.l.b16 %v560
        %v850 = vunpack.c.l.b16 %v561
        %v851 = vunpack.c.l.b16 %v562
        %v852 = vunpack.c.l.b16 %v563
        %v853 = vunpack.c.l.b16 %v564
        %v854 = vpack.c.b16 %v847, %v846
        %v855 = vpack.c.b16 %v849, %v848
        %v856 = vpack.c.b16 %v851, %v850
        %v857 = vpack.c.b16 %v853, %v852
        %858 = vrot.lane.b32.xlu0 %v854, 48
        %v859 = vpop.permute.xlu0 %858
        %860 = vrot.lane.b32.xlu0 %v855, 48
        %v861 = vpop.permute.xlu0 %860
        %862 = vrot.lane.b32.xlu0 %v856, 48
        %v863 = vpop.permute.xlu0 %862
        %864 = vrot.lane.b32.xlu0 %v857, 48
        %v865 = vpop.permute.xlu0 %864
        %v874 = vunpack.c.l.b16 %v566
        %v875 = vunpack.c.l.b16 %v567
        %v876 = vunpack.c.l.b16 %v568
        %v877 = vunpack.c.l.b16 %v569
        %v878 = vunpack.c.l.b16 %v570
        %v879 = vunpack.c.l.b16 %v571
        %v880 = vunpack.c.l.b16 %v572
        %v881 = vunpack.c.l.b16 %v573
        %v882 = vpack.c.b16 %v875, %v874
        %v883 = vpack.c.b16 %v877, %v876
        %v884 = vpack.c.b16 %v879, %v878
        %v885 = vpack.c.b16 %v881, %v880
        %886 = vrot.lane.b32.xlu0 %v882, 56
        %v887 = vpop.permute.xlu0 %886
        %888 = vrot.lane.b32.xlu0 %v883, 56
        %v889 = vpop.permute.xlu0 %888
        %890 = vrot.lane.b32.xlu0 %v884, 56
        %v891 = vpop.permute.xlu0 %890
        %892 = vrot.lane.b32.xlu0 %v885, 56
        %v893 = vpop.permute.xlu0 %892
        %v894 = vunpack.c.l.b16 %v595
        %v895 = vunpack.c.l.b16 %v609
        %v896 = vunpack.c.l.b16 %v623
        %v897 = vunpack.c.l.b16 %v637
        %v898 = vunpack.c.l.b16 %v651
        %v899 = vunpack.c.l.b16 %v665
        %v900 = vunpack.c.l.b16 %v679
        %v901 = vunpack.c.l.b16 %v693
        %v902 = vpack.c.b16 %v895, %v894
        %v903 = vpack.c.b16 %v897, %v896
        %v904 = vpack.c.b16 %v899, %v898
        %v905 = vpack.c.b16 %v901, %v900
        %906 = vrot.lane.b32.xlu0 %v902, 64
        %v907 = vpop.permute.xlu0 %906
        %908 = vrot.lane.b32.xlu0 %v903, 64
        %v909 = vpop.permute.xlu0 %908
        %910 = vrot.lane.b32.xlu0 %v904, 64
        %v911 = vpop.permute.xlu0 %910
        %912 = vrot.lane.b32.xlu0 %v905, 64
        %v913 = vpop.permute.xlu0 %912
        %vm914 = vcmask 64512
        %v917 = vsel %vm914, %v710, %v735
        %v920 = vsel %vm914, %v711, %v737
        %v923 = vsel %vm914, %v712, %v739
        %v926 = vsel %vm914, %v713, %v741
        %vm927 = vcmask 130048
        %v929 = vsel %vm927, %v917, %v755
        %v931 = vsel %vm927, %v920, %v757
        %v933 = vsel %vm927, %v923, %v759
        %v935 = vsel %vm927, %v926, %v761
        %vm936 = vcmask 195584
        %v938 = vsel %vm936, %v929, %v783
        %v940 = vsel %vm936, %v931, %v785
        %v942 = vsel %vm936, %v933, %v787
        %v944 = vsel %vm936, %v935, %v789
        %vm945 = vcmask 261120
        %v947 = vsel %vm945, %v938, %v811
        %v949 = vsel %vm945, %v940, %v813
        %v951 = vsel %vm945, %v942, %v815
        %v953 = vsel %vm945, %v944, %v817
        %vm954 = vcmask 326656
        %v956 = vsel %vm954, %v947, %v831
        %v958 = vsel %vm954, %v949, %v833
        %v960 = vsel %vm954, %v951, %v835
        %v962 = vsel %vm954, %v953, %v837
        %vm963 = vcmask 392192
        %v965 = vsel %vm963, %v956, %v859
        %v967 = vsel %vm963, %v958, %v861
        %v969 = vsel %vm963, %v960, %v863
        %v971 = vsel %vm963, %v962, %v865
        %vm972 = vcmask 457728
        %v974 = vsel %vm972, %v965, %v887
        %v976 = vsel %vm972, %v967, %v889
        %v978 = vsel %vm972, %v969, %v891
        %v980 = vsel %vm972, %v971, %v893
        %vm981 = vcmask 523264
        %v983 = vsel %vm981, %v974, %v907
        %v985 = vsel %vm981, %v976, %v909
        %v987 = vsel %vm981, %v978, %v911
        %v989 = vsel %vm981, %v980, %v913
        %v990 = vld [vmem:[%s1] sm:$0xf]
        %v991 = vld [vmem:[%s1 + $0x4] sm:$0xf]
        %v992 = vld [vmem:[%s1 + $0x8] sm:$0xf]
        %v993 = vld [vmem:[%s1 + $0xc] sm:$0xf]
        %v994 = vld [vmem:[%s1 + $0x10] sm:$0xf]
        %v995 = vld [vmem:[%s1 + $0x14] sm:$0xf]
        %v996 = vld [vmem:[%s1 + $0x18] sm:$0xf]
        %v997 = vld [vmem:[%s1 + $0x1c] sm:$0xf]
        %v998 = vld [vmem:[%s1 + $0x20] sm:$0xf]
        %v1008 = vunpack.c.l.b16 %v990
        %v1009 = vunpack.c.l.b16 %v991
        %v1010 = vunpack.c.l.b16 %v992
        %v1011 = vunpack.c.l.b16 %v993
        %v1012 = vunpack.c.l.b16 %v994
        %v1013 = vunpack.c.l.b16 %v995
        %v1014 = vunpack.c.l.b16 %v996
        %v1015 = vunpack.c.l.b16 %v997
        %v1016 = vunpack.c.l.b16 %v998
        %v1017 = vpack.c.b16 %v1009, %v1008
        %v1018 = vpack.c.b16 %v1011, %v1010
        %v1019 = vpack.c.b16 %v1013, %v1012
        %v1020 = vpack.c.b16 %v1015, %v1014
        %v1021 = vpack.c.b16 %v1016, %v1016
        %vm1026 = vcmask 588800
        %v1027 = vsel %vm1026, %v983, 0
        %v1029 = vsel %vm1026, %v985, 0
        %v1031 = vsel %vm1026, %v987, 0
        %v1033 = vsel %vm1026, %v989, 0
        %vm1035 = vcmask 1043456
        %v1037 = vsel %vm1035, %v1021, 0
        %1039 = vmatprep.subr.bf16.mxu0 0
        %1040 = vmatpush1.bf16.msra.mxu0 0
        %1041 = vmatprep.subr.bf16.mxu0 0
        %1042 = vmatpush1.bf16.msra.mxu0 0
        %1043 = vmatprep.subr.bf16.mxu0 0
        %1044 = vmatpush1.bf16.msra.mxu0 0
        %1045 = vmatprep.subr.bf16.mxu0 0
        %1046 = vmatpush1.bf16.msra.mxu0 %v1037
        %1047 = vmatprep.subr.bf16.mxu0 0
        %1048 = vmatpush1.bf16.msra.mxu0 %v1020
        %1049 = vmatprep.subr.bf16.mxu0 0
        %1050 = vmatpush1.bf16.msra.mxu0 %v1019
        %1051 = vmatprep.subr.bf16.mxu0 0
        %1052 = vmatpush1.bf16.msra.mxu0 %v1018
        %1053 = vmatprep.subr.bf16.mxu0 0
        %1054 = vmatpush1.bf16.msra.mxu0 %v1017
        %1055 = vmatprep.subr.bf16.mxu0 0
        %1056 = vmatpush2.bf16.msra.mxu0 0
        %1057 = vmatprep.subr.bf16.mxu0 0
        %1058 = vmatpush2.bf16.msra.mxu0 0
        %1059 = vmatprep.subr.bf16.mxu0 0
        %1060 = vmatpush2.bf16.msra.mxu0 0
        %1061 = vmatprep.subr.bf16.mxu0 0
        %1062 = vmatpush2.bf16.msra.mxu0 0
        %1063 = vmatprep.subr.bf16.mxu0 0
        %1064 = vmatpush2.bf16.msra.mxu0 0
        %1065 = vmatprep.subr.bf16.mxu0 0
        %1066 = vmatpush2.bf16.msra.mxu0 0
        %1067 = vmatprep.subr.bf16.mxu0 0
        %1068 = vmatpush2.bf16.msra.mxu0 0
        %1069 = vmatprep.subr.bf16.mxu0 0
        %1070 = vmatpush2.bf16.msra.mxu0 0
        %1071 = vmatprep.mubr.bf16.mxu0 0
        %1072 = vmatmul.mubr.bf16.gmra.mxu0 %v1027
        %v1073 = vpop.f32.mrf.mxu0
        %v1074 = vadd.f32 0.0, %v1073
        %v1075 = vpop.f32.mrf.mxu0
        %v1076 = vpop.f32.mrf.mxu0
        %v1077 = vadd.f32 0.0, %v1076
        %v1078 = vpop.f32.mrf.mxu0
        %1079 = vmatprep.mubr.bf16.mxu0 0
        %1080 = vmatmul.mubr.bf16.gmra.mxu0 %v1029
        %v1081 = vpop.f32.mrf.mxu0
        %v1082 = vadd.f32 0.0, %v1081
        %v1083 = vpop.f32.mrf.mxu0
        %v1084 = vpop.f32.mrf.mxu0
        %v1085 = vadd.f32 0.0, %v1084
        %v1086 = vpop.f32.mrf.mxu0
        %1087 = vmatprep.mubr.bf16.mxu0 0
        %1088 = vmatmul.mubr.bf16.gmra.mxu0 %v1031
        %v1089 = vpop.f32.mrf.mxu0
        %v1090 = vadd.f32 0.0, %v1089
        %v1091 = vpop.f32.mrf.mxu0
        %v1092 = vpop.f32.mrf.mxu0
        %v1093 = vadd.f32 0.0, %v1092
        %v1094 = vpop.f32.mrf.mxu0
        %1095 = vmatprep.mubr.bf16.mxu0 0
        %1096 = vmatmul.mubr.bf16.gmra.mxu0 %v1033
        %v1097 = vpop.f32.mrf.mxu0
        %v1098 = vadd.f32 0.0, %v1097
        %v1099 = vpop.f32.mrf.mxu0
        %v1100 = vpop.f32.mrf.mxu0
        %v1101 = vadd.f32 0.0, %v1100
        %v1102 = vpop.f32.mrf.mxu0
        %1103 = vdwg.mxu0
        %v1104 = vld [vmem:[%s2] sm:$0x1]
        %v1106 = vlaneseq
        %v1107 = vshrl.u32 %v1106, 7
        %v1108 = vsub.s32 0, %v1107
        %v1109 = vrot.slane %v1104, %v1108
        %v1111 = vmul.f32 %v1074, %v1109
        %v1112 = vmul.f32 %v1077, %v1109
        %v1113 = vmul.f32 %v1082, %v1109
        %v1114 = vmul.f32 %v1085, %v1109
        %v1115 = vmul.f32 %v1090, %v1109
        %v1116 = vmul.f32 %v1093, %v1109
        %v1117 = vmul.f32 %v1098, %v1109
        %v1118 = vmul.f32 %v1101, %v1109
        %v1119 = vld [vmem:[%s3] sm:$0x1]
        %v1121 = vlaneseq
        %v1122 = vshrl.u32 %v1121, 7
        %v1123 = vsub.s32 0, %v1122
        %v1124 = vrot.slane %v1119, %v1123
        %v1126 = vadd.f32 %v1111, %v1124
        %v1127 = vadd.f32 %v1112, %v1124
        %v1128 = vadd.f32 %v1113, %v1124
        %v1129 = vadd.f32 %v1114, %v1124
        %v1130 = vadd.f32 %v1115, %v1124
        %v1131 = vadd.f32 %v1116, %v1124
        %v1132 = vadd.f32 %v1117, %v1124
        %v1133 = vadd.f32 %v1118, %v1124
        %v1134 = vmax.f32 %v1126, 0.0
        %v1135 = vmax.f32 %v1127, 0.0
        %v1136 = vmax.f32 %v1128, 0.0
        %v1137 = vmax.f32 %v1129, 0.0
        %v1138 = vmax.f32 %v1130, 0.0
        %v1139 = vmax.f32 %v1131, 0.0
        %v1140 = vmax.f32 %v1132, 0.0
        %v1141 = vmax.f32 %v1133, 0.0
        %vm1142 = vcmask 125952
        %1143 = vst.msk [vmem:[#allocation2] sm:$0xf] %vm1142, 0
        %1144 = vst.msk [vmem:[#allocation2 + $0x4] sm:$0xf] %vm1142, 0
        %s1145 = scalar_lea.vmem [#allocation2], 72
        %1146 = vst.msk [vmem:[%s1145] sm:$0xf] %vm1142, 0
        %1147 = vst.msk [vmem:[%s1145 + $0x4] sm:$0xf] %vm1142, 0
        %s1148 = scalar_lea.vmem [#allocation2], 8
        %vm1149 = vcmask 122880
        %vm1150 = vsmask.f32 256
        %vm1151 = vmand %vm1149, %vm1150
        %v1152 = vld [vmem:[%s1148] sm:$0x1]
        %v1153 = vsel %vm1151, 0, %v1152
        %1154 = vst [vmem:[%s1148] sm:$0x1] %v1153
        %v1155 = vld [vmem:[%s1148 + $0x8] sm:$0x1]
        %v1156 = vsel %vm1151, 0, %v1155
        %1157 = vst [vmem:[%s1148 + $0x8] sm:$0x1] %v1156
        %v1158 = vld [vmem:[%s1148 + $0x10] sm:$0x1]
        %v1159 = vsel %vm1151, 0, %v1158
        %1160 = vst [vmem:[%s1148 + $0x10] sm:$0x1] %v1159
        %v1161 = vld [vmem:[%s1148 + $0x18] sm:$0x1]
        %v1162 = vsel %vm1151, 0, %v1161
        %1163 = vst [vmem:[%s1148 + $0x18] sm:$0x1] %v1162
        %v1164 = vld [vmem:[%s1148 + $0x20] sm:$0x1]
        %v1165 = vsel %vm1151, 0, %v1164
        %1166 = vst [vmem:[%s1148 + $0x20] sm:$0x1] %v1165
        %v1167 = vld [vmem:[%s1148 + $0x28] sm:$0x1]
        %v1168 = vsel %vm1151, 0, %v1167
        %1169 = vst [vmem:[%s1148 + $0x28] sm:$0x1] %v1168
        %v1170 = vld [vmem:[%s1148 + $0x30] sm:$0x1]
        %v1171 = vsel %vm1151, 0, %v1170
        %1172 = vst [vmem:[%s1148 + $0x30] sm:$0x1] %v1171
        %v1173 = vld [vmem:[%s1148 + $0x38] sm:$0x1]
        %v1174 = vsel %vm1151, 0, %v1173
        %1175 = vst [vmem:[%s1148 + $0x38] sm:$0x1] %v1174
        %vm1176 = vsmask.f32 7938
        %vm1177 = vmand %vm1149, %vm1176
        %v1178 = vld [vmem:[%s1148 + $0x4] sm:$0x1]
        %v1179 = vsel %vm1177, 0, %v1178
        %1180 = vst [vmem:[%s1148 + $0x4] sm:$0x1] %v1179
        %v1181 = vld [vmem:[%s1148 + $0xc] sm:$0x1]
        %v1182 = vsel %vm1177, 0, %v1181
        %1183 = vst [vmem:[%s1148 + $0xc] sm:$0x1] %v1182
        %v1184 = vld [vmem:[%s1148 + $0x14] sm:$0x1]
        %v1185 = vsel %vm1177, 0, %v1184
        %1186 = vst [vmem:[%s1148 + $0x14] sm:$0x1] %v1185
        %v1187 = vld [vmem:[%s1148 + $0x1c] sm:$0x1]
        %v1188 = vsel %vm1177, 0, %v1187
        %1189 = vst [vmem:[%s1148 + $0x1c] sm:$0x1] %v1188
        %v1190 = vld [vmem:[%s1148 + $0x24] sm:$0x1]
        %v1191 = vsel %vm1177, 0, %v1190
        %1192 = vst [vmem:[%s1148 + $0x24] sm:$0x1] %v1191
        %v1193 = vld [vmem:[%s1148 + $0x2c] sm:$0x1]
        %v1194 = vsel %vm1177, 0, %v1193
        %1195 = vst [vmem:[%s1148 + $0x2c] sm:$0x1] %v1194
        %v1196 = vld [vmem:[%s1148 + $0x34] sm:$0x1]
        %v1197 = vsel %vm1177, 0, %v1196
        %1198 = vst [vmem:[%s1148 + $0x34] sm:$0x1] %v1197
        %v1199 = vld [vmem:[%s1148 + $0x3c] sm:$0x1]
        %v1200 = vsel %vm1177, 0, %v1199
        %1201 = vst [vmem:[%s1148 + $0x3c] sm:$0x1] %v1200
        %v1202 = vpack.c.bf16 %v1134, %v1134
        %v1203 = vpack.c.bf16 %v1135, %v1135
        %v1204 = vpack.c.bf16 %v1136, %v1136
        %v1205 = vpack.c.bf16 %v1137, %v1137
        %v1206 = vpack.c.bf16 %v1138, %v1138
        %v1207 = vpack.c.bf16 %v1139, %v1139
        %v1208 = vpack.c.bf16 %v1140, %v1140
        %v1209 = vpack.c.bf16 %v1141, %v1141
        %v1218 = vunpack.c.l.b16 %v1202
        %v1219 = vunpack.c.l.b16 %v1203
        %v1220 = vunpack.c.l.b16 %v1204
        %v1221 = vunpack.c.l.b16 %v1205
        %v1222 = vunpack.c.l.b16 %v1206
        %v1223 = vunpack.c.l.b16 %v1207
        %v1224 = vunpack.c.l.b16 %v1208
        %v1225 = vunpack.c.l.b16 %v1209
        %v1226 = vpack.c.b16 %v1218, %v1218
        %v1227 = vpack.c.b16 %v1219, %v1219
        %v1228 = vpack.c.b16 %v1220, %v1220
        %v1229 = vpack.c.b16 %v1221, %v1221
        %v1230 = vpack.c.b16 %v1222, %v1222
        %v1231 = vpack.c.b16 %v1223, %v1223
        %v1232 = vpack.c.b16 %v1224, %v1224
        %v1233 = vpack.c.b16 %v1225, %v1225
        %v1235 = vshrl.u32 %v1226, 16
        %v1237 = vrot.slane %v1235, 7
        %v1238 = vshll.u32 %v1226, 16
        %v1240 = vor.u32 %v1237, %v1238
        %v1241 = vrot.slane %v1237, 4
        %v1243 = vshrl.u32 %v1227, 16
        %v1245 = vrot.slane %v1243, 7
        %v1246 = vshll.u32 %v1227, 16
        %v1248 = vor.u32 %v1245, %v1246
        %v1249 = vrot.slane %v1245, 4
        %v1251 = vshrl.u32 %v1228, 16
        %v1253 = vrot.slane %v1251, 7
        %v1254 = vshll.u32 %v1228, 16
        %v1256 = vor.u32 %v1253, %v1254
        %v1257 = vrot.slane %v1253, 4
        %v1259 = vshrl.u32 %v1229, 16
        %v1261 = vrot.slane %v1259, 7
        %v1262 = vshll.u32 %v1229, 16
        %v1264 = vor.u32 %v1261, %v1262
        %v1265 = vrot.slane %v1261, 4
        %v1267 = vshrl.u32 %v1230, 16
        %v1269 = vrot.slane %v1267, 7
        %v1270 = vshll.u32 %v1230, 16
        %v1272 = vor.u32 %v1269, %v1270
        %v1273 = vrot.slane %v1269, 4
        %v1275 = vshrl.u32 %v1231, 16
        %v1277 = vrot.slane %v1275, 7
        %v1278 = vshll.u32 %v1231, 16
        %v1280 = vor.u32 %v1277, %v1278
        %v1281 = vrot.slane %v1277, 4
        %v1283 = vshrl.u32 %v1232, 16
        %v1285 = vrot.slane %v1283, 7
        %v1286 = vshll.u32 %v1232, 16
        %v1288 = vor.u32 %v1285, %v1286
        %v1289 = vrot.slane %v1285, 4
        %v1291 = vshrl.u32 %v1233, 16
        %v1293 = vrot.slane %v1291, 7
        %v1294 = vshll.u32 %v1233, 16
        %v1296 = vor.u32 %v1293, %v1294
        %v1297 = vrot.slane %v1293, 4
        %vm1314 = vcmask 125952
        %vm1315 = vmand %vm1314, %vm1176
        %v1316 = vld [vmem:[%s1148] sm:$0xf]
        %v1317 = vsel %vm1315, %v1240, %v1316
        %1318 = vst [vmem:[%s1148] sm:$0xf] %v1317
        %v1319 = vld [vmem:[%s1148 + $0x4] sm:$0x1]
        %v1320 = vsel %vm1151, %v1241, %v1319
        %1321 = vst [vmem:[%s1148 + $0x4] sm:$0x1] %v1320
        %v1322 = vld [vmem:[%s1148 + $0x8] sm:$0xf]
        %v1323 = vsel %vm1315, %v1248, %v1322
        %1324 = vst [vmem:[%s1148 + $0x8] sm:$0xf] %v1323
        %v1325 = vld [vmem:[%s1148 + $0xc] sm:$0x1]
        %v1326 = vsel %vm1151, %v1249, %v1325
        %1327 = vst [vmem:[%s1148 + $0xc] sm:$0x1] %v1326
        %v1328 = vld [vmem:[%s1148 + $0x10] sm:$0xf]
        %v1329 = vsel %vm1315, %v1256, %v1328
        %1330 = vst [vmem:[%s1148 + $0x10] sm:$0xf] %v1329
        %v1331 = vld [vmem:[%s1148 + $0x14] sm:$0x1]
        %v1332 = vsel %vm1151, %v1257, %v1331
        %1333 = vst [vmem:[%s1148 + $0x14] sm:$0x1] %v1332
        %v1334 = vld [vmem:[%s1148 + $0x18] sm:$0xf]
        %v1335 = vsel %vm1315, %v1264, %v1334
        %1336 = vst [vmem:[%s1148 + $0x18] sm:$0xf] %v1335
        %v1337 = vld [vmem:[%s1148 + $0x1c] sm:$0x1]
        %v1338 = vsel %vm1151, %v1265, %v1337
        %1339 = vst [vmem:[%s1148 + $0x1c] sm:$0x1] %v1338
        %v1340 = vld [vmem:[%s1148 + $0x20] sm:$0xf]
        %v1341 = vsel %vm1315, %v1272, %v1340
        %1342 = vst [vmem:[%s1148 + $0x20] sm:$0xf] %v1341
        %v1343 = vld [vmem:[%s1148 + $0x24] sm:$0x1]
        %v1344 = vsel %vm1151, %v1273, %v1343
        %1345 = vst [vmem:[%s1148 + $0x24] sm:$0x1] %v1344
        %v1346 = vld [vmem:[%s1148 + $0x28] sm:$0xf]
        %v1347 = vsel %vm1315, %v1280, %v1346
        %1348 = vst [vmem:[%s1148 + $0x28] sm:$0xf] %v1347
        %v1349 = vld [vmem:[%s1148 + $0x2c] sm:$0x1]
        %v1350 = vsel %vm1151, %v1281, %v1349
        %1351 = vst [vmem:[%s1148 + $0x2c] sm:$0x1] %v1350
        %v1352 = vld [vmem:[%s1148 + $0x30] sm:$0xf]
        %v1353 = vsel %vm1315, %v1288, %v1352
        %1354 = vst [vmem:[%s1148 + $0x30] sm:$0xf] %v1353
        %v1355 = vld [vmem:[%s1148 + $0x34] sm:$0x1]
        %v1356 = vsel %vm1151, %v1289, %v1355
        %1357 = vst [vmem:[%s1148 + $0x34] sm:$0x1] %v1356
        %v1358 = vld [vmem:[%s1148 + $0x38] sm:$0xf]
        %v1359 = vsel %vm1315, %v1296, %v1358
        %1360 = vst [vmem:[%s1148 + $0x38] sm:$0xf] %v1359
        %v1361 = vld [vmem:[%s1148 + $0x3c] sm:$0x1]
        %v1362 = vsel %vm1151, %v1297, %v1361
        %1363 = vst [vmem:[%s1148 + $0x3c] sm:$0x1] %v1362
        %v1364 = vld [vmem:[#allocation2] sm:$0xf]
        %v1365 = vld [vmem:[#allocation2 + $0x8] sm:$0xf]
        %v1366 = vld [vmem:[#allocation2 + $0x10] sm:$0xf]
        %v1367 = vld [vmem:[#allocation2 + $0x18] sm:$0xf]
        %v1368 = vld [vmem:[#allocation2 + $0x20] sm:$0xf]
        %v1369 = vld [vmem:[#allocation2 + $0x28] sm:$0xf]
        %v1370 = vld [vmem:[#allocation2 + $0x30] sm:$0xf]
        %v1371 = vld [vmem:[#allocation2 + $0x38] sm:$0xf]
        %v1372 = vld [vmem:[#allocation2 + $0x4] sm:$0x1]
        %v1373 = vld [vmem:[#allocation2 + $0xc] sm:$0x1]
        %v1374 = vld [vmem:[#allocation2 + $0x14] sm:$0x1]
        %v1375 = vld [vmem:[#allocation2 + $0x1c] sm:$0x1]
        %v1376 = vld [vmem:[#allocation2 + $0x24] sm:$0x1]
        %v1377 = vld [vmem:[#allocation2 + $0x2c] sm:$0x1]
        %v1378 = vld [vmem:[#allocation2 + $0x34] sm:$0x1]
        %v1379 = vld [vmem:[#allocation2 + $0x3c] sm:$0x1]
        %v1381 = vshrl.u32 %v1364, 16
        %v1383 = vrot.slane %v1381, 4
        %v1384 = vshll.u32 %v1364, 16
        %v1386 = vrot.slane %v1384, 5
        %v1387 = vor.u32 %v1383, %v1386
        %v1388 = vrot.slane %v1387, 4
        %v1390 = vshll.u32 %v1372, 16
        %v1392 = vrot.slane %v1390, 5
        %v1393 = vsel %vm305, %v1388, %v1392
        %v1395 = vshrl.u32 %v1365, 16
        %v1397 = vrot.slane %v1395, 4
        %v1398 = vshll.u32 %v1365, 16
        %v1400 = vrot.slane %v1398, 5
        %v1401 = vor.u32 %v1397, %v1400
        %v1402 = vrot.slane %v1401, 4
        %v1404 = vshll.u32 %v1373, 16
        %v1406 = vrot.slane %v1404, 5
        %v1407 = vsel %vm305, %v1402, %v1406
        %v1409 = vshrl.u32 %v1366, 16
        %v1411 = vrot.slane %v1409, 4
        %v1412 = vshll.u32 %v1366, 16
        %v1414 = vrot.slane %v1412, 5
        %v1415 = vor.u32 %v1411, %v1414
        %v1416 = vrot.slane %v1415, 4
        %v1418 = vshll.u32 %v1374, 16
        %v1420 = vrot.slane %v1418, 5
        %v1421 = vsel %vm305, %v1416, %v1420
        %v1423 = vshrl.u32 %v1367, 16
        %v1425 = vrot.slane %v1423, 4
        %v1426 = vshll.u32 %v1367, 16
        %v1428 = vrot.slane %v1426, 5
        %v1429 = vor.u32 %v1425, %v1428
        %v1430 = vrot.slane %v1429, 4
        %v1432 = vshll.u32 %v1375, 16
        %v1434 = vrot.slane %v1432, 5
        %v1435 = vsel %vm305, %v1430, %v1434
        %v1437 = vshrl.u32 %v1368, 16
        %v1439 = vrot.slane %v1437, 4
        %v1440 = vshll.u32 %v1368, 16
        %v1442 = vrot.slane %v1440, 5
        %v1443 = vor.u32 %v1439, %v1442
        %v1444 = vrot.slane %v1443, 4
        %v1446 = vshll.u32 %v1376, 16
        %v1448 = vrot.slane %v1446, 5
        %v1449 = vsel %vm305, %v1444, %v1448
        %v1451 = vshrl.u32 %v1369, 16
        %v1453 = vrot.slane %v1451, 4
        %v1454 = vshll.u32 %v1369, 16
        %v1456 = vrot.slane %v1454, 5
        %v1457 = vor.u32 %v1453, %v1456
        %v1458 = vrot.slane %v1457, 4
        %v1460 = vshll.u32 %v1377, 16
        %v1462 = vrot.slane %v1460, 5
        %v1463 = vsel %vm305, %v1458, %v1462
        %v1465 = vshrl.u32 %v1370, 16
        %v1467 = vrot.slane %v1465, 4
        %v1468 = vshll.u32 %v1370, 16
        %v1470 = vrot.slane %v1468, 5
        %v1471 = vor.u32 %v1467, %v1470
        %v1472 = vrot.slane %v1471, 4
        %v1474 = vshll.u32 %v1378, 16
        %v1476 = vrot.slane %v1474, 5
        %v1477 = vsel %vm305, %v1472, %v1476
        %v1479 = vshrl.u32 %v1371, 16
        %v1481 = vrot.slane %v1479, 4
        %v1482 = vshll.u32 %v1371, 16
        %v1484 = vrot.slane %v1482, 5
        %v1485 = vor.u32 %v1481, %v1484
        %v1486 = vrot.slane %v1485, 4
        %v1488 = vshll.u32 %v1379, 16
        %v1490 = vrot.slane %v1488, 5
        %v1491 = vsel %vm305, %v1486, %v1490
        %v1492 = vld [vmem:[#allocation2] sm:$0xe]
        %v1493 = vld [vmem:[#allocation2 + $0x8] sm:$0xe]
        %v1494 = vld [vmem:[#allocation2 + $0x10] sm:$0xe]
        %v1495 = vld [vmem:[#allocation2 + $0x18] sm:$0xe]
        %v1496 = vld [vmem:[#allocation2 + $0x20] sm:$0xe]
        %v1497 = vld [vmem:[#allocation2 + $0x28] sm:$0xe]
        %v1498 = vld [vmem:[#allocation2 + $0x30] sm:$0xe]
        %v1499 = vld [vmem:[#allocation2 + $0x38] sm:$0xe]
        %vm1516 = vcmask 1042432
        %vm1517 = vcmask 1046532
        %vm1518 = vmor %vm1516, %vm1517
        %v1519 = vrot.slane %v1492, 5
        %v1520 = vrot.slane %v1519, 4
        %v1521 = vrot.slane %v1372, 5
        %v1522 = vsel %vm1518, %v1520, %v1521
        %v1523 = vrot.slane %v1493, 5
        %v1524 = vrot.slane %v1523, 4
        %v1525 = vrot.slane %v1373, 5
        %v1526 = vsel %vm1518, %v1524, %v1525
        %v1527 = vrot.slane %v1494, 5
        %v1528 = vrot.slane %v1527, 4
        %v1529 = vrot.slane %v1374, 5
        %v1530 = vsel %vm1518, %v1528, %v1529
        %v1531 = vrot.slane %v1495, 5
        %v1532 = vrot.slane %v1531, 4
        %v1533 = vrot.slane %v1375, 5
        %v1534 = vsel %vm1518, %v1532, %v1533
        %v1535 = vrot.slane %v1496, 5
        %v1536 = vrot.slane %v1535, 4
        %v1537 = vrot.slane %v1376, 5
        %v1538 = vsel %vm1518, %v1536, %v1537
        %v1539 = vrot.slane %v1497, 5
        %v1540 = vrot.slane %v1539, 4
        %v1541 = vrot.slane %v1377, 5
        %v1542 = vsel %vm1518, %v1540, %v1541
        %v1543 = vrot.slane %v1498, 5
        %v1544 = vrot.slane %v1543, 4
        %v1545 = vrot.slane %v1378, 5
        %v1546 = vsel %vm1518, %v1544, %v1545
        %v1547 = vrot.slane %v1499, 5
        %v1548 = vrot.slane %v1547, 4
        %v1549 = vrot.slane %v1379, 5
        %v1550 = vsel %vm1518, %v1548, %v1549
        %v1551 = vld [vmem:[%s1148] sm:$0xf]
        %v1552 = vld [vmem:[%s1148 + $0x8] sm:$0xf]
        %v1553 = vld [vmem:[%s1148 + $0x10] sm:$0xf]
        %v1554 = vld [vmem:[%s1148 + $0x18] sm:$0xf]
        %v1555 = vld [vmem:[%s1148 + $0x20] sm:$0xf]
        %v1556 = vld [vmem:[%s1148 + $0x28] sm:$0xf]
        %v1557 = vld [vmem:[%s1148 + $0x30] sm:$0xf]
        %v1558 = vld [vmem:[%s1148 + $0x38] sm:$0xf]
        %v1559 = vld [vmem:[%s1148 + $0x4] sm:$0x1]
        %v1560 = vld [vmem:[%s1148 + $0xc] sm:$0x1]
        %v1561 = vld [vmem:[%s1148 + $0x14] sm:$0x1]
        %v1562 = vld [vmem:[%s1148 + $0x1c] sm:$0x1]
        %v1563 = vld [vmem:[%s1148 + $0x24] sm:$0x1]
        %v1564 = vld [vmem:[%s1148 + $0x2c] sm:$0x1]
        %v1565 = vld [vmem:[%s1148 + $0x34] sm:$0x1]
        %v1566 = vld [vmem:[%s1148 + $0x3c] sm:$0x1]
        %v1568 = vshrl.u32 %v1551, 16
        %v1570 = vrot.slane %v1568, 4
        %v1571 = vshll.u32 %v1551, 16
        %v1573 = vrot.slane %v1571, 5
        %v1574 = vor.u32 %v1570, %v1573
        %v1575 = vrot.slane %v1574, 4
        %v1577 = vshll.u32 %v1559, 16
        %v1579 = vrot.slane %v1577, 5
        %v1580 = vsel %vm305, %v1575, %v1579
        %v1582 = vshrl.u32 %v1552, 16
        %v1584 = vrot.slane %v1582, 4
        %v1585 = vshll.u32 %v1552, 16
        %v1587 = vrot.slane %v1585, 5
        %v1588 = vor.u32 %v1584, %v1587
        %v1589 = vrot.slane %v1588, 4
        %v1591 = vshll.u32 %v1560, 16
        %v1593 = vrot.slane %v1591, 5
        %v1594 = vsel %vm305, %v1589, %v1593
        %v1596 = vshrl.u32 %v1553, 16
        %v1598 = vrot.slane %v1596, 4
        %v1599 = vshll.u32 %v1553, 16
        %v1601 = vrot.slane %v1599, 5
        %v1602 = vor.u32 %v1598, %v1601
        %v1603 = vrot.slane %v1602, 4
        %v1605 = vshll.u32 %v1561, 16
        %v1607 = vrot.slane %v1605, 5
        %v1608 = vsel %vm305, %v1603, %v1607
        %v1610 = vshrl.u32 %v1554, 16
        %v1612 = vrot.slane %v1610, 4
        %v1613 = vshll.u32 %v1554, 16
        %v1615 = vrot.slane %v1613, 5
        %v1616 = vor.u32 %v1612, %v1615
        %v1617 = vrot.slane %v1616, 4
        %v1619 = vshll.u32 %v1562, 16
        %v1621 = vrot.slane %v1619, 5
        %v1622 = vsel %vm305, %v1617, %v1621
        %v1624 = vshrl.u32 %v1555, 16
        %v1626 = vrot.slane %v1624, 4
        %v1627 = vshll.u32 %v1555, 16
        %v1629 = vrot.slane %v1627, 5
        %v1630 = vor.u32 %v1626, %v1629
        %v1631 = vrot.slane %v1630, 4
        %v1633 = vshll.u32 %v1563, 16
        %v1635 = vrot.slane %v1633, 5
        %v1636 = vsel %vm305, %v1631, %v1635
        %v1638 = vshrl.u32 %v1556, 16
        %v1640 = vrot.slane %v1638, 4
        %v1641 = vshll.u32 %v1556, 16
        %v1643 = vrot.slane %v1641, 5
        %v1644 = vor.u32 %v1640, %v1643
        %v1645 = vrot.slane %v1644, 4
        %v1647 = vshll.u32 %v1564, 16
        %v1649 = vrot.slane %v1647, 5
        %v1650 = vsel %vm305, %v1645, %v1649
        %v1652 = vshrl.u32 %v1557, 16
        %v1654 = vrot.slane %v1652, 4
        %v1655 = vshll.u32 %v1557, 16
        %v1657 = vrot.slane %v1655, 5
        %v1658 = vor.u32 %v1654, %v1657
        %v1659 = vrot.slane %v1658, 4
        %v1661 = vshll.u32 %v1565, 16
        %v1663 = vrot.slane %v1661, 5
        %v1664 = vsel %vm305, %v1659, %v1663
        %v1666 = vshrl.u32 %v1558, 16
        %v1668 = vrot.slane %v1666, 4
        %v1669 = vshll.u32 %v1558, 16
        %v1671 = vrot.slane %v1669, 5
        %v1672 = vor.u32 %v1668, %v1671
        %v1673 = vrot.slane %v1672, 4
        %v1675 = vshll.u32 %v1566, 16
        %v1677 = vrot.slane %v1675, 5
        %v1678 = vsel %vm305, %v1673, %v1677
        %v1679 = vld [vmem:[%s1148] sm:$0xe]
        %v1680 = vld [vmem:[%s1148 + $0x8] sm:$0xe]
        %v1681 = vld [vmem:[%s1148 + $0x10] sm:$0xe]
        %v1682 = vld [vmem:[%s1148 + $0x18] sm:$0xe]
        %v1683 = vld [vmem:[%s1148 + $0x20] sm:$0xe]
        %v1684 = vld [vmem:[%s1148 + $0x28] sm:$0xe]
        %v1685 = vld [vmem:[%s1148 + $0x30] sm:$0xe]
        %v1686 = vld [vmem:[%s1148 + $0x38] sm:$0xe]
        %v1703 = vrot.slane %v1679, 5
        %v1704 = vrot.slane %v1703, 4
        %v1705 = vrot.slane %v1559, 5
        %v1706 = vsel %vm1518, %v1704, %v1705
        %v1707 = vrot.slane %v1680, 5
        %v1708 = vrot.slane %v1707, 4
        %v1709 = vrot.slane %v1560, 5
        %v1710 = vsel %vm1518, %v1708, %v1709
        %v1711 = vrot.slane %v1681, 5
        %v1712 = vrot.slane %v1711, 4
        %v1713 = vrot.slane %v1561, 5
        %v1714 = vsel %vm1518, %v1712, %v1713
        %v1715 = vrot.slane %v1682, 5
        %v1716 = vrot.slane %v1715, 4
        %v1717 = vrot.slane %v1562, 5
        %v1718 = vsel %vm1518, %v1716, %v1717
        %v1719 = vrot.slane %v1683, 5
        %v1720 = vrot.slane %v1719, 4
        %v1721 = vrot.slane %v1563, 5
        %v1722 = vsel %vm1518, %v1720, %v1721
        %v1723 = vrot.slane %v1684, 5
        %v1724 = vrot.slane %v1723, 4
        %v1725 = vrot.slane %v1564, 5
        %v1726 = vsel %vm1518, %v1724, %v1725
        %v1727 = vrot.slane %v1685, 5
        %v1728 = vrot.slane %v1727, 4
        %v1729 = vrot.slane %v1565, 5
        %v1730 = vsel %vm1518, %v1728, %v1729
        %v1731 = vrot.slane %v1686, 5
        %v1732 = vrot.slane %v1731, 4
        %v1733 = vrot.slane %v1566, 5
        %v1734 = vsel %vm1518, %v1732, %v1733
        %s1735 = scalar_lea.vmem [#allocation2], 16
        %v1736 = vld [vmem:[%s1735] sm:$0xf]
        %v1737 = vld [vmem:[%s1735 + $0x8] sm:$0xf]
        %v1738 = vld [vmem:[%s1735 + $0x10] sm:$0xf]
        %v1739 = vld [vmem:[%s1735 + $0x18] sm:$0xf]
        %v1740 = vld [vmem:[%s1735 + $0x20] sm:$0xf]
        %v1741 = vld [vmem:[%s1735 + $0x28] sm:$0xf]
        %v1742 = vld [vmem:[%s1735 + $0x30] sm:$0xf]
        %v1743 = vld [vmem:[%s1735 + $0x38] sm:$0xf]
        %v1744 = vld [vmem:[%s1735 + $0x4] sm:$0x1]
        %v1745 = vld [vmem:[%s1735 + $0xc] sm:$0x1]
        %v1746 = vld [vmem:[%s1735 + $0x14] sm:$0x1]
        %v1747 = vld [vmem:[%s1735 + $0x1c] sm:$0x1]
        %v1748 = vld [vmem:[%s1735 + $0x24] sm:$0x1]
        %v1749 = vld [vmem:[%s1735 + $0x2c] sm:$0x1]
        %v1750 = vld [vmem:[%s1735 + $0x34] sm:$0x1]
        %v1751 = vld [vmem:[%s1735 + $0x3c] sm:$0x1]
        %v1753 = vshrl.u32 %v1736, 16
        %v1755 = vrot.slane %v1753, 4
        %v1756 = vshll.u32 %v1736, 16
        %v1758 = vrot.slane %v1756, 5
        %v1759 = vor.u32 %v1755, %v1758
        %v1760 = vrot.slane %v1759, 4
        %v1762 = vshll.u32 %v1744, 16
        %v1764 = vrot.slane %v1762, 5
        %v1765 = vsel %vm305, %v1760, %v1764
        %v1767 = vshrl.u32 %v1737, 16
        %v1769 = vrot.slane %v1767, 4
        %v1770 = vshll.u32 %v1737, 16
        %v1772 = vrot.slane %v1770, 5
        %v1773 = vor.u32 %v1769, %v1772
        %v1774 = vrot.slane %v1773, 4
        %v1776 = vshll.u32 %v1745, 16
        %v1778 = vrot.slane %v1776, 5
        %v1779 = vsel %vm305, %v1774, %v1778
        %v1781 = vshrl.u32 %v1738, 16
        %v1783 = vrot.slane %v1781, 4
        %v1784 = vshll.u32 %v1738, 16
        %v1786 = vrot.slane %v1784, 5
        %v1787 = vor.u32 %v1783, %v1786
        %v1788 = vrot.slane %v1787, 4
        %v1790 = vshll.u32 %v1746, 16
        %v1792 = vrot.slane %v1790, 5
        %v1793 = vsel %vm305, %v1788, %v1792
        %v1795 = vshrl.u32 %v1739, 16
        %v1797 = vrot.slane %v1795, 4
        %v1798 = vshll.u32 %v1739, 16
        %v1800 = vrot.slane %v1798, 5
        %v1801 = vor.u32 %v1797, %v1800
        %v1802 = vrot.slane %v1801, 4
        %v1804 = vshll.u32 %v1747, 16
        %v1806 = vrot.slane %v1804, 5
        %v1807 = vsel %vm305, %v1802, %v1806
        %v1809 = vshrl.u32 %v1740, 16
        %v1811 = vrot.slane %v1809, 4
        %v1812 = vshll.u32 %v1740, 16
        %v1814 = vrot.slane %v1812, 5
        %v1815 = vor.u32 %v1811, %v1814
        %v1816 = vrot.slane %v1815, 4
        %v1818 = vshll.u32 %v1748, 16
        %v1820 = vrot.slane %v1818, 5
        %v1821 = vsel %vm305, %v1816, %v1820
        %v1823 = vshrl.u32 %v1741, 16
        %v1825 = vrot.slane %v1823, 4
        %v1826 = vshll.u32 %v1741, 16
        %v1828 = vrot.slane %v1826, 5
        %v1829 = vor.u32 %v1825, %v1828
        %v1830 = vrot.slane %v1829, 4
        %v1832 = vshll.u32 %v1749, 16
        %v1834 = vrot.slane %v1832, 5
        %v1835 = vsel %vm305, %v1830, %v1834
        %v1837 = vshrl.u32 %v1742, 16
        %v1839 = vrot.slane %v1837, 4
        %v1840 = vshll.u32 %v1742, 16
        %v1842 = vrot.slane %v1840, 5
        %v1843 = vor.u32 %v1839, %v1842
        %v1844 = vrot.slane %v1843, 4
        %v1846 = vshll.u32 %v1750, 16
        %v1848 = vrot.slane %v1846, 5
        %v1849 = vsel %vm305, %v1844, %v1848
        %v1851 = vshrl.u32 %v1743, 16
        %v1853 = vrot.slane %v1851, 4
        %v1854 = vshll.u32 %v1743, 16
        %v1856 = vrot.slane %v1854, 5
        %v1857 = vor.u32 %v1853, %v1856
        %v1858 = vrot.slane %v1857, 4
        %v1860 = vshll.u32 %v1751, 16
        %v1862 = vrot.slane %v1860, 5
        %v1863 = vsel %vm305, %v1858, %v1862
        %v1864 = vld [vmem:[%s1735] sm:$0xe]
        %v1865 = vld [vmem:[%s1735 + $0x8] sm:$0xe]
        %v1866 = vld [vmem:[%s1735 + $0x10] sm:$0xe]
        %v1867 = vld [vmem:[%s1735 + $0x18] sm:$0xe]
        %v1868 = vld [vmem:[%s1735 + $0x20] sm:$0xe]
        %v1869 = vld [vmem:[%s1735 + $0x28] sm:$0xe]
        %v1870 = vld [vmem:[%s1735 + $0x30] sm:$0xe]
        %v1871 = vld [vmem:[%s1735 + $0x38] sm:$0xe]
        %v1888 = vrot.slane %v1864, 5
        %v1889 = vrot.slane %v1888, 4
        %v1890 = vrot.slane %v1744, 5
        %v1891 = vsel %vm1518, %v1889, %v1890
        %v1892 = vrot.slane %v1865, 5
        %v1893 = vrot.slane %v1892, 4
        %v1894 = vrot.slane %v1745, 5
        %v1895 = vsel %vm1518, %v1893, %v1894
        %v1896 = vrot.slane %v1866, 5
        %v1897 = vrot.slane %v1896, 4
        %v1898 = vrot.slane %v1746, 5
        %v1899 = vsel %vm1518, %v1897, %v1898
        %v1900 = vrot.slane %v1867, 5
        %v1901 = vrot.slane %v1900, 4
        %v1902 = vrot.slane %v1747, 5
        %v1903 = vsel %vm1518, %v1901, %v1902
        %v1904 = vrot.slane %v1868, 5
        %v1905 = vrot.slane %v1904, 4
        %v1906 = vrot.slane %v1748, 5
        %v1907 = vsel %vm1518, %v1905, %v1906
        %v1908 = vrot.slane %v1869, 5
        %v1909 = vrot.slane %v1908, 4
        %v1910 = vrot.slane %v1749, 5
        %v1911 = vsel %vm1518, %v1909, %v1910
        %v1912 = vrot.slane %v1870, 5
        %v1913 = vrot.slane %v1912, 4
        %v1914 = vrot.slane %v1750, 5
        %v1915 = vsel %vm1518, %v1913, %v1914
        %v1916 = vrot.slane %v1871, 5
        %v1917 = vrot.slane %v1916, 4
        %v1918 = vrot.slane %v1751, 5
        %v1919 = vsel %vm1518, %v1917, %v1918
        %v1928 = vunpack.c.l.b16 %v1364
        %v1929 = vunpack.c.l.b16 %v1365
        %v1930 = vunpack.c.l.b16 %v1366
        %v1931 = vunpack.c.l.b16 %v1367
        %v1932 = vunpack.c.l.b16 %v1368
        %v1933 = vunpack.c.l.b16 %v1369
        %v1934 = vunpack.c.l.b16 %v1370
        %v1935 = vunpack.c.l.b16 %v1371
        %v1936 = vpack.c.b16 %v1929, %v1928
        %v1937 = vpack.c.b16 %v1931, %v1930
        %v1938 = vpack.c.b16 %v1933, %v1932
        %v1939 = vpack.c.b16 %v1935, %v1934
        %v1940 = vunpack.c.l.b16 %v1393
        %v1941 = vunpack.c.l.b16 %v1407
        %v1942 = vunpack.c.l.b16 %v1421
        %v1943 = vunpack.c.l.b16 %v1435
        %v1944 = vunpack.c.l.b16 %v1449
        %v1945 = vunpack.c.l.b16 %v1463
        %v1946 = vunpack.c.l.b16 %v1477
        %v1947 = vunpack.c.l.b16 %v1491
        %v1948 = vpack.c.b16 %v1941, %v1940
        %v1949 = vpack.c.b16 %v1943, %v1942
        %v1950 = vpack.c.b16 %v1945, %v1944
        %v1951 = vpack.c.b16 %v1947, %v1946
        %1952 = vrot.lane.b32.xlu0 %v1948, 16
        %v1953 = vpop.permute.xlu0 %1952
        %1954 = vrot.lane.b32.xlu0 %v1949, 16
        %v1955 = vpop.permute.xlu0 %1954
        %1956 = vrot.lane.b32.xlu0 %v1950, 16
        %v1957 = vpop.permute.xlu0 %1956
        %1958 = vrot.lane.b32.xlu0 %v1951, 16
        %v1959 = vpop.permute.xlu0 %1958
        %v1960 = vunpack.c.l.b16 %v1522
        %v1961 = vunpack.c.l.b16 %v1526
        %v1962 = vunpack.c.l.b16 %v1530
        %v1963 = vunpack.c.l.b16 %v1534
        %v1964 = vunpack.c.l.b16 %v1538
        %v1965 = vunpack.c.l.b16 %v1542
        %v1966 = vunpack.c.l.b16 %v1546
        %v1967 = vunpack.c.l.b16 %v1550
        %v1968 = vpack.c.b16 %v1961, %v1960
        %v1969 = vpack.c.b16 %v1963, %v1962
        %v1970 = vpack.c.b16 %v1965, %v1964
        %v1971 = vpack.c.b16 %v1967, %v1966
        %1972 = vrot.lane.b32.xlu0 %v1968, 32
        %v1973 = vpop.permute.xlu0 %1972
        %1974 = vrot.lane.b32.xlu0 %v1969, 32
        %v1975 = vpop.permute.xlu0 %1974
        %1976 = vrot.lane.b32.xlu0 %v1970, 32
        %v1977 = vpop.permute.xlu0 %1976
        %1978 = vrot.lane.b32.xlu0 %v1971, 32
        %v1979 = vpop.permute.xlu0 %1978
        %v1988 = vunpack.c.l.b16 %v1551
        %v1989 = vunpack.c.l.b16 %v1552
        %v1990 = vunpack.c.l.b16 %v1553
        %v1991 = vunpack.c.l.b16 %v1554
        %v1992 = vunpack.c.l.b16 %v1555
        %v1993 = vunpack.c.l.b16 %v1556
        %v1994 = vunpack.c.l.b16 %v1557
        %v1995 = vunpack.c.l.b16 %v1558
        %v1996 = vpack.c.b16 %v1989, %v1988
        %v1997 = vpack.c.b16 %v1991, %v1990
        %v1998 = vpack.c.b16 %v1993, %v1992
        %v1999 = vpack.c.b16 %v1995, %v1994
        %2000 = vrot.lane.b32.xlu0 %v1996, 48
        %v2001 = vpop.permute.xlu0 %2000
        %2002 = vrot.lane.b32.xlu0 %v1997, 48
        %v2003 = vpop.permute.xlu0 %2002
        %2004 = vrot.lane.b32.xlu0 %v1998, 48
        %v2005 = vpop.permute.xlu0 %2004
        %2006 = vrot.lane.b32.xlu0 %v1999, 48
        %v2007 = vpop.permute.xlu0 %2006
        %v2008 = vunpack.c.l.b16 %v1580
        %v2009 = vunpack.c.l.b16 %v1594
        %v2010 = vunpack.c.l.b16 %v1608
        %v2011 = vunpack.c.l.b16 %v1622
        %v2012 = vunpack.c.l.b16 %v1636
        %v2013 = vunpack.c.l.b16 %v1650
        %v2014 = vunpack.c.l.b16 %v1664
        %v2015 = vunpack.c.l.b16 %v1678
        %v2016 = vpack.c.b16 %v2009, %v2008
        %v2017 = vpack.c.b16 %v2011, %v2010
        %v2018 = vpack.c.b16 %v2013, %v2012
        %v2019 = vpack.c.b16 %v2015, %v2014
        %2020 = vrot.lane.b32.xlu0 %v2016, 64
        %v2021 = vpop.permute.xlu0 %2020
        %2022 = vrot.lane.b32.xlu0 %v2017, 64
        %v2023 = vpop.permute.xlu0 %2022
        %2024 = vrot.lane.b32.xlu0 %v2018, 64
        %v2025 = vpop.permute.xlu0 %2024
        %2026 = vrot.lane.b32.xlu0 %v2019, 64
        %v2027 = vpop.permute.xlu0 %2026
        %v2028 = vunpack.c.l.b16 %v1706
        %v2029 = vunpack.c.l.b16 %v1710
        %v2030 = vunpack.c.l.b16 %v1714
        %v2031 = vunpack.c.l.b16 %v1718
        %v2032 = vunpack.c.l.b16 %v1722
        %v2033 = vunpack.c.l.b16 %v1726
        %v2034 = vunpack.c.l.b16 %v1730
        %v2035 = vunpack.c.l.b16 %v1734
        %v2036 = vpack.c.b16 %v2029, %v2028
        %v2037 = vpack.c.b16 %v2031, %v2030
        %v2038 = vpack.c.b16 %v2033, %v2032
        %v2039 = vpack.c.b16 %v2035, %v2034
        %2040 = vrot.lane.b32.xlu0 %v2036, 80
        %v2041 = vpop.permute.xlu0 %2040
        %2042 = vrot.lane.b32.xlu0 %v2037, 80
        %v2043 = vpop.permute.xlu0 %2042
        %2044 = vrot.lane.b32.xlu0 %v2038, 80
        %v2045 = vpop.permute.xlu0 %2044
        %2046 = vrot.lane.b32.xlu0 %v2039, 80
        %v2047 = vpop.permute.xlu0 %2046
        %v2056 = vunpack.c.l.b16 %v1736
        %v2057 = vunpack.c.l.b16 %v1737
        %v2058 = vunpack.c.l.b16 %v1738
        %v2059 = vunpack.c.l.b16 %v1739
        %v2060 = vunpack.c.l.b16 %v1740
        %v2061 = vunpack.c.l.b16 %v1741
        %v2062 = vunpack.c.l.b16 %v1742
        %v2063 = vunpack.c.l.b16 %v1743
        %v2064 = vpack.c.b16 %v2057, %v2056
        %v2065 = vpack.c.b16 %v2059, %v2058
        %v2066 = vpack.c.b16 %v2061, %v2060
        %v2067 = vpack.c.b16 %v2063, %v2062
        %2068 = vrot.lane.b32.xlu0 %v2064, 96
        %v2069 = vpop.permute.xlu0 %2068
        %2070 = vrot.lane.b32.xlu0 %v2065, 96
        %v2071 = vpop.permute.xlu0 %2070
        %2072 = vrot.lane.b32.xlu0 %v2066, 96
        %v2073 = vpop.permute.xlu0 %2072
        %2074 = vrot.lane.b32.xlu0 %v2067, 96
        %v2075 = vpop.permute.xlu0 %2074
        %v2076 = vunpack.c.l.b16 %v1765
        %v2077 = vunpack.c.l.b16 %v1779
        %v2078 = vunpack.c.l.b16 %v1793
        %v2079 = vunpack.c.l.b16 %v1807
        %v2080 = vunpack.c.l.b16 %v1821
        %v2081 = vunpack.c.l.b16 %v1835
        %v2082 = vunpack.c.l.b16 %v1849
        %v2083 = vunpack.c.l.b16 %v1863
        %v2084 = vpack.c.b16 %v2077, %v2076
        %v2085 = vpack.c.b16 %v2079, %v2078
        %v2086 = vpack.c.b16 %v2081, %v2080
        %v2087 = vpack.c.b16 %v2083, %v2082
        %2088 = vrot.lane.b32.xlu0 %v2084, 112
        %v2089 = vpop.permute.xlu0 %2088
        %2090 = vrot.lane.b32.xlu0 %v2085, 112
        %v2091 = vpop.permute.xlu0 %2090
        %2092 = vrot.lane.b32.xlu0 %v2086, 112
        %v2093 = vpop.permute.xlu0 %2092
        %2094 = vrot.lane.b32.xlu0 %v2087, 112
        %v2095 = vpop.permute.xlu0 %2094
        %v2096 = vunpack.c.l.b16 %v1891
        %v2097 = vunpack.c.l.b16 %v1895
        %v2098 = vunpack.c.l.b16 %v1899
        %v2099 = vunpack.c.l.b16 %v1903
        %v2100 = vunpack.c.l.b16 %v1907
        %v2101 = vunpack.c.l.b16 %v1911
        %v2102 = vunpack.c.l.b16 %v1915
        %v2103 = vunpack.c.l.b16 %v1919
        %v2104 = vpack.c.b16 %v2097, %v2096
        %v2105 = vpack.c.b16 %v2099, %v2098
        %v2106 = vpack.c.b16 %v2101, %v2100
        %v2107 = vpack.c.b16 %v2103, %v2102
        %v2110 = vsel %vm927, %v1936, %v1953
        %v2113 = vsel %vm927, %v1937, %v1955
        %v2116 = vsel %vm927, %v1938, %v1957
        %v2119 = vsel %vm927, %v1939, %v1959
        %v2121 = vsel %vm945, %v2110, %v1973
        %v2123 = vsel %vm945, %v2113, %v1975
        %v2125 = vsel %vm945, %v2116, %v1977
        %v2127 = vsel %vm945, %v2119, %v1979
        %v2129 = vsel %vm963, %v2121, %v2001
        %v2131 = vsel %vm963, %v2123, %v2003
        %v2133 = vsel %vm963, %v2125, %v2005
        %v2135 = vsel %vm963, %v2127, %v2007
        %v2137 = vsel %vm981, %v2129, %v2021
        %v2139 = vsel %vm981, %v2131, %v2023
        %v2141 = vsel %vm981, %v2133, %v2025
        %v2143 = vsel %vm981, %v2135, %v2027
        %vm2144 = vcmask 654336
        %v2146 = vsel %vm2144, %v2137, %v2041
        %v2148 = vsel %vm2144, %v2139, %v2043
        %v2150 = vsel %vm2144, %v2141, %v2045
        %v2152 = vsel %vm2144, %v2143, %v2047
        %vm2153 = vcmask 785408
        %v2155 = vsel %vm2153, %v2146, %v2069
        %v2157 = vsel %vm2153, %v2148, %v2071
        %v2159 = vsel %vm2153, %v2150, %v2073
        %v2161 = vsel %vm2153, %v2152, %v2075
        %vm2162 = vcmask 916480
        %v2164 = vsel %vm2162, %v2155, %v2089
        %v2167 = vsel %vm2162, %v2157, %v2091
        %v2170 = vsel %vm2162, %v2159, %v2093
        %v2173 = vsel %vm2162, %v2161, %v2095
        %v2175 = vld [vmem:[%s4] sm:$0xf]
        %v2176 = vld [vmem:[%s4 + $0x4] sm:$0xf]
        %v2177 = vld [vmem:[%s4 + $0x8] sm:$0xf]
        %v2178 = vld [vmem:[%s4 + $0xc] sm:$0xf]
        %v2179 = vld [vmem:[%s4 + $0x10] sm:$0xf]
        %v2180 = vld [vmem:[%s4 + $0x14] sm:$0xf]
        %v2181 = vld [vmem:[%s4 + $0x18] sm:$0xf]
        %v2182 = vld [vmem:[%s4 + $0x1c] sm:$0xf]
        %v2183 = vld [vmem:[%s4 + $0x20] sm:$0xf]
        %v2184 = vld [vmem:[%s4 + $0x24] sm:$0xf]
        %v2185 = vld [vmem:[%s4 + $0x28] sm:$0xf]
        %v2186 = vld [vmem:[%s4 + $0x2c] sm:$0xf]
        %v2187 = vld [vmem:[%s4 + $0x30] sm:$0xf]
        %v2188 = vld [vmem:[%s4 + $0x34] sm:$0xf]
        %v2189 = vld [vmem:[%s4 + $0x38] sm:$0xf]
        %v2190 = vld [vmem:[%s4 + $0x3c] sm:$0xf]
        %v2191 = vld [vmem:[%s4 + $0x40] sm:$0xf]
        %v2192 = vld [vmem:[%s4 + $0x44] sm:$0xf]
        %v2211 = vunpack.c.l.b16 %v2175
        %v2212 = vunpack.c.l.b16 %v2176
        %v2213 = vunpack.c.l.b16 %v2177
        %v2214 = vunpack.c.l.b16 %v2178
        %v2215 = vunpack.c.l.b16 %v2179
        %v2216 = vunpack.c.l.b16 %v2180
        %v2217 = vunpack.c.l.b16 %v2181
        %v2218 = vunpack.c.l.b16 %v2182
        %v2219 = vunpack.c.l.b16 %v2183
        %v2220 = vunpack.c.l.b16 %v2184
        %v2221 = vunpack.c.l.b16 %v2185
        %v2222 = vunpack.c.l.b16 %v2186
        %v2223 = vunpack.c.l.b16 %v2187
        %v2224 = vunpack.c.l.b16 %v2188
        %v2225 = vunpack.c.l.b16 %v2189
        %v2226 = vunpack.c.l.b16 %v2190
        %v2227 = vunpack.c.l.b16 %v2191
        %v2228 = vunpack.c.l.b16 %v2192
        %v2229 = vpack.c.b16 %v2212, %v2211
        %v2230 = vpack.c.b16 %v2214, %v2213
        %v2231 = vpack.c.b16 %v2216, %v2215
        %v2232 = vpack.c.b16 %v2218, %v2217
        %v2233 = vpack.c.b16 %v2220, %v2219
        %v2234 = vpack.c.b16 %v2222, %v2221
        %v2235 = vpack.c.b16 %v2224, %v2223
        %v2236 = vpack.c.b16 %v2226, %v2225
        %v2237 = vpack.c.b16 %v2228, %v2227
        %v2248 = vsel %vm927, %v2104, 0
        %v2251 = vsel %vm927, %v2105, 0
        %v2254 = vsel %vm927, %v2106, 0
        %v2257 = vsel %vm927, %v2107, 0
        %2259 = vmatprep.subr.bf16.mxu0 0
        %2260 = vmatpush1.bf16.msra.mxu0 %v2236
        %2261 = vmatprep.subr.bf16.mxu0 0
        %2262 = vmatpush1.bf16.msra.mxu0 %v2235
        %2263 = vmatprep.subr.bf16.mxu0 0
        %2264 = vmatpush1.bf16.msra.mxu0 %v2234
        %2265 = vmatprep.subr.bf16.mxu0 0
        %2266 = vmatpush1.bf16.msra.mxu0 %v2233
        %2267 = vmatprep.subr.bf16.mxu0 0
        %2268 = vmatpush1.bf16.msra.mxu0 %v2232
        %2269 = vmatprep.subr.bf16.mxu0 0
        %2270 = vmatpush1.bf16.msra.mxu0 %v2231
        %2271 = vmatprep.subr.bf16.mxu0 0
        %2272 = vmatpush1.bf16.msra.mxu0 %v2230
        %2273 = vmatprep.subr.bf16.mxu0 0
        %2274 = vmatpush1.bf16.msra.mxu0 %v2229
        %2275 = vmatprep.subr.bf16.mxu0 0
        %2276 = vmatpush2.bf16.msra.mxu0 0
        %2277 = vmatprep.subr.bf16.mxu0 0
        %2278 = vmatpush2.bf16.msra.mxu0 0
        %2279 = vmatprep.subr.bf16.mxu0 0
        %2280 = vmatpush2.bf16.msra.mxu0 0
        %2281 = vmatprep.subr.bf16.mxu0 0
        %2282 = vmatpush2.bf16.msra.mxu0 0
        %2283 = vmatprep.subr.bf16.mxu0 0
        %2284 = vmatpush2.bf16.msra.mxu0 0
        %2285 = vmatprep.subr.bf16.mxu0 0
        %2286 = vmatpush2.bf16.msra.mxu0 0
        %2287 = vmatprep.subr.bf16.mxu0 0
        %2288 = vmatpush2.bf16.msra.mxu0 0
        %2289 = vmatprep.subr.bf16.mxu0 0
        %2290 = vmatpush2.bf16.msra.mxu0 %v2237
        %2291 = vmatprep.mubr.bf16.mxu0 %v2248
        %2292 = vmatmul.mubr.bf16.gmra.mxu0 %v2164
        %v2293 = vpop.f32.mrf.mxu0
        %v2294 = vadd.f32 0.0, %v2293
        %v2295 = vpop.f32.mrf.mxu0
        %v2296 = vpop.f32.mrf.mxu0
        %v2297 = vadd.f32 0.0, %v2296
        %v2298 = vpop.f32.mrf.mxu0
        %2299 = vmatprep.mubr.bf16.mxu0 %v2251
        %2300 = vmatmul.mubr.bf16.gmra.mxu0 %v2167
        %v2301 = vpop.f32.mrf.mxu0
        %v2302 = vadd.f32 0.0, %v2301
        %v2303 = vpop.f32.mrf.mxu0
        %v2304 = vpop.f32.mrf.mxu0
        %v2305 = vadd.f32 0.0, %v2304
        %v2306 = vpop.f32.mrf.mxu0
        %2307 = vmatprep.mubr.bf16.mxu0 %v2254
        %2308 = vmatmul.mubr.bf16.gmra.mxu0 %v2170
        %v2309 = vpop.f32.mrf.mxu0
        %v2310 = vadd.f32 0.0, %v2309
        %v2311 = vpop.f32.mrf.mxu0
        %v2312 = vpop.f32.mrf.mxu0
        %v2313 = vadd.f32 0.0, %v2312
        %v2314 = vpop.f32.mrf.mxu0
        %2315 = vmatprep.mubr.bf16.mxu0 %v2257
        %2316 = vmatmul.mubr.bf16.gmra.mxu0 %v2173
        %v2317 = vpop.f32.mrf.mxu0
        %v2318 = vadd.f32 0.0, %v2317
        %v2319 = vpop.f32.mrf.mxu0
        %v2320 = vpop.f32.mrf.mxu0
        %v2321 = vadd.f32 0.0, %v2320
        %v2322 = vpop.f32.mrf.mxu0
        %2323 = vdwg.mxu0
        %v2324 = vld [vmem:[%s5] sm:$0x1]
        %v2326 = vlaneseq
        %v2327 = vshrl.u32 %v2326, 7
        %v2328 = vsub.s32 0, %v2327
        %v2329 = vrot.slane %v2324, %v2328
        %v2331 = vmul.f32 %v2294, %v2329
        %v2332 = vmul.f32 %v2297, %v2329
        %v2333 = vmul.f32 %v2302, %v2329
        %v2334 = vmul.f32 %v2305, %v2329
        %v2335 = vmul.f32 %v2310, %v2329
        %v2336 = vmul.f32 %v2313, %v2329
        %v2337 = vmul.f32 %v2318, %v2329
        %v2338 = vmul.f32 %v2321, %v2329
        %v2339 = vld [vmem:[%s6] sm:$0x1]
        %v2341 = vlaneseq
        %v2342 = vshrl.u32 %v2341, 7
        %v2343 = vsub.s32 0, %v2342
        %v2344 = vrot.slane %v2339, %v2343
        %v2346 = vadd.f32 %v2331, %v2344
        %v2347 = vadd.f32 %v2332, %v2344
        %v2348 = vadd.f32 %v2333, %v2344
        %v2349 = vadd.f32 %v2334, %v2344
        %v2350 = vadd.f32 %v2335, %v2344
        %v2351 = vadd.f32 %v2336, %v2344
        %v2352 = vadd.f32 %v2337, %v2344
        %v2353 = vadd.f32 %v2338, %v2344
        %2362 = vrot.lane.b32.xlu0 %v1126, 112
        %v2363 = vpop.permute.xlu0 %2362
        %2364 = vrot.lane.b32.xlu0 %v1127, 112
        %v2365 = vpop.permute.xlu0 %2364
        %2366 = vrot.lane.b32.xlu0 %v1128, 112
        %v2367 = vpop.permute.xlu0 %2366
        %2368 = vrot.lane.b32.xlu0 %v1129, 112
        %v2369 = vpop.permute.xlu0 %2368
        %2370 = vrot.lane.b32.xlu0 %v1130, 112
        %v2371 = vpop.permute.xlu0 %2370
        %2372 = vrot.lane.b32.xlu0 %v1131, 112
        %v2373 = vpop.permute.xlu0 %2372
        %2374 = vrot.lane.b32.xlu0 %v1132, 112
        %v2375 = vpop.permute.xlu0 %2374
        %2376 = vrot.lane.b32.xlu0 %v1133, 112
        %v2377 = vpop.permute.xlu0 %2376
        %v2386 = vadd.f32 %v2346, %v2363
        %v2387 = vadd.f32 %v2347, %v2365
        %v2388 = vadd.f32 %v2348, %v2367
        %v2389 = vadd.f32 %v2349, %v2369
        %v2390 = vadd.f32 %v2350, %v2371
        %v2391 = vadd.f32 %v2351, %v2373
        %v2392 = vadd.f32 %v2352, %v2375
        %v2393 = vadd.f32 %v2353, %v2377
        %v2394 = vmax.f32 %v2386, 0.0
        %v2395 = vmax.f32 %v2387, 0.0
        %v2396 = vmax.f32 %v2388, 0.0
        %v2397 = vmax.f32 %v2389, 0.0
        %v2398 = vmax.f32 %v2390, 0.0
        %v2399 = vmax.f32 %v2391, 0.0
        %v2400 = vmax.f32 %v2392, 0.0
        %v2401 = vmax.f32 %v2393, 0.0
        %2402 = vst.msk [vmem:[%s271] sm:$0xff] %vm927, %v2394
        %2403 = vst.msk [vmem:[%s271 + $0x8] sm:$0xff] %vm927, %v2395
        %2404 = vst.msk [vmem:[%s271 + $0x10] sm:$0xff] %vm927, %v2396
        %2405 = vst.msk [vmem:[%s271 + $0x18] sm:$0xff] %vm927, %v2397
        %2406 = vst.msk [vmem:[%s271 + $0x20] sm:$0xff] %vm927, %v2398
        %2407 = vst.msk [vmem:[%s271 + $0x28] sm:$0xff] %vm927, %v2399
        %2408 = vst.msk [vmem:[%s271 + $0x30] sm:$0xff] %vm927, %v2400
        %2409 = vst.msk [vmem:[%s271 + $0x38] sm:$0xff] %vm927, %v2401
        %s2410 = sand.u32 %s181, 1
        %s2411 = scalar_lea.sflag [#allocation4], %s2410
        %s2412 = sand.u32 %s181, 1
        %s2413 = smul.addr %s2412, 64
        %s2414 = scalar_lea.vmem [#allocation3], %s2413
        // Predicated region
        $region49: #{tpu_custom_call.1} parent=47 // pred_check
          %p2415 = pneg %p191
        $region50: #{tpu_custom_call.1} parent=47 // pred_check_branch
          %2417 = sbr.rel (%p2415) target = $region52
        $region51: #{tpu_custom_call.1} parent=47 // pred_region
          %s2419 = ssub.s32 1024, 1024
          %2420 = vsyncadd %s2411, %s2419
          %s2421 = smul.addr %s21, 8
          %s2422 = smul.addr %s2421, 128
          %s2423 = scalar_lea.hbm %s7, %s2422
          %s2424 = sshll.u32 %s2414, 4
          %s2425 = int_to_ptr.vmem [resolvable:$true] %s2424
          %2430 = dma.vmem_to_hbm [thread:$0]  %s2425, 1024, %s2423, %s2411, 128, 128, 8
        $region52: #{tpu_custom_call.1} parent=47 // pred_fallthru
          _
      $region48: #{tpu_custom_call.1} parent=5 // pred_fallthru
        _
      %p2431 = scmp.le.s32.totalorder 2, %s16
      // Predicated region
      $region53: #{tpu_custom_call.1} parent=5 // pred_check
        %p2432 = pneg %p2431
      $region54: #{tpu_custom_call.1} parent=5 // pred_check_branch
        %2434 = sbr.rel (%p2432) target = $region56
      $region55: #{tpu_custom_call.1} parent=5 // pred_region
        %s2435 = ssub.s32 %s16, 2
        // Predicated region
        $region57: #{tpu_custom_call.1} parent=55 // pred_check
          %p2436 = pneg %p197
        $region58: #{tpu_custom_call.1} parent=55 // pred_check_branch
          %2438 = sbr.rel (%p2436) target = $region60
        $region59: #{tpu_custom_call.1} parent=55 // pred_region
          %s2439 = sand.u32 %s182, 1
          %s2440 = scalar_lea.sflag [#allocation4], %s2439
          %s2441 = sand.u32 %s182, 1
          %s2442 = smul.addr %s2441, 64
          %s2443 = scalar_lea.vmem [#allocation3], %s2442
          %2444 = dma.done %s2440, 1024
        $region60: #{tpu_custom_call.1} parent=55 // pred_fallthru
          _
      $region56: #{tpu_custom_call.1} parent=5 // pred_fallthru
        _
    $region6: #{tpu_custom_call.1} parent=1 // loop_footer
      %s20 = sadd.s32 1, %s16
    $region7: #{tpu_custom_call.1} parent=1 // loop_footer_branch
      %15 = sbr.rel target = $region3
    $region8: #{tpu_custom_call.1} parent=1 // loop_exit
      _
    %2445 = vsyncpa [#allocation4], 1
    %s2446 = scalar_lea.sflag [#allocation4], 1
    %2447 = vsyncpa %s2446, 1

</llo_original>
